<compile_context>
chip_gen: v6e
topology: v6e:2x2x1
jax: 0.10.0
libtpu: 0.0.40
codegen_flags: <defaults>
</compile_context>

<pallas_src>
import math
from functools import partial

import jax
import jax.numpy as jnp
from jax.experimental import pallas as pl
from jax.experimental.pallas import tpu as pltpu


def _gelu(x):
    c = math.sqrt(2.0 / math.pi)
    x3 = x * x * x                                   # explicit muls, not jnp.power
    return 0.5 * x * (1.0 + jnp.tanh(c * (x + 0.044715 * x3)))


def _layernorm(x, g, b, eps=1e-5):
    # OpenAI-style LayerNorm (epsilon inside the sqrt)
    u = jnp.mean(x, axis=-1, keepdims=True)
    s = jnp.mean((x - u) ** 2, axis=-1, keepdims=True)
    return g * ((x - u) / jnp.sqrt(s + eps)) + b


def _bf16(x):
    return x.astype(jnp.bfloat16)


def transformer_layers_kernel(x_ref, w_attn_ref, b_attn_ref, w_aproj_ref,
                              b_aproj_ref, g1_ref, b1_ref, w_fc_ref, b_fc_ref,
                              w_mproj_ref, b_mproj_ref, g2_ref, b2_ref,
                              o_ref, ctx_ref, *, n_head, mlp_block):
    layer = pl.program_id(1)

    # Layer 0: seed the residual stream.  The output block index is constant
    # along the layer axis, so o_ref is the VMEM-resident running activation.
    @pl.when(layer == 0)
    def _():
        o_ref[...] = x_ref[...]

    x3 = o_ref[...]                                  # (Bblk, S, E) f32 residual
    Bblk, S, E = x3.shape
    M = Bblk * S
    x = x3.reshape(M, E)                             # flatten batch block for GEMMs
    Dh = E // n_head
    scale = 1.0 / math.sqrt(Dh)                      # scale=True in the torch model
    f32 = jnp.float32

    # ---- Attention: c_attn over the whole batch block (M x E @ E x 3E) ----
    qkv = jnp.dot(_bf16(x), w_attn_ref[...], preferred_element_type=f32)
    qkv = qkv + b_attn_ref[...]                      # (M, 3E); bias (1,3E) broadcasts

    # causal mask (registered buffer `b` in torch) as one vselect
    row = jax.lax.broadcasted_iota(jnp.int32, (S, S), 0)
    col = jax.lax.broadcasted_iota(jnp.int32, (S, S), 1)
    causal = col <= row

    # Per-(batch, head) scores/softmax/ctx; ctx goes straight into a bf16 VMEM
    # slab so c_proj is a single full-K matmul afterwards (MXU-friendly) and
    # each iteration's intermediates die at the scratch store.
    for b in range(Bblk):                            # static: Bblk, n_head are small
        r0 = b * S
        for h in range(n_head):
            c0 = h * Dh
            qh = _bf16(qkv[r0:r0 + S, c0:c0 + Dh])
            kh = _bf16(qkv[r0:r0 + S, E + c0:E + c0 + Dh])
            vh = _bf16(qkv[r0:r0 + S, 2 * E + c0:2 * E + c0 + Dh])
            # scores = qh @ kh.T (contract Dh of both operands; no transpose op)
            s = jax.lax.dot_general(qh, kh, (((1,), (1,)), ((), ())),
                                    preferred_element_type=f32) * scale
            s = jnp.where(causal, s, -1e9)
            s = s - jnp.max(s, axis=-1, keepdims=True)
            e = jnp.exp(s)
            p = e * pl.reciprocal(jnp.sum(e, axis=-1, keepdims=True), approx=True)
            ctx = jnp.dot(_bf16(p), vh, preferred_element_type=f32)   # (S, Dh)
            ctx_ref[b, :, c0:c0 + Dh] = ctx.astype(ctx_ref.dtype)

    # Single c_proj GEMM over all heads and batch elements: (M, E) @ (E, E)
    a = jnp.dot(ctx_ref[...].reshape(M, E), w_aproj_ref[...],
                preferred_element_type=f32)
    a = a + b_aproj_ref[...]
    # attn_dropout / resid_dropout: identity (eval mode)

    # ---- residual + LayerNorm 1 ----
    n = _layernorm(x + a, g1_ref[...], b1_ref[...])

    # ---- MLP (4E hidden, gelu), hidden dim tiled in mlp_block chunks ----
    n_bf = _bf16(n)
    hidden = 4 * E
    m = jnp.zeros((M, E), f32)
    for c in range(hidden // mlp_block):             # static chunk loop
        h0 = c * mlp_block
        hfc = jnp.dot(n_bf, w_fc_ref[:, h0:h0 + mlp_block],
                      preferred_element_type=f32)
        hfc = hfc + b_fc_ref[:, h0:h0 + mlp_block]   # bias add in f32
        g = _gelu(_bf16(hfc))                        # bf16 gelu (EUP bf16 v6e/v7x)
        m = m + jnp.dot(g, w_mproj_ref[h0:h0 + mlp_block, :],
                        preferred_element_type=f32)
    m = m + b_mproj_ref[...]

    # ---- residual + LayerNorm 2 -> new residual stream ----
    out = _layernorm(n + m, g2_ref[...], b2_ref[...])
    o_ref[...] = out.reshape(Bblk, S, E).astype(o_ref.dtype)


def _layer_vmem_bytes(bblk, S, E, mlp_block):
    """Rough per-grid-step VMEM footprint (weights double-buffered)."""
    M = bblk * S
    w = 12 * E * E * 2                    # bf16 layer weights
    small = 13 * E * 4                    # biases + LN params (f32)
    io = bblk * S * E * 4                 # one residual block (f32)
    scratch = M * E * 2                   # ctx slab (bf16)
    acts = (4 * M * E                     # qkv + bias
            + 2 * S * S                   # one head's scores / exp
            + 2 * M * mlp_block           # hfc chunk + gelu
            + 5 * M * E) * 4              # a, n, m, residual copies (rough)
    return 2 * (w + small + io) + 2 * io + scratch + acts + (4 << 20)


def transformer_forward(tokens, embed_w, layer_params, n_head, batch_block=None):
    """TransformerModel.forward: tokens (B, S) int32 -> (B, S, E) float32."""
    # view -> embed -> dropout(identity) -> squeeze   (plain-JAX glue)
    xv = tokens.reshape(-1, tokens.shape[-2], tokens.shape[-1])
    h = embed_w[xv]
    h = jnp.squeeze(h, axis=0).astype(jnp.float32)

    B, S, E = h.shape
    L = len(layer_params)
    mlp_block = 512 if (4 * E) % 512 == 0 else 4 * E

    # Generation-aware VMEM cap: ~80% of physical capacity leaves headroom for
    # compiler-internal scratch (~100 MiB on v5e/v6e, ~51 MiB on v7x).
    try:
        cap = int(pltpu.get_tpu_info().vmem_capacity_bytes * 0.80)
    except Exception:
        cap = int((64 << 20) * 0.80)      # conservative fallback (v7x-sized)

    # Batch-blocking: biggest divisor of B (<= 8) whose per-step footprint fits
    # the cap.  Amortizes per-layer weight DMA by Bblk and multiplies MXU row
    # occupancy (M = Bblk*S) for every projection GEMM.
    if batch_block is None:
        batch_block = 1
        for cand in range(1, min(B, 8) + 1):
            if B % cand == 0 and _layer_vmem_bytes(cand, S, E, mlp_block) <= cap:
                batch_block = cand
    Bblk = batch_block
    assert B % Bblk == 0, "batch_block must divide the batch size"

    # Stack per-layer params.  Weight matrices -> bf16 (half the VMEM weight
    # footprint, native MXU rate); biases / LN params stay f32, shaped (1, N)
    # so they broadcast lane-dense against (M, N) activations.
    def stk(i):
        return jnp.stack([p[i] for p in layer_params])

    w_attn = stk(0).astype(jnp.bfloat16)                        # (L, E, 3E)
    b_attn = stk(1).reshape(L, 1, 3 * E)
    w_aproj = stk(2).astype(jnp.bfloat16)                       # (L, E, E)
    b_aproj = stk(3).reshape(L, 1, E)
    g1 = stk(4).reshape(L, 1, E)
    b1 = stk(5).reshape(L, 1, E)
    w_fc = stk(6).astype(jnp.bfloat16)                          # (L, E, 4E)
    b_fc = stk(7).reshape(L, 1, 4 * E)
    w_mproj = stk(8).astype(jnp.bfloat16)                       # (L, 4E, E)
    b_mproj = stk(9).reshape(L, 1, E)
    g2 = stk(10).reshape(L, 1, E)
    b2 = stk(11).reshape(L, 1, E)

    def lspec(shape):          # stacked per-layer param; leading L dim squeezed
        nd = len(shape)
        return pl.BlockSpec((None,) + tuple(shape),
                            lambda b, l, _nd=nd: (l,) + (0,) * _nd)

    x_spec = pl.BlockSpec((Bblk, S, E), lambda b, l: (b, 0, 0))
    in_specs = [
        x_spec,
        lspec((E, 3 * E)), lspec((1, 3 * E)),
        lspec((E, E)), lspec((1, E)),
        lspec((1, E)), lspec((1, E)),
        lspec((E, 4 * E)), lspec((1, 4 * E)),
        lspec((4 * E, E)), lspec((1, E)),
        lspec((1, E)), lspec((1, E)),
    ]
    out_specs = pl.BlockSpec((Bblk, S, E), lambda b, l: (b, 0, 0))

    # VMEM limit: derived from the real per-step footprint, never clamped to a
    # fixed small constant; capped only by the generation-aware budget.
    vmem_req = _layer_vmem_bytes(Bblk, S, E, mlp_block)
    vmem_limit = int(min(max(vmem_req, 16 << 20), cap))

    return pl.pallas_call(
        partial(transformer_layers_kernel, n_head=n_head, mlp_block=mlp_block),
        out_shape=jax.ShapeDtypeStruct((B, S, E), jnp.float32),
        grid=(B // Bblk, L),
        in_specs=in_specs,
        out_specs=out_specs,
        scratch_shapes=[pltpu.VMEM((Bblk, S, E), jnp.bfloat16)],   # ctx slab
        compiler_params=pltpu.CompilerParams(
            dimension_semantics=("parallel", "arbitrary"),
            vmem_limit_bytes=vmem_limit),
    )(h, w_attn, b_attn, w_aproj, b_aproj, g1, b1,
      w_fc, b_fc, w_mproj, b_mproj, g2, b2)


def init_block_params(key, n_embd):
    """Deterministic init mirroring the torch module (std=0.02, zero biases)."""
    E = n_embd
    ks = jax.random.split(key, 4)
    std = 0.02
    w_attn = std * jax.random.normal(ks[0], (E, 3 * E), jnp.float32)
    b_attn = jnp.zeros((3 * E,), jnp.float32)
    w_aproj = std * jax.random.normal(ks[1], (E, E), jnp.float32)
    b_aproj = jnp.zeros((E,), jnp.float32)
    g1 = jnp.ones((E,), jnp.float32)
    b1 = jnp.zeros((E,), jnp.float32)
    w_fc = std * jax.random.normal(ks[2], (E, 4 * E), jnp.float32)
    b_fc = jnp.zeros((4 * E,), jnp.float32)
    w_mproj = std * jax.random.normal(ks[3], (4 * E, E), jnp.float32)
    b_mproj = jnp.zeros((E,), jnp.float32)
    g2 = jnp.ones((E,), jnp.float32)
    b2 = jnp.zeros((E,), jnp.float32)
    return (w_attn, b_attn, w_aproj, b_aproj, g1, b1,
            w_fc, b_fc, w_mproj, b_mproj, g2, b2)


def block_reference(h, p, n_head):
    """Pure-JAX f32 (HIGHEST) reference of Block.forward for correctness checks."""
    (w_attn, b_attn, w_aproj, b_aproj, g1, b1,
     w_fc, b_fc, w_mproj, b_mproj, g2, b2) = p
    B, S, E = h.shape
    Dh = E // n_head
    prec = jax.lax.Precision.HIGHEST
    qkv = jnp.einsum('bse,ef->bsf', h, w_attn, precision=prec) + b_attn
    q, k, v = jnp.split(qkv, 3, axis=-1)
    sh = lambda t: t.reshape(B, S, n_head, Dh).transpose(0, 2, 1, 3)
    q, k, v = sh(q), sh(k), sh(v)
    w = jnp.einsum('bhqd,bhkd->bhqk', q, k, precision=prec) / math.sqrt(Dh)
    mask = jnp.tril(jnp.ones((S, S), jnp.float32))
    w = w * mask + (-1e9) * (1.0 - mask)
    w = jax.nn.softmax(w, axis=-1)
    a = jnp.einsum('bhqk,bhkd->bhqd', w, v, precision=prec)
    a = a.transpose(0, 2, 1, 3).reshape(B, S, E)
    a = jnp.einsum('bse,ef->bsf', a, w_aproj, precision=prec) + b_aproj
    n = _layernorm(h + a, g1, b1)
    hfc = jnp.einsum('bse,ef->bsf', n, w_fc, precision=prec) + b_fc
    m = jnp.einsum('bsf,fe->bse', _gelu(hfc), w_mproj, precision=prec) + b_mproj
    return _layernorm(n + m, g2, b2)


if __name__ == "__main__":
    key = jax.random.PRNGKey(0)
    k_embed, k_layers, k_tok = jax.random.split(key, 3)

    # Small GPT-style config.  n_embd is a multiple of 128 so every kernel
    # load/store is lane-dense (no masked partial stores on the residual path).
    vocab, n_embd, n_head, n_layer = 100, 128, 4, 2
    B, S = 2, 16

    embed_w = 0.02 * jax.random.normal(k_embed, (vocab, n_embd), jnp.float32)
    # TransformerModel deepcopies one Block (identical params at init); distinct
    # per-layer params here properly exercise the per-layer weight indexing —
    # the forward semantics are identical either way.
    layer_params = [init_block_params(k, n_embd)
                    for k in jax.random.split(k_layers, n_layer)]

    tokens = jax.random.randint(k_tok, (B, S), 0, vocab, dtype=jnp.int32)

    out = transformer_forward(tokens, embed_w, layer_params, n_head)
    out = jax.block_until_ready(out)

    # f32 reference of TransformerModel.forward (same view/embed/squeeze glue).
    xv = tokens.reshape(-1, B, S)
    ref = jnp.squeeze(embed_w[xv], axis=0)
    for p in layer_params:
        ref = block_reference(ref, p, n_head)

    assert out.shape == (B, S, n_embd)
    # Kernel matmuls run bf16-in / f32-accumulate (gelu in bf16), so compare at
    # bf16-level tolerance against the f32 HIGHEST reference.
    max_err = float(jnp.max(jnp.abs(out - ref)))
    assert jnp.allclose(out, ref, atol=5e-3, rtol=5e-3), max_err

    print("KERNEL_OK")
</pallas_src>

<mosaic_0001>
module attributes {stable_mosaic.version = 11 : i64} {
  func.func @transformer_layers_kernel(%arg0: i32, %arg1: i32, %arg2: memref<2x16x128xf32, #tpu.memory_space<vmem>>, %arg3: memref<1x128x384xbf16, #tpu.memory_space<vmem>>, %arg4: memref<1x1x384xf32, #tpu.memory_space<vmem>>, %arg5: memref<1x128x128xbf16, #tpu.memory_space<vmem>>, %arg6: memref<1x1x128xf32, #tpu.memory_space<vmem>>, %arg7: memref<1x1x128xf32, #tpu.memory_space<vmem>>, %arg8: memref<1x1x128xf32, #tpu.memory_space<vmem>>, %arg9: memref<1x128x512xbf16, #tpu.memory_space<vmem>>, %arg10: memref<1x1x512xf32, #tpu.memory_space<vmem>>, %arg11: memref<1x512x128xbf16, #tpu.memory_space<vmem>>, %arg12: memref<1x1x128xf32, #tpu.memory_space<vmem>>, %arg13: memref<1x1x128xf32, #tpu.memory_space<vmem>>, %arg14: memref<1x1x128xf32, #tpu.memory_space<vmem>>, %arg15: memref<2x16x128xf32, #tpu.memory_space<vmem>>, %arg16: memref<2x16x128xbf16, #tpu.memory_space<vmem>>) attributes {dimension_semantics = [#tpu.dimension_semantics<parallel>, #tpu.dimension_semantics<arbitrary>], iteration_bounds = array<i64: 1, 2>, scalar_prefetch = 0 : i64, scratch_operands = 1 : i64, tpu.core_type = #tpu.core_type<tc>, window_params = [{transform_indices = @transform_0, window_bounds = array<i64: 2, 16, 128>}, {transform_indices = @transform_1, window_bounds = array<i64: 1, 128, 384>}, {transform_indices = @transform_2, window_bounds = array<i64: 1, 1, 384>}, {transform_indices = @transform_3, window_bounds = array<i64: 1, 128, 128>}, {transform_indices = @transform_4, window_bounds = array<i64: 1, 1, 128>}, {transform_indices = @transform_5, window_bounds = array<i64: 1, 1, 128>}, {transform_indices = @transform_6, window_bounds = array<i64: 1, 1, 128>}, {transform_indices = @transform_7, window_bounds = array<i64: 1, 128, 512>}, {transform_indices = @transform_8, window_bounds = array<i64: 1, 1, 512>}, {transform_indices = @transform_9, window_bounds = array<i64: 1, 512, 128>}, {transform_indices = @transform_10, window_bounds = array<i64: 1, 1, 128>}, {transform_indices = @transform_11, window_bounds = array<i64: 1, 1, 128>}, {transform_indices = @transform_12, window_bounds = array<i64: 1, 1, 128>}, {transform_indices = @transform_13, window_bounds = array<i64: 2, 16, 128>}]} {
    %c0_i32 = arith.constant 0 : i32
    %0 = arith.cmpi eq, %arg1, %c0_i32 : i32
    %1 = arith.extui %0 : i1 to i32
    %c0_i32_0 = arith.constant 0 : i32
    %2 = arith.cmpi ne, %1, %c0_i32_0 : i32
    scf.if %2 {
      %c0_131 = arith.constant 0 : index
      %c0_132 = arith.constant 0 : index
      %c0_133 = arith.constant 0 : index
      %328 = vector.load %arg2[%c0_131, %c0_132, %c0_133] : memref<2x16x128xf32, #tpu.memory_space<vmem>>, vector<2x16x128xf32>
      %c0_134 = arith.constant 0 : index
      %c0_135 = arith.constant 0 : index
      %c0_136 = arith.constant 0 : index
      %329 = vector.load %arg15[%c0_134, %c0_135, %c0_136] : memref<2x16x128xf32, #tpu.memory_space<vmem>>, vector<2x16x128xf32>
      tpu.vector_store %arg15[%c0_134, %c0_135, %c0_136], %328 {strides = array<i32>} : memref<2x16x128xf32, #tpu.memory_space<vmem>>, vector<2x16x128xf32>,
    } else {
    }
    %c0 = arith.constant 0 : index
    %c0_1 = arith.constant 0 : index
    %c0_2 = arith.constant 0 : index
    %3 = vector.load %arg15[%c0, %c0_1, %c0_2] : memref<2x16x128xf32, #tpu.memory_space<vmem>>, vector<2x16x128xf32>
    %4 = vector.shape_cast %3 : vector<2x16x128xf32> to vector<32x128xf32>
    %5 = arith.truncf %4 : vector<32x128xf32> to vector<32x128xbf16>
    %c0_3 = arith.constant 0 : index
    %c0_4 = arith.constant 0 : index
    %c0_5 = arith.constant 0 : index
    %6 = vector.load %arg3[%c0_3, %c0_4, %c0_5] : memref<1x128x384xbf16, #tpu.memory_space<vmem>>, vector<1x128x384xbf16>
    %7 = vector.shape_cast %6 : vector<1x128x384xbf16> to vector<128x384xbf16>
    %cst = arith.constant dense<0.000000e+00> : vector<32x384xf32>
    %8 = tpu.matmul %5, %7, %cst {dimension_numbers = #tpu.dot_dimension_numbers<[1], [0], [0], [1], [0, 0, 1, 1], [], []>} : vector<32x128xbf16>, vector<128x384xbf16>, vector<32x384xf32> -> vector<32x384xf32>
    %c0_6 = arith.constant 0 : index
    %c0_7 = arith.constant 0 : index
    %c0_8 = arith.constant 0 : index
    %9 = vector.load %arg4[%c0_6, %c0_7, %c0_8] : memref<1x1x384xf32, #tpu.memory_space<vmem>>, vector<1x1x384xf32>
    %10 = vector.shape_cast %9 : vector<1x1x384xf32> to vector<1x384xf32>
    %11 = vector.broadcast %10 : vector<1x384xf32> to vector<32x384xf32>
    %12 = arith.addf %8, %11 : vector<32x384xf32>
    %13 = tpu.iota {dimensions = array<i32: 0>} : vector<16x16xi32>
    %14 = tpu.iota {dimensions = array<i32: 1>} : vector<16x16xi32>
    %15 = arith.cmpi sle, %14, %13 : vector<16x16xi32>
    %16 = vector.extract_strided_slice %12 {offsets = [0, 0], sizes = [16, 32], strides = [1, 1]} : vector<32x384xf32> to vector<16x32xf32>
    %17 = arith.truncf %16 : vector<16x32xf32> to vector<16x32xbf16>
    %18 = vector.extract_strided_slice %12 {offsets = [0, 128], sizes = [16, 32], strides = [1, 1]} : vector<32x384xf32> to vector<16x32xf32>
    %19 = arith.truncf %18 : vector<16x32xf32> to vector<16x32xbf16>
    %20 = vector.extract_strided_slice %12 {offsets = [0, 256], sizes = [16, 32], strides = [1, 1]} : vector<32x384xf32> to vector<16x32xf32>
    %21 = arith.truncf %20 : vector<16x32xf32> to vector<16x32xbf16>
    %cst_9 = arith.constant dense<0.000000e+00> : vector<16x16xf32>
    %22 = tpu.matmul %17, %19, %cst_9 {dimension_numbers = #tpu.dot_dimension_numbers<[1], [1], [0], [0], [0, 0, 1, 0], [], []>} : vector<16x32xbf16>, vector<16x32xbf16>, vector<16x16xf32> -> vector<16x16xf32>
    %cst_10 = arith.constant 0.176776692 : f32
    %23 = vector.broadcast %cst_10 : f32 to vector<16x16xf32>
    %24 = arith.mulf %22, %23 : vector<16x16xf32>
    %cst_11 = arith.constant -1.000000e+09 : f32
    %25 = vector.broadcast %cst_11 : f32 to vector<16x16xf32>
    %26 = arith.select %15, %24, %25 : vector<16x16xi1>, vector<16x16xf32>
    %cst_12 = arith.constant dense<0xFF800000> : vector<16xf32>
    %27 = vector.multi_reduction <maximumf>, %26, %cst_12 [1] : vector<16x16xf32> to vector<16xf32>
    %28 = vector.shape_cast %27 : vector<16xf32> to vector<16x1xf32>
    %29 = vector.broadcast %28 : vector<16x1xf32> to vector<16x16xf32>
    %30 = arith.subf %26, %29 : vector<16x16xf32>
    %31 = math.exp %30 : vector<16x16xf32>
    %cst_13 = arith.constant dense<0.000000e+00> : vector<16xf32>
    %32 = vector.multi_reduction <add>, %31, %cst_13 [1] : vector<16x16xf32> to vector<16xf32>
    %33 = vector.shape_cast %32 : vector<16xf32> to vector<16x1xf32>
    %34 = tpu.reciprocal %33 {approx = true} : vector<16x1xf32> -> vector<16x1xf32>
    %35 = vector.broadcast %34 : vector<16x1xf32> to vector<16x16xf32>
    %36 = arith.mulf %31, %35 : vector<16x16xf32>
    %37 = arith.truncf %36 : vector<16x16xf32> to vector<16x16xbf16>
    %cst_14 = arith.constant dense<0.000000e+00> : vector<16x32xf32>
    %38 = tpu.matmul %37, %21, %cst_14 {dimension_numbers = #tpu.dot_dimension_numbers<[1], [0], [0], [1], [0, 0, 1, 1], [], []>} : vector<16x16xbf16>, vector<16x32xbf16>, vector<16x32xf32> -> vector<16x32xf32>
    %39 = arith.truncf %38 : vector<16x32xf32> to vector<16x32xbf16>
    %c0_15 = arith.constant 0 : index
    %c0_16 = arith.constant 0 : index
    %c0_17 = arith.constant 0 : index
    %40 = vector.load %arg16[%c0_15, %c0_16, %c0_17] : memref<2x16x128xbf16, #tpu.memory_space<vmem>>, vector<1x16x32xbf16>
    %41 = vector.shape_cast %40 : vector<1x16x32xbf16> to vector<16x32xbf16>
    %42 = vector.shape_cast %39 : vector<16x32xbf16> to vector<1x16x32xbf16>
    tpu.vector_store %arg16[%c0_15, %c0_16, %c0_17], %42 {strides = array<i32>} : memref<2x16x128xbf16, #tpu.memory_space<vmem>>, vector<1x16x32xbf16>,
    %43 = vector.extract_strided_slice %12 {offsets = [0, 32], sizes = [16, 32], strides = [1, 1]} : vector<32x384xf32> to vector<16x32xf32>
    %44 = arith.truncf %43 : vector<16x32xf32> to vector<16x32xbf16>
    %45 = vector.extract_strided_slice %12 {offsets = [0, 160], sizes = [16, 32], strides = [1, 1]} : vector<32x384xf32> to vector<16x32xf32>
    %46 = arith.truncf %45 : vector<16x32xf32> to vector<16x32xbf16>
    %47 = vector.extract_strided_slice %12 {offsets = [0, 288], sizes = [16, 32], strides = [1, 1]} : vector<32x384xf32> to vector<16x32xf32>
    %48 = arith.truncf %47 : vector<16x32xf32> to vector<16x32xbf16>
    %cst_18 = arith.constant dense<0.000000e+00> : vector<16x16xf32>
    %49 = tpu.matmul %44, %46, %cst_18 {dimension_numbers = #tpu.dot_dimension_numbers<[1], [1], [0], [0], [0, 0, 1, 0], [], []>} : vector<16x32xbf16>, vector<16x32xbf16>, vector<16x16xf32> -> vector<16x16xf32>
    %cst_19 = arith.constant 0.176776692 : f32
    %50 = vector.broadcast %cst_19 : f32 to vector<16x16xf32>
    %51 = arith.mulf %49, %50 : vector<16x16xf32>
    %cst_20 = arith.constant -1.000000e+09 : f32
    %52 = vector.broadcast %cst_20 : f32 to vector<16x16xf32>
    %53 = arith.select %15, %51, %52 : vector<16x16xi1>, vector<16x16xf32>
    %cst_21 = arith.constant dense<0xFF800000> : vector<16xf32>
    %54 = vector.multi_reduction <maximumf>, %53, %cst_21 [1] : vector<16x16xf32> to vector<16xf32>
    %55 = vector.shape_cast %54 : vector<16xf32> to vector<16x1xf32>
    %56 = vector.broadcast %55 : vector<16x1xf32> to vector<16x16xf32>
    %57 = arith.subf %53, %56 : vector<16x16xf32>
    %58 = math.exp %57 : vector<16x16xf32>
    %cst_22 = arith.constant dense<0.000000e+00> : vector<16xf32>
    %59 = vector.multi_reduction <add>, %58, %cst_22 [1] : vector<16x16xf32> to vector<16xf32>
    %60 = vector.shape_cast %59 : vector<16xf32> to vector<16x1xf32>
    %61 = tpu.reciprocal %60 {approx = true} : vector<16x1xf32> -> vector<16x1xf32>
    %62 = vector.broadcast %61 : vector<16x1xf32> to vector<16x16xf32>
    %63 = arith.mulf %58, %62 : vector<16x16xf32>
    %64 = arith.truncf %63 : vector<16x16xf32> to vector<16x16xbf16>
    %cst_23 = arith.constant dense<0.000000e+00> : vector<16x32xf32>
    %65 = tpu.matmul %64, %48, %cst_23 {dimension_numbers = #tpu.dot_dimension_numbers<[1], [0], [0], [1], [0, 0, 1, 1], [], []>} : vector<16x16xbf16>, vector<16x32xbf16>, vector<16x32xf32> -> vector<16x32xf32>
    %66 = arith.truncf %65 : vector<16x32xf32> to vector<16x32xbf16>
    %c0_24 = arith.constant 0 : index
    %c0_25 = arith.constant 0 : index
    %c32 = arith.constant 32 : index
    %67 = vector.load %arg16[%c0_24, %c0_25, %c32] : memref<2x16x128xbf16, #tpu.memory_space<vmem>>, vector<1x16x32xbf16>
    %68 = vector.shape_cast %67 : vector<1x16x32xbf16> to vector<16x32xbf16>
    %69 = vector.shape_cast %66 : vector<16x32xbf16> to vector<1x16x32xbf16>
    tpu.vector_store %arg16[%c0_24, %c0_25, %c32], %69 {strides = array<i32>} : memref<2x16x128xbf16, #tpu.memory_space<vmem>>, vector<1x16x32xbf16>,
    %70 = vector.extract_strided_slice %12 {offsets = [0, 64], sizes = [16, 32], strides = [1, 1]} : vector<32x384xf32> to vector<16x32xf32>
    %71 = arith.truncf %70 : vector<16x32xf32> to vector<16x32xbf16>
    %72 = vector.extract_strided_slice %12 {offsets = [0, 192], sizes = [16, 32], strides = [1, 1]} : vector<32x384xf32> to vector<16x32xf32>
    %73 = arith.truncf %72 : vector<16x32xf32> to vector<16x32xbf16>
    %74 = vector.extract_strided_slice %12 {offsets = [0, 320], sizes = [16, 32], strides = [1, 1]} : vector<32x384xf32> to vector<16x32xf32>
    %75 = arith.truncf %74 : vector<16x32xf32> to vector<16x32xbf16>
    %cst_26 = arith.constant dense<0.000000e+00> : vector<16x16xf32>
    %76 = tpu.matmul %71, %73, %cst_26 {dimension_numbers = #tpu.dot_dimension_numbers<[1], [1], [0], [0], [0, 0, 1, 0], [], []>} : vector<16x32xbf16>, vector<16x32xbf16>, vector<16x16xf32> -> vector<16x16xf32>
    %cst_27 = arith.constant 0.176776692 : f32
    %77 = vector.broadcast %cst_27 : f32 to vector<16x16xf32>
    %78 = arith.mulf %76, %77 : vector<16x16xf32>
    %cst_28 = arith.constant -1.000000e+09 : f32
    %79 = vector.broadcast %cst_28 : f32 to vector<16x16xf32>
    %80 = arith.select %15, %78, %79 : vector<16x16xi1>, vector<16x16xf32>
    %cst_29 = arith.constant dense<0xFF800000> : vector<16xf32>
    %81 = vector.multi_reduction <maximumf>, %80, %cst_29 [1] : vector<16x16xf32> to vector<16xf32>
    %82 = vector.shape_cast %81 : vector<16xf32> to vector<16x1xf32>
    %83 = vector.broadcast %82 : vector<16x1xf32> to vector<16x16xf32>
    %84 = arith.subf %80, %83 : vector<16x16xf32>
    %85 = math.exp %84 : vector<16x16xf32>
    %cst_30 = arith.constant dense<0.000000e+00> : vector<16xf32>
    %86 = vector.multi_reduction <add>, %85, %cst_30 [1] : vector<16x16xf32> to vector<16xf32>
    %87 = vector.shape_cast %86 : vector<16xf32> to vector<16x1xf32>
    %88 = tpu.reciprocal %87 {approx = true} : vector<16x1xf32> -> vector<16x1xf32>
    %89 = vector.broadcast %88 : vector<16x1xf32> to vector<16x16xf32>
    %90 = arith.mulf %85, %89 : vector<16x16xf32>
    %91 = arith.truncf %90 : vector<16x16xf32> to vector<16x16xbf16>
    %cst_31 = arith.constant dense<0.000000e+00> : vector<16x32xf32>
    %92 = tpu.matmul %91, %75, %cst_31 {dimension_numbers = #tpu.dot_dimension_numbers<[1], [0], [0], [1], [0, 0, 1, 1], [], []>} : vector<16x16xbf16>, vector<16x32xbf16>, vector<16x32xf32> -> vector<16x32xf32>
    %93 = arith.truncf %92 : vector<16x32xf32> to vector<16x32xbf16>
    %c0_32 = arith.constant 0 : index
    %c0_33 = arith.constant 0 : index
    %c64 = arith.constant 64 : index
    %94 = vector.load %arg16[%c0_32, %c0_33, %c64] : memref<2x16x128xbf16, #tpu.memory_space<vmem>>, vector<1x16x32xbf16>
    %95 = vector.shape_cast %94 : vector<1x16x32xbf16> to vector<16x32xbf16>
    %96 = vector.shape_cast %93 : vector<16x32xbf16> to vector<1x16x32xbf16>
    tpu.vector_store %arg16[%c0_32, %c0_33, %c64], %96 {strides = array<i32>} : memref<2x16x128xbf16, #tpu.memory_space<vmem>>, vector<1x16x32xbf16>,
    %97 = vector.extract_strided_slice %12 {offsets = [0, 96], sizes = [16, 32], strides = [1, 1]} : vector<32x384xf32> to vector<16x32xf32>
    %98 = arith.truncf %97 : vector<16x32xf32> to vector<16x32xbf16>
    %99 = vector.extract_strided_slice %12 {offsets = [0, 224], sizes = [16, 32], strides = [1, 1]} : vector<32x384xf32> to vector<16x32xf32>
    %100 = arith.truncf %99 : vector<16x32xf32> to vector<16x32xbf16>
    %101 = vector.extract_strided_slice %12 {offsets = [0, 352], sizes = [16, 32], strides = [1, 1]} : vector<32x384xf32> to vector<16x32xf32>
    %102 = arith.truncf %101 : vector<16x32xf32> to vector<16x32xbf16>
    %cst_34 = arith.constant dense<0.000000e+00> : vector<16x16xf32>
    %103 = tpu.matmul %98, %100, %cst_34 {dimension_numbers = #tpu.dot_dimension_numbers<[1], [1], [0], [0], [0, 0, 1, 0], [], []>} : vector<16x32xbf16>, vector<16x32xbf16>, vector<16x16xf32> -> vector<16x16xf32>
    %cst_35 = arith.constant 0.176776692 : f32
    %104 = vector.broadcast %cst_35 : f32 to vector<16x16xf32>
    %105 = arith.mulf %103, %104 : vector<16x16xf32>
    %cst_36 = arith.constant -1.000000e+09 : f32
    %106 = vector.broadcast %cst_36 : f32 to vector<16x16xf32>
    %107 = arith.select %15, %105, %106 : vector<16x16xi1>, vector<16x16xf32>
    %cst_37 = arith.constant dense<0xFF800000> : vector<16xf32>
    %108 = vector.multi_reduction <maximumf>, %107, %cst_37 [1] : vector<16x16xf32> to vector<16xf32>
    %109 = vector.shape_cast %108 : vector<16xf32> to vector<16x1xf32>
    %110 = vector.broadcast %109 : vector<16x1xf32> to vector<16x16xf32>
    %111 = arith.subf %107, %110 : vector<16x16xf32>
    %112 = math.exp %111 : vector<16x16xf32>
    %cst_38 = arith.constant dense<0.000000e+00> : vector<16xf32>
    %113 = vector.multi_reduction <add>, %112, %cst_38 [1] : vector<16x16xf32> to vector<16xf32>
    %114 = vector.shape_cast %113 : vector<16xf32> to vector<16x1xf32>
    %115 = tpu.reciprocal %114 {approx = true} : vector<16x1xf32> -> vector<16x1xf32>
    %116 = vector.broadcast %115 : vector<16x1xf32> to vector<16x16xf32>
    %117 = arith.mulf %112, %116 : vector<16x16xf32>
    %118 = arith.truncf %117 : vector<16x16xf32> to vector<16x16xbf16>
    %cst_39 = arith.constant dense<0.000000e+00> : vector<16x32xf32>
    %119 = tpu.matmul %118, %102, %cst_39 {dimension_numbers = #tpu.dot_dimension_numbers<[1], [0], [0], [1], [0, 0, 1, 1], [], []>} : vector<16x16xbf16>, vector<16x32xbf16>, vector<16x32xf32> -> vector<16x32xf32>
    %120 = arith.truncf %119 : vector<16x32xf32> to vector<16x32xbf16>
    %c0_40 = arith.constant 0 : index
    %c0_41 = arith.constant 0 : index
    %c96 = arith.constant 96 : index
    %121 = vector.load %arg16[%c0_40, %c0_41, %c96] : memref<2x16x128xbf16, #tpu.memory_space<vmem>>, vector<1x16x32xbf16>
    %122 = vector.shape_cast %121 : vector<1x16x32xbf16> to vector<16x32xbf16>
    %123 = vector.shape_cast %120 : vector<16x32xbf16> to vector<1x16x32xbf16>
    tpu.vector_store %arg16[%c0_40, %c0_41, %c96], %123 {strides = array<i32>} : memref<2x16x128xbf16, #tpu.memory_space<vmem>>, vector<1x16x32xbf16>,
    %124 = vector.extract_strided_slice %12 {offsets = [16, 0], sizes = [16, 32], strides = [1, 1]} : vector<32x384xf32> to vector<16x32xf32>
    %125 = arith.truncf %124 : vector<16x32xf32> to vector<16x32xbf16>
    %126 = vector.extract_strided_slice %12 {offsets = [16, 128], sizes = [16, 32], strides = [1, 1]} : vector<32x384xf32> to vector<16x32xf32>
    %127 = arith.truncf %126 : vector<16x32xf32> to vector<16x32xbf16>
    %128 = vector.extract_strided_slice %12 {offsets = [16, 256], sizes = [16, 32], strides = [1, 1]} : vector<32x384xf32> to vector<16x32xf32>
    %129 = arith.truncf %128 : vector<16x32xf32> to vector<16x32xbf16>
    %cst_42 = arith.constant dense<0.000000e+00> : vector<16x16xf32>
    %130 = tpu.matmul %125, %127, %cst_42 {dimension_numbers = #tpu.dot_dimension_numbers<[1], [1], [0], [0], [0, 0, 1, 0], [], []>} : vector<16x32xbf16>, vector<16x32xbf16>, vector<16x16xf32> -> vector<16x16xf32>
    %cst_43 = arith.constant 0.176776692 : f32
    %131 = vector.broadcast %cst_43 : f32 to vector<16x16xf32>
    %132 = arith.mulf %130, %131 : vector<16x16xf32>
    %cst_44 = arith.constant -1.000000e+09 : f32
    %133 = vector.broadcast %cst_44 : f32 to vector<16x16xf32>
    %134 = arith.select %15, %132, %133 : vector<16x16xi1>, vector<16x16xf32>
    %cst_45 = arith.constant dense<0xFF800000> : vector<16xf32>
    %135 = vector.multi_reduction <maximumf>, %134, %cst_45 [1] : vector<16x16xf32> to vector<16xf32>
    %136 = vector.shape_cast %135 : vector<16xf32> to vector<16x1xf32>
    %137 = vector.broadcast %136 : vector<16x1xf32> to vector<16x16xf32>
    %138 = arith.subf %134, %137 : vector<16x16xf32>
    %139 = math.exp %138 : vector<16x16xf32>
    %cst_46 = arith.constant dense<0.000000e+00> : vector<16xf32>
    %140 = vector.multi_reduction <add>, %139, %cst_46 [1] : vector<16x16xf32> to vector<16xf32>
    %141 = vector.shape_cast %140 : vector<16xf32> to vector<16x1xf32>
    %142 = tpu.reciprocal %141 {approx = true} : vector<16x1xf32> -> vector<16x1xf32>
    %143 = vector.broadcast %142 : vector<16x1xf32> to vector<16x16xf32>
    %144 = arith.mulf %139, %143 : vector<16x16xf32>
    %145 = arith.truncf %144 : vector<16x16xf32> to vector<16x16xbf16>
    %cst_47 = arith.constant dense<0.000000e+00> : vector<16x32xf32>
    %146 = tpu.matmul %145, %129, %cst_47 {dimension_numbers = #tpu.dot_dimension_numbers<[1], [0], [0], [1], [0, 0, 1, 1], [], []>} : vector<16x16xbf16>, vector<16x32xbf16>, vector<16x32xf32> -> vector<16x32xf32>
    %147 = arith.truncf %146 : vector<16x32xf32> to vector<16x32xbf16>
    %c1 = arith.constant 1 : index
    %c0_48 = arith.constant 0 : index
    %c0_49 = arith.constant 0 : index
    %148 = vector.load %arg16[%c1, %c0_48, %c0_49] : memref<2x16x128xbf16, #tpu.memory_space<vmem>>, vector<1x16x32xbf16>
    %149 = vector.shape_cast %148 : vector<1x16x32xbf16> to vector<16x32xbf16>
    %150 = vector.shape_cast %147 : vector<16x32xbf16> to vector<1x16x32xbf16>
    tpu.vector_store %arg16[%c1, %c0_48, %c0_49], %150 {strides = array<i32>} : memref<2x16x128xbf16, #tpu.memory_space<vmem>>, vector<1x16x32xbf16>,
    %151 = vector.extract_strided_slice %12 {offsets = [16, 32], sizes = [16, 32], strides = [1, 1]} : vector<32x384xf32> to vector<16x32xf32>
    %152 = arith.truncf %151 : vector<16x32xf32> to vector<16x32xbf16>
    %153 = vector.extract_strided_slice %12 {offsets = [16, 160], sizes = [16, 32], strides = [1, 1]} : vector<32x384xf32> to vector<16x32xf32>
    %154 = arith.truncf %153 : vector<16x32xf32> to vector<16x32xbf16>
    %155 = vector.extract_strided_slice %12 {offsets = [16, 288], sizes = [16, 32], strides = [1, 1]} : vector<32x384xf32> to vector<16x32xf32>
    %156 = arith.truncf %155 : vector<16x32xf32> to vector<16x32xbf16>
    %cst_50 = arith.constant dense<0.000000e+00> : vector<16x16xf32>
    %157 = tpu.matmul %152, %154, %cst_50 {dimension_numbers = #tpu.dot_dimension_numbers<[1], [1], [0], [0], [0, 0, 1, 0], [], []>} : vector<16x32xbf16>, vector<16x32xbf16>, vector<16x16xf32> -> vector<16x16xf32>
    %cst_51 = arith.constant 0.176776692 : f32
    %158 = vector.broadcast %cst_51 : f32 to vector<16x16xf32>
    %159 = arith.mulf %157, %158 : vector<16x16xf32>
    %cst_52 = arith.constant -1.000000e+09 : f32
    %160 = vector.broadcast %cst_52 : f32 to vector<16x16xf32>
    %161 = arith.select %15, %159, %160 : vector<16x16xi1>, vector<16x16xf32>
    %cst_53 = arith.constant dense<0xFF800000> : vector<16xf32>
    %162 = vector.multi_reduction <maximumf>, %161, %cst_53 [1] : vector<16x16xf32> to vector<16xf32>
    %163 = vector.shape_cast %162 : vector<16xf32> to vector<16x1xf32>
    %164 = vector.broadcast %163 : vector<16x1xf32> to vector<16x16xf32>
    %165 = arith.subf %161, %164 : vector<16x16xf32>
    %166 = math.exp %165 : vector<16x16xf32>
    %cst_54 = arith.constant dense<0.000000e+00> : vector<16xf32>
    %167 = vector.multi_reduction <add>, %166, %cst_54 [1] : vector<16x16xf32> to vector<16xf32>
    %168 = vector.shape_cast %167 : vector<16xf32> to vector<16x1xf32>
    %169 = tpu.reciprocal %168 {approx = true} : vector<16x1xf32> -> vector<16x1xf32>
    %170 = vector.broadcast %169 : vector<16x1xf32> to vector<16x16xf32>
    %171 = arith.mulf %166, %170 : vector<16x16xf32>
    %172 = arith.truncf %171 : vector<16x16xf32> to vector<16x16xbf16>
    %cst_55 = arith.constant dense<0.000000e+00> : vector<16x32xf32>
    %173 = tpu.matmul %172, %156, %cst_55 {dimension_numbers = #tpu.dot_dimension_numbers<[1], [0], [0], [1], [0, 0, 1, 1], [], []>} : vector<16x16xbf16>, vector<16x32xbf16>, vector<16x32xf32> -> vector<16x32xf32>
    %174 = arith.truncf %173 : vector<16x32xf32> to vector<16x32xbf16>
    %c1_56 = arith.constant 1 : index
    %c0_57 = arith.constant 0 : index
    %c32_58 = arith.constant 32 : index
    %175 = vector.load %arg16[%c1_56, %c0_57, %c32_58] : memref<2x16x128xbf16, #tpu.memory_space<vmem>>, vector<1x16x32xbf16>
    %176 = vector.shape_cast %175 : vector<1x16x32xbf16> to vector<16x32xbf16>
    %177 = vector.shape_cast %174 : vector<16x32xbf16> to vector<1x16x32xbf16>
    tpu.vector_store %arg16[%c1_56, %c0_57, %c32_58], %177 {strides = array<i32>} : memref<2x16x128xbf16, #tpu.memory_space<vmem>>, vector<1x16x32xbf16>,
    %178 = vector.extract_strided_slice %12 {offsets = [16, 64], sizes = [16, 32], strides = [1, 1]} : vector<32x384xf32> to vector<16x32xf32>
    %179 = arith.truncf %178 : vector<16x32xf32> to vector<16x32xbf16>
    %180 = vector.extract_strided_slice %12 {offsets = [16, 192], sizes = [16, 32], strides = [1, 1]} : vector<32x384xf32> to vector<16x32xf32>
    %181 = arith.truncf %180 : vector<16x32xf32> to vector<16x32xbf16>
    %182 = vector.extract_strided_slice %12 {offsets = [16, 320], sizes = [16, 32], strides = [1, 1]} : vector<32x384xf32> to vector<16x32xf32>
    %183 = arith.truncf %182 : vector<16x32xf32> to vector<16x32xbf16>
    %cst_59 = arith.constant dense<0.000000e+00> : vector<16x16xf32>
    %184 = tpu.matmul %179, %181, %cst_59 {dimension_numbers = #tpu.dot_dimension_numbers<[1], [1], [0], [0], [0, 0, 1, 0], [], []>} : vector<16x32xbf16>, vector<16x32xbf16>, vector<16x16xf32> -> vector<16x16xf32>
    %cst_60 = arith.constant 0.176776692 : f32
    %185 = vector.broadcast %cst_60 : f32 to vector<16x16xf32>
    %186 = arith.mulf %184, %185 : vector<16x16xf32>
    %cst_61 = arith.constant -1.000000e+09 : f32
    %187 = vector.broadcast %cst_61 : f32 to vector<16x16xf32>
    %188 = arith.select %15, %186, %187 : vector<16x16xi1>, vector<16x16xf32>
    %cst_62 = arith.constant dense<0xFF800000> : vector<16xf32>
    %189 = vector.multi_reduction <maximumf>, %188, %cst_62 [1] : vector<16x16xf32> to vector<16xf32>
    %190 = vector.shape_cast %189 : vector<16xf32> to vector<16x1xf32>
    %191 = vector.broadcast %190 : vector<16x1xf32> to vector<16x16xf32>
    %192 = arith.subf %188, %191 : vector<16x16xf32>
    %193 = math.exp %192 : vector<16x16xf32>
    %cst_63 = arith.constant dense<0.000000e+00> : vector<16xf32>
    %194 = vector.multi_reduction <add>, %193, %cst_63 [1] : vector<16x16xf32> to vector<16xf32>
    %195 = vector.shape_cast %194 : vector<16xf32> to vector<16x1xf32>
    %196 = tpu.reciprocal %195 {approx = true} : vector<16x1xf32> -> vector<16x1xf32>
    %197 = vector.broadcast %196 : vector<16x1xf32> to vector<16x16xf32>
    %198 = arith.mulf %193, %197 : vector<16x16xf32>
    %199 = arith.truncf %198 : vector<16x16xf32> to vector<16x16xbf16>
    %cst_64 = arith.constant dense<0.000000e+00> : vector<16x32xf32>
    %200 = tpu.matmul %199, %183, %cst_64 {dimension_numbers = #tpu.dot_dimension_numbers<[1], [0], [0], [1], [0, 0, 1, 1], [], []>} : vector<16x16xbf16>, vector<16x32xbf16>, vector<16x32xf32> -> vector<16x32xf32>
    %201 = arith.truncf %200 : vector<16x32xf32> to vector<16x32xbf16>
    %c1_65 = arith.constant 1 : index
    %c0_66 = arith.constant 0 : index
    %c64_67 = arith.constant 64 : index
    %202 = vector.load %arg16[%c1_65, %c0_66, %c64_67] : memref<2x16x128xbf16, #tpu.memory_space<vmem>>, vector<1x16x32xbf16>
    %203 = vector.shape_cast %202 : vector<1x16x32xbf16> to vector<16x32xbf16>
    %204 = vector.shape_cast %201 : vector<16x32xbf16> to vector<1x16x32xbf16>
    tpu.vector_store %arg16[%c1_65, %c0_66, %c64_67], %204 {strides = array<i32>} : memref<2x16x128xbf16, #tpu.memory_space<vmem>>, vector<1x16x32xbf16>,
    %205 = vector.extract_strided_slice %12 {offsets = [16, 96], sizes = [16, 32], strides = [1, 1]} : vector<32x384xf32> to vector<16x32xf32>
    %206 = arith.truncf %205 : vector<16x32xf32> to vector<16x32xbf16>
    %207 = vector.extract_strided_slice %12 {offsets = [16, 224], sizes = [16, 32], strides = [1, 1]} : vector<32x384xf32> to vector<16x32xf32>
    %208 = arith.truncf %207 : vector<16x32xf32> to vector<16x32xbf16>
    %209 = vector.extract_strided_slice %12 {offsets = [16, 352], sizes = [16, 32], strides = [1, 1]} : vector<32x384xf32> to vector<16x32xf32>
    %210 = arith.truncf %209 : vector<16x32xf32> to vector<16x32xbf16>
    %cst_68 = arith.constant dense<0.000000e+00> : vector<16x16xf32>
    %211 = tpu.matmul %206, %208, %cst_68 {dimension_numbers = #tpu.dot_dimension_numbers<[1], [1], [0], [0], [0, 0, 1, 0], [], []>} : vector<16x32xbf16>, vector<16x32xbf16>, vector<16x16xf32> -> vector<16x16xf32>
    %cst_69 = arith.constant 0.176776692 : f32
    %212 = vector.broadcast %cst_69 : f32 to vector<16x16xf32>
    %213 = arith.mulf %211, %212 : vector<16x16xf32>
    %cst_70 = arith.constant -1.000000e+09 : f32
    %214 = vector.broadcast %cst_70 : f32 to vector<16x16xf32>
    %215 = arith.select %15, %213, %214 : vector<16x16xi1>, vector<16x16xf32>
    %cst_71 = arith.constant dense<0xFF800000> : vector<16xf32>
    %216 = vector.multi_reduction <maximumf>, %215, %cst_71 [1] : vector<16x16xf32> to vector<16xf32>
    %217 = vector.shape_cast %216 : vector<16xf32> to vector<16x1xf32>
    %218 = vector.broadcast %217 : vector<16x1xf32> to vector<16x16xf32>
    %219 = arith.subf %215, %218 : vector<16x16xf32>
    %220 = math.exp %219 : vector<16x16xf32>
    %cst_72 = arith.constant dense<0.000000e+00> : vector<16xf32>
    %221 = vector.multi_reduction <add>, %220, %cst_72 [1] : vector<16x16xf32> to vector<16xf32>
    %222 = vector.shape_cast %221 : vector<16xf32> to vector<16x1xf32>
    %223 = tpu.reciprocal %222 {approx = true} : vector<16x1xf32> -> vector<16x1xf32>
    %224 = vector.broadcast %223 : vector<16x1xf32> to vector<16x16xf32>
    %225 = arith.mulf %220, %224 : vector<16x16xf32>
    %226 = arith.truncf %225 : vector<16x16xf32> to vector<16x16xbf16>
    %cst_73 = arith.constant dense<0.000000e+00> : vector<16x32xf32>
    %227 = tpu.matmul %226, %210, %cst_73 {dimension_numbers = #tpu.dot_dimension_numbers<[1], [0], [0], [1], [0, 0, 1, 1], [], []>} : vector<16x16xbf16>, vector<16x32xbf16>, vector<16x32xf32> -> vector<16x32xf32>
    %228 = arith.truncf %227 : vector<16x32xf32> to vector<16x32xbf16>
    %c1_74 = arith.constant 1 : index
    %c0_75 = arith.constant 0 : index
    %c96_76 = arith.constant 96 : index
    %229 = vector.load %arg16[%c1_74, %c0_75, %c96_76] : memref<2x16x128xbf16, #tpu.memory_space<vmem>>, vector<1x16x32xbf16>
    %230 = vector.shape_cast %229 : vector<1x16x32xbf16> to vector<16x32xbf16>
    %231 = vector.shape_cast %228 : vector<16x32xbf16> to vector<1x16x32xbf16>
    tpu.vector_store %arg16[%c1_74, %c0_75, %c96_76], %231 {strides = array<i32>} : memref<2x16x128xbf16, #tpu.memory_space<vmem>>, vector<1x16x32xbf16>,
    %c0_77 = arith.constant 0 : index
    %c0_78 = arith.constant 0 : index
    %c0_79 = arith.constant 0 : index
    %232 = vector.load %arg16[%c0_77, %c0_78, %c0_79] : memref<2x16x128xbf16, #tpu.memory_space<vmem>>, vector<2x16x128xbf16>
    %233 = vector.shape_cast %232 : vector<2x16x128xbf16> to vector<32x128xbf16>
    %c0_80 = arith.constant 0 : index
    %c0_81 = arith.constant 0 : index
    %c0_82 = arith.constant 0 : index
    %234 = vector.load %arg5[%c0_80, %c0_81, %c0_82] : memref<1x128x128xbf16, #tpu.memory_space<vmem>>, vector<1x128x128xbf16>
    %235 = vector.shape_cast %234 : vector<1x128x128xbf16> to vector<128x128xbf16>
    %cst_83 = arith.constant dense<0.000000e+00> : vector<32x128xf32>
    %236 = tpu.matmul %233, %235, %cst_83 {dimension_numbers = #tpu.dot_dimension_numbers<[1], [0], [0], [1], [0, 0, 1, 1], [], []>} : vector<32x128xbf16>, vector<128x128xbf16>, vector<32x128xf32> -> vector<32x128xf32>
    %c0_84 = arith.constant 0 : index
    %c0_85 = arith.constant 0 : index
    %c0_86 = arith.constant 0 : index
    %237 = vector.load %arg6[%c0_84, %c0_85, %c0_86] : memref<1x1x128xf32, #tpu.memory_space<vmem>>, vector<1x1x128xf32>
    %238 = vector.shape_cast %237 : vector<1x1x128xf32> to vector<1x128xf32>
    %239 = vector.broadcast %238 : vector<1x128xf32> to vector<32x128xf32>
    %240 = arith.addf %236, %239 : vector<32x128xf32>
    %241 = arith.addf %4, %240 : vector<32x128xf32>
    %c0_87 = arith.constant 0 : index
    %c0_88 = arith.constant 0 : index
    %c0_89 = arith.constant 0 : index
    %242 = vector.load %arg7[%c0_87, %c0_88, %c0_89] : memref<1x1x128xf32, #tpu.memory_space<vmem>>, vector<1x1x128xf32>
    %243 = vector.shape_cast %242 : vector<1x1x128xf32> to vector<1x128xf32>
    %c0_90 = arith.constant 0 : index
    %c0_91 = arith.constant 0 : index
    %c0_92 = arith.constant 0 : index
    %244 = vector.load %arg8[%c0_90, %c0_91, %c0_92] : memref<1x1x128xf32, #tpu.memory_space<vmem>>, vector<1x1x128xf32>
    %245 = vector.shape_cast %244 : vector<1x1x128xf32> to vector<1x128xf32>
    %cst_93 = arith.constant dense<0.000000e+00> : vector<32xf32>
    %246 = vector.multi_reduction <add>, %241, %cst_93 [1] : vector<32x128xf32> to vector<32xf32>
    %247 = vector.shape_cast %246 : vector<32xf32> to vector<32x1xf32>
    %cst_94 = arith.constant 1.280000e+02 : f32
    %248 = vector.broadcast %cst_94 : f32 to vector<32x1xf32>
    %249 = arith.divf %247, %248 : vector<32x1xf32>
    %250 = vector.broadcast %249 : vector<32x1xf32> to vector<32x128xf32>
    %251 = arith.subf %241, %250 : vector<32x128xf32>
    %252 = arith.mulf %251, %251 : vector<32x128xf32>
    %cst_95 = arith.constant dense<0.000000e+00> : vector<32xf32>
    %253 = vector.multi_reduction <add>, %252, %cst_95 [1] : vector<32x128xf32> to vector<32xf32>
    %254 = vector.shape_cast %253 : vector<32xf32> to vector<32x1xf32>
    %cst_96 = arith.constant 1.280000e+02 : f32
    %255 = vector.broadcast %cst_96 : f32 to vector<32x1xf32>
    %256 = arith.divf %254, %255 : vector<32x1xf32>
    %257 = vector.broadcast %249 : vector<32x1xf32> to vector<32x128xf32>
    %258 = arith.subf %241, %257 : vector<32x128xf32>
    %cst_97 = arith.constant 9.99999974E-6 : f32
    %259 = vector.broadcast %cst_97 : f32 to vector<32x1xf32>
    %260 = arith.addf %256, %259 : vector<32x1xf32>
    %261 = math.sqrt %260 : vector<32x1xf32>
    %262 = vector.broadcast %261 : vector<32x1xf32> to vector<32x128xf32>
    %263 = arith.divf %258, %262 : vector<32x128xf32>
    %264 = vector.broadcast %243 : vector<1x128xf32> to vector<32x128xf32>
    %265 = arith.mulf %264, %263 : vector<32x128xf32>
    %266 = vector.broadcast %245 : vector<1x128xf32> to vector<32x128xf32>
    %267 = arith.addf %265, %266 : vector<32x128xf32>
    %268 = arith.truncf %267 : vector<32x128xf32> to vector<32x128xbf16>
    %cst_98 = arith.constant 0.000000e+00 : f32
    %269 = vector.broadcast %cst_98 : f32 to vector<32x128xf32>
    %c0_99 = arith.constant 0 : index
    %c0_100 = arith.constant 0 : index
    %c0_101 = arith.constant 0 : index
    %270 = vector.load %arg9[%c0_99, %c0_100, %c0_101] : memref<1x128x512xbf16, #tpu.memory_space<vmem>>, vector<1x128x512xbf16>
    %271 = vector.shape_cast %270 : vector<1x128x512xbf16> to vector<128x512xbf16>
    %cst_102 = arith.constant dense<0.000000e+00> : vector<32x512xf32>
    %272 = tpu.matmul %268, %271, %cst_102 {dimension_numbers = #tpu.dot_dimension_numbers<[1], [0], [0], [1], [0, 0, 1, 1], [], []>} : vector<32x128xbf16>, vector<128x512xbf16>, vector<32x512xf32> -> vector<32x512xf32>
    %c0_103 = arith.constant 0 : index
    %c0_104 = arith.constant 0 : index
    %c0_105 = arith.constant 0 : index
    %273 = vector.load %arg10[%c0_103, %c0_104, %c0_105] : memref<1x1x512xf32, #tpu.memory_space<vmem>>, vector<1x1x512xf32>
    %274 = vector.shape_cast %273 : vector<1x1x512xf32> to vector<1x512xf32>
    %275 = vector.broadcast %274 : vector<1x512xf32> to vector<32x512xf32>
    %276 = arith.addf %272, %275 : vector<32x512xf32>
    %277 = arith.truncf %276 : vector<32x512xf32> to vector<32x512xbf16>
    %278 = arith.mulf %277, %277 : vector<32x512xbf16>
    %279 = arith.mulf %278, %277 : vector<32x512xbf16>
    %cst_106 = arith.constant 5.000000e-01 : bf16
    %280 = vector.broadcast %cst_106 : bf16 to vector<32x512xbf16>
    %281 = arith.mulf %280, %277 : vector<32x512xbf16>
    %cst_107 = arith.constant 4.467770e-02 : bf16
    %282 = vector.broadcast %cst_107 : bf16 to vector<32x512xbf16>
    %283 = arith.mulf %282, %279 : vector<32x512xbf16>
    %284 = arith.addf %277, %283 : vector<32x512xbf16>
    %cst_108 = arith.constant 7.968750e-01 : bf16
    %285 = vector.broadcast %cst_108 : bf16 to vector<32x512xbf16>
    %286 = arith.mulf %285, %284 : vector<32x512xbf16>
    %287 = math.tanh %286 : vector<32x512xbf16>
    %cst_109 = arith.constant 1.000000e+00 : bf16
    %288 = vector.broadcast %cst_109 : bf16 to vector<32x512xbf16>
    %289 = arith.addf %288, %287 : vector<32x512xbf16>
    %290 = arith.mulf %281, %289 : vector<32x512xbf16>
    %c0_110 = arith.constant 0 : index
    %c0_111 = arith.constant 0 : index
    %c0_112 = arith.constant 0 : index
    %291 = vector.load %arg11[%c0_110, %c0_111, %c0_112] : memref<1x512x128xbf16, #tpu.memory_space<vmem>>, vector<1x512x128xbf16>
    %292 = vector.shape_cast %291 : vector<1x512x128xbf16> to vector<512x128xbf16>
    %cst_113 = arith.constant dense<0.000000e+00> : vector<32x128xf32>
    %293 = tpu.matmul %290, %292, %cst_113 {dimension_numbers = #tpu.dot_dimension_numbers<[1], [0], [0], [1], [0, 0, 1, 1], [], []>} : vector<32x512xbf16>, vector<512x128xbf16>, vector<32x128xf32> -> vector<32x128xf32>
    %294 = arith.addf %269, %293 : vector<32x128xf32>
    %c0_114 = arith.constant 0 : index
    %c0_115 = arith.constant 0 : index
    %c0_116 = arith.constant 0 : index
    %295 = vector.load %arg12[%c0_114, %c0_115, %c0_116] : memref<1x1x128xf32, #tpu.memory_space<vmem>>, vector<1x1x128xf32>
    %296 = vector.shape_cast %295 : vector<1x1x128xf32> to vector<1x128xf32>
    %297 = vector.broadcast %296 : vector<1x128xf32> to vector<32x128xf32>
    %298 = arith.addf %294, %297 : vector<32x128xf32>
    %299 = arith.addf %267, %298 : vector<32x128xf32>
    %c0_117 = arith.constant 0 : index
    %c0_118 = arith.constant 0 : index
    %c0_119 = arith.constant 0 : index
    %300 = vector.load %arg13[%c0_117, %c0_118, %c0_119] : memref<1x1x128xf32, #tpu.memory_space<vmem>>, vector<1x1x128xf32>
    %301 = vector.shape_cast %300 : vector<1x1x128xf32> to vector<1x128xf32>
    %c0_120 = arith.constant 0 : index
    %c0_121 = arith.constant 0 : index
    %c0_122 = arith.constant 0 : index
    %302 = vector.load %arg14[%c0_120, %c0_121, %c0_122] : memref<1x1x128xf32, #tpu.memory_space<vmem>>, vector<1x1x128xf32>
    %303 = vector.shape_cast %302 : vector<1x1x128xf32> to vector<1x128xf32>
    %cst_123 = arith.constant dense<0.000000e+00> : vector<32xf32>
    %304 = vector.multi_reduction <add>, %299, %cst_123 [1] : vector<32x128xf32> to vector<32xf32>
    %305 = vector.shape_cast %304 : vector<32xf32> to vector<32x1xf32>
    %cst_124 = arith.constant 1.280000e+02 : f32
    %306 = vector.broadcast %cst_124 : f32 to vector<32x1xf32>
    %307 = arith.divf %305, %306 : vector<32x1xf32>
    %308 = vector.broadcast %307 : vector<32x1xf32> to vector<32x128xf32>
    %309 = arith.subf %299, %308 : vector<32x128xf32>
    %310 = arith.mulf %309, %309 : vector<32x128xf32>
    %cst_125 = arith.constant dense<0.000000e+00> : vector<32xf32>
    %311 = vector.multi_reduction <add>, %310, %cst_125 [1] : vector<32x128xf32> to vector<32xf32>
    %312 = vector.shape_cast %311 : vector<32xf32> to vector<32x1xf32>
    %cst_126 = arith.constant 1.280000e+02 : f32
    %313 = vector.broadcast %cst_126 : f32 to vector<32x1xf32>
    %314 = arith.divf %312, %313 : vector<32x1xf32>
    %315 = vector.broadcast %307 : vector<32x1xf32> to vector<32x128xf32>
    %316 = arith.subf %299, %315 : vector<32x128xf32>
    %cst_127 = arith.constant 9.99999974E-6 : f32
    %317 = vector.broadcast %cst_127 : f32 to vector<32x1xf32>
    %318 = arith.addf %314, %317 : vector<32x1xf32>
    %319 = math.sqrt %318 : vector<32x1xf32>
    %320 = vector.broadcast %319 : vector<32x1xf32> to vector<32x128xf32>
    %321 = arith.divf %316, %320 : vector<32x128xf32>
    %322 = vector.broadcast %301 : vector<1x128xf32> to vector<32x128xf32>
    %323 = arith.mulf %322, %321 : vector<32x128xf32>
    %324 = vector.broadcast %303 : vector<1x128xf32> to vector<32x128xf32>
    %325 = arith.addf %323, %324 : vector<32x128xf32>
    %326 = vector.shape_cast %325 : vector<32x128xf32> to vector<2x16x128xf32>
    %c0_128 = arith.constant 0 : index
    %c0_129 = arith.constant 0 : index
    %c0_130 = arith.constant 0 : index
    %327 = vector.load %arg15[%c0_128, %c0_129, %c0_130] : memref<2x16x128xf32, #tpu.memory_space<vmem>>, vector<2x16x128xf32>
    tpu.vector_store %arg15[%c0_128, %c0_129, %c0_130], %326 {strides = array<i32>} : memref<2x16x128xf32, #tpu.memory_space<vmem>>, vector<2x16x128xf32>,
    return
  }
  func.func @transform_0(%arg0: i32, %arg1: i32) -> (i32, i32, i32) {
    %c0_i32 = arith.constant 0 : i32
    %c0_i32_0 = arith.constant 0 : i32
    %c0_i32_1 = arith.constant 0 : i32
    return %arg0, %c0_i32, %c0_i32_0 : i32, i32, i32
  }
  func.func @transform_1(%arg0: i32, %arg1: i32) -> (i32, i32, i32) {
    %c0_i32 = arith.constant 0 : i32
    %c0_i32_0 = arith.constant 0 : i32
    %c0_i32_1 = arith.constant 0 : i32
    return %arg1, %c0_i32, %c0_i32_0 : i32, i32, i32
  }
  func.func @transform_2(%arg0: i32, %arg1: i32) -> (i32, i32, i32) {
    %c0_i32 = arith.constant 0 : i32
    %c0_i32_0 = arith.constant 0 : i32
    %c0_i32_1 = arith.constant 0 : i32
    return %arg1, %c0_i32, %c0_i32_0 : i32, i32, i32
  }
  func.func @transform_3(%arg0: i32, %arg1: i32) -> (i32, i32, i32) {
    %c0_i32 = arith.constant 0 : i32
    %c0_i32_0 = arith.constant 0 : i32
    %c0_i32_1 = arith.constant 0 : i32
    return %arg1, %c0_i32, %c0_i32_0 : i32, i32, i32
  }
  func.func @transform_4(%arg0: i32, %arg1: i32) -> (i32, i32, i32) {
    %c0_i32 = arith.constant 0 : i32
    %c0_i32_0 = arith.constant 0 : i32
    %c0_i32_1 = arith.constant 0 : i32
    return %arg1, %c0_i32, %c0_i32_0 : i32, i32, i32
  }
  func.func @transform_5(%arg0: i32, %arg1: i32) -> (i32, i32, i32) {
    %c0_i32 = arith.constant 0 : i32
    %c0_i32_0 = arith.constant 0 : i32
    %c0_i32_1 = arith.constant 0 : i32
    return %arg1, %c0_i32, %c0_i32_0 : i32, i32, i32
  }
  func.func @transform_6(%arg0: i32, %arg1: i32) -> (i32, i32, i32) {
    %c0_i32 = arith.constant 0 : i32
    %c0_i32_0 = arith.constant 0 : i32
    %c0_i32_1 = arith.constant 0 : i32
    return %arg1, %c0_i32, %c0_i32_0 : i32, i32, i32
  }
  func.func @transform_7(%arg0: i32, %arg1: i32) -> (i32, i32, i32) {
    %c0_i32 = arith.constant 0 : i32
    %c0_i32_0 = arith.constant 0 : i32
    %c0_i32_1 = arith.constant 0 : i32
    return %arg1, %c0_i32, %c0_i32_0 : i32, i32, i32
  }
  func.func @transform_8(%arg0: i32, %arg1: i32) -> (i32, i32, i32) {
    %c0_i32 = arith.constant 0 : i32
    %c0_i32_0 = arith.constant 0 : i32
    %c0_i32_1 = arith.constant 0 : i32
    return %arg1, %c0_i32, %c0_i32_0 : i32, i32, i32
  }
  func.func @transform_9(%arg0: i32, %arg1: i32) -> (i32, i32, i32) {
    %c0_i32 = arith.constant 0 : i32
    %c0_i32_0 = arith.constant 0 : i32
    %c0_i32_1 = arith.constant 0 : i32
    return %arg1, %c0_i32, %c0_i32_0 : i32, i32, i32
  }
  func.func @transform_10(%arg0: i32, %arg1: i32) -> (i32, i32, i32) {
    %c0_i32 = arith.constant 0 : i32
    %c0_i32_0 = arith.constant 0 : i32
    %c0_i32_1 = arith.constant 0 : i32
    return %arg1, %c0_i32, %c0_i32_0 : i32, i32, i32
  }
  func.func @transform_11(%arg0: i32, %arg1: i32) -> (i32, i32, i32) {
    %c0_i32 = arith.constant 0 : i32
    %c0_i32_0 = arith.constant 0 : i32
    %c0_i32_1 = arith.constant 0 : i32
    return %arg1, %c0_i32, %c0_i32_0 : i32, i32, i32
  }
  func.func @transform_12(%arg0: i32, %arg1: i32) -> (i32, i32, i32) {
    %c0_i32 = arith.constant 0 : i32
    %c0_i32_0 = arith.constant 0 : i32
    %c0_i32_1 = arith.constant 0 : i32
    return %arg1, %c0_i32, %c0_i32_0 : i32, i32, i32
  }
  func.func @transform_13(%arg0: i32, %arg1: i32) -> (i32, i32, i32) {
    %c0_i32 = arith.constant 0 : i32
    %c0_i32_0 = arith.constant 0 : i32
    %c0_i32_1 = arith.constant 0 : i32
    return %arg0, %c0_i32, %c0_i32_0 : i32, i32, i32
  }
}

</mosaic_0001>

<llo_original>
// kernel: tpu_custom_call.1
$region0: #{tpu_custom_call.1}
  #allocation0 [shape = 'u32[]', space=smem, size = 0x4, offset = 0x4, fixed_abs, tag = 'smem constant byte address 0x4 - core index']
  #allocation1 [shape = 'u32[144,128]{1,0:T(1,128)}', space=vmem, size = 0x12000, scoped, tag = 'internal scratch']
  #allocation2 [shape = 'bf16[2,16,128]{2,1,0:T(8,128)(2,1)}', space=vmem, size = 0x2000, scoped, tag = 'scratch operand']
  %s0 = inlined_call_operand.hbm [shape: f32[2,16,128], index: 0, kind: input, shape index: {}]
  %s1 = inlined_call_operand.hbm [shape: bf16[2,128,384], index: 1, kind: input, shape index: {}]
  %s2 = inlined_call_operand.hbm [shape: f32[2,1,384], index: 2, kind: input, shape index: {}]
  %s3 = inlined_call_operand.hbm [shape: bf16[2,128,128], index: 3, kind: input, shape index: {}]
  %s4 = inlined_call_operand.vmem [shape: f32[2,1,128], index: 4, kind: input, shape index: {}]
  %s5 = inlined_call_operand.vmem [shape: f32[2,1,128], index: 5, kind: input, shape index: {}]
  %s6 = inlined_call_operand.vmem [shape: f32[2,1,128], index: 6, kind: input, shape index: {}]
  %s7 = inlined_call_operand.hbm [shape: bf16[2,128,512], index: 7, kind: input, shape index: {}]
  %s8 = inlined_call_operand.vmem [shape: f32[2,1,512], index: 8, kind: input, shape index: {}]
  %s9 = inlined_call_operand.hbm [shape: bf16[2,512,128], index: 9, kind: input, shape index: {}]
  %s10 = inlined_call_operand.vmem [shape: f32[2,1,128], index: 10, kind: input, shape index: {}]
  %s11 = inlined_call_operand.vmem [shape: f32[2,1,128], index: 11, kind: input, shape index: {}]
  %s12 = inlined_call_operand.vmem [shape: f32[2,1,128], index: 12, kind: input, shape index: {}]
  %s13 = inlined_call_operand.hbm [shape: f32[2,16,128], index: 13, kind: output, shape index: {}]
  %s14 = sld [smem:[#allocation0]]
  $region113: #{tpu_custom_call.1} parent=0
    _
  %s16 = ssub.s32 1, %s14
  %s17 = scalar_select 0, %s16, %s14
  $region1: #{tpu_custom_call.1} parent=0
    #allocation3 [shape = 'u8[16384]{0}', space=vmem, size = 0x4000, scoped, tag = 'input window, operand 0, single buffered']
    #allocation4 [shape = 's32[2]{0}', space=sflag, size = 0x8, scoped, tag = 'scoped memory for tpu_custom_call.1']
    #allocation5 [shape = 's32[2]{0}', space=sflag, size = 0x8, scoped, tag = 'scoped memory for tpu_custom_call.1']
    #allocation6 [shape = 'u8[196608]{0}', space=vmem, size = 0x30000, scoped, tag = 'input window, operand 1']
    #allocation7 [shape = 's32[2]{0}', space=sflag, size = 0x8, scoped, tag = 'scoped memory for tpu_custom_call.1']
    #allocation8 [shape = 'u8[3072]{0}', space=vmem, size = 0xc00, scoped, tag = 'input window, operand 2']
    #allocation9 [shape = 'u8[65536]{0}', space=vmem, size = 0x10000, scoped, tag = 'input window, operand 3']
    #allocation10 [shape = 's32[2]{0}', space=sflag, size = 0x8, scoped, tag = 'scoped memory for tpu_custom_call.1']
    #allocation11 [shape = 'u8[262144]{0}', space=vmem, size = 0x40000, scoped, tag = 'input window, operand 7']
    #allocation12 [shape = 'u8[262144]{0}', space=vmem, size = 0x40000, scoped, tag = 'input window, operand 9']
    #allocation13 [shape = 's32[2]{0}', space=sflag, size = 0x8, scoped, tag = 'scoped memory for tpu_custom_call.1']
    #allocation14 [shape = 'u8[16384]{0}', space=vmem, size = 0x4000, scoped, tag = 'output window, operand 0, single buffered']
    %18 = vsyncpa [#allocation4], 0
    %19 = vsyncpa [#allocation7], 0
    %s20 = scalar_lea.sflag [#allocation7], 1
    %21 = vsyncpa %s20, 0
    %22 = vsyncpa [#allocation10], 0
    %s23 = scalar_lea.sflag [#allocation10], 1
    %24 = vsyncpa %s23, 0
    %25 = vsyncpa [#allocation13], 0
    %s26 = scalar_lea.sflag [#allocation13], 1
    %27 = vsyncpa %s26, 0
    %28 = vsyncpa [#allocation5], 0
    loop: start=0, step=1, limit=4
    $region2: #{tpu_custom_call.1} parent=1 // loop_pre_header
      _
    $region3: #{tpu_custom_call.1} parent=1 // loop_header
      %s30 = sphi 0, %s34
      %p31 = scmp.ge.s32.totalorder %s30, 4
      %s37 = sphi 0, %s49
      %s38 = sphi 0, %s45
      %s39 = sphi 0, %s37
      %s40 = sphi 0, %s38
      %s41 = sphi 0, %s39
      %s42 = sphi 0, %s40
      %s52 = sphi 0, %s54
      %s55 = sphi 0, %s52
      %s56 = sphi 0, %s55
      %s72 = sphi 0, %s56
      %s78 = sphi 0, %s80
      %s81 = sphi 0, %s78
      %s82 = sphi 0, %s81
      %s98 = sphi 0, %s82
      %s104 = sphi 0, %s106
      %s107 = sphi 0, %s104
      %s108 = sphi 0, %s107
      %s124 = sphi 0, %s108
      %s130 = sphi 0, %s132
      %s133 = sphi 0, %s130
      %s134 = sphi 0, %s133
      %s150 = sphi 0, %s134
      %s156 = sphi 0, %s158
      %s159 = sphi 0, %s156
      %s160 = sphi 0, %s159
      %s176 = sphi 0, %s160
      %s182 = sphi 0, %s184
      %s185 = sphi 0, %s182
      %s186 = sphi 0, %s185
      %s202 = sphi 0, %s186
      %s208 = sphi 0, %s210
      %s211 = sphi 0, %s208
      %s212 = sphi 0, %s211
      %s228 = sphi 0, %s212
      %s234 = sphi 0, %s236
      %s237 = sphi 0, %s234
      %s238 = sphi 0, %s237
      %s254 = sphi 0, %s238
      %s260 = sphi 0, %s262
      %s263 = sphi 0, %s260
      %s264 = sphi 0, %s263
      %s280 = sphi 0, %s264
      %s286 = sphi 0, %s288
      %s289 = sphi 0, %s286
      %s290 = sphi 0, %s289
      %s306 = sphi 0, %s290
      %s312 = sphi 0, %s314
      %s315 = sphi 0, %s312
      %s316 = sphi 0, %s315
      %s332 = sphi 0, %s316
      %s338 = sphi 0, %s340
      %s341 = sphi 0, %s338
      %s342 = sphi 0, %s341
      %s358 = sphi 0, %s342
      %s364 = sphi 0, %s366
      %s367 = sphi 0, %s364
      %s368 = sphi 0, %s367
      %s384 = sphi 0, %s368
      %s390 = sphi 0, %s392
      %s393 = sphi 0, %s390
      %s394 = sphi 0, %s393
      %s410 = sphi 0, %s394
    $region4: #{tpu_custom_call.1} parent=1 // loop_header_branch
      %33 = sbr.rel (%p31) target = $region8
    $region5: #{tpu_custom_call.1} parent=1 // loop_body
      %s35 = ssub.s32 %s30, 1
      %s36 = ssub.s32 %s30, 2
      %s43 = sadd.s32 1, %s38
      %p44 = scmp.ge.s32.totalorder %s43, 2
      %s45 = scalar_select %p44, 0, %s43
      %s46 = sadd.s32 1, %s37
      %s47 = scalar_select %p44, %s46, %s37
      %p48 = scmp.ge.s32.totalorder %s47, 1
      %s49 = scalar_select %p48, 0, %s47
      %s50 = ssub.s32 %s37, %s49
      %p51 = scmp.eq.s32.totalorder %s50, 0
      %s53 = sadd.s32 %s52, 1
      %s54 = scalar_select %p51, %s52, %s53
      %p57 = pneg %p51
      %p58 = scmp.eq.s32.totalorder %s30, 1
      %p59 = por %p57, %p58
      %p60 = scmp.ne.s32.totalorder %s52, %s55
      %p61 = scmp.eq.s32.totalorder %s30, 0
      %p62 = por %p60, %p61
      %p63 = scmp.ne.s32.totalorder %s52, %s55
      %p64 = scmp.eq.s32.totalorder %s35, 1
      %p65 = por %p63, %p64
      %p66 = scmp.ne.s32.totalorder %s55, %s56
      %p67 = scmp.eq.s32.totalorder %s35, 0
      %p68 = por %p66, %p67
      %p69 = scmp.ne.s32.totalorder %s55, %s56
      %p70 = scmp.eq.s32.totalorder %s36, 1
      %p71 = por %p69, %p70
      %p73 = scmp.ne.s32.totalorder %s56, %s72
      %p74 = scmp.eq.s32.totalorder %s36, 0
      %p75 = por %p73, %p74
      %s76 = ssub.s32 %s38, %s45
      %p77 = scmp.eq.s32.totalorder %s76, 0
      %s79 = sadd.s32 %s78, 1
      %s80 = scalar_select %p77, %s78, %s79
      %p83 = pneg %p77
      %p84 = scmp.eq.s32.totalorder %s30, 1
      %p85 = por %p83, %p84
      %p86 = scmp.ne.s32.totalorder %s78, %s81
      %p87 = scmp.eq.s32.totalorder %s30, 0
      %p88 = por %p86, %p87
      %p89 = scmp.ne.s32.totalorder %s78, %s81
      %p90 = scmp.eq.s32.totalorder %s35, 1
      %p91 = por %p89, %p90
      %p92 = scmp.ne.s32.totalorder %s81, %s82
      %p93 = scmp.eq.s32.totalorder %s35, 0
      %p94 = por %p92, %p93
      %p95 = scmp.ne.s32.totalorder %s81, %s82
      %p96 = scmp.eq.s32.totalorder %s36, 1
      %p97 = por %p95, %p96
      %p99 = scmp.ne.s32.totalorder %s82, %s98
      %p100 = scmp.eq.s32.totalorder %s36, 0
      %p101 = por %p99, %p100
      %s102 = ssub.s32 %s38, %s45
      %p103 = scmp.eq.s32.totalorder %s102, 0
      %s105 = sadd.s32 %s104, 1
      %s106 = scalar_select %p103, %s104, %s105
      %p109 = pneg %p103
      %p110 = scmp.eq.s32.totalorder %s30, 1
      %p111 = por %p109, %p110
      %p112 = scmp.ne.s32.totalorder %s104, %s107
      %p113 = scmp.eq.s32.totalorder %s30, 0
      %p114 = por %p112, %p113
      %p115 = scmp.ne.s32.totalorder %s104, %s107
      %p116 = scmp.eq.s32.totalorder %s35, 1
      %p117 = por %p115, %p116
      %p118 = scmp.ne.s32.totalorder %s107, %s108
      %p119 = scmp.eq.s32.totalorder %s35, 0
      %p120 = por %p118, %p119
      %p121 = scmp.ne.s32.totalorder %s107, %s108
      %p122 = scmp.eq.s32.totalorder %s36, 1
      %p123 = por %p121, %p122
      %p125 = scmp.ne.s32.totalorder %s108, %s124
      %p126 = scmp.eq.s32.totalorder %s36, 0
      %p127 = por %p125, %p126
      %s128 = ssub.s32 %s38, %s45
      %p129 = scmp.eq.s32.totalorder %s128, 0
      %s131 = sadd.s32 %s130, 1
      %s132 = scalar_select %p129, %s130, %s131
      %p135 = pneg %p129
      %p136 = scmp.eq.s32.totalorder %s30, 1
      %p137 = por %p135, %p136
      %p138 = scmp.ne.s32.totalorder %s130, %s133
      %p139 = scmp.eq.s32.totalorder %s30, 0
      %p140 = por %p138, %p139
      %p141 = scmp.ne.s32.totalorder %s130, %s133
      %p142 = scmp.eq.s32.totalorder %s35, 1
      %p143 = por %p141, %p142
      %p144 = scmp.ne.s32.totalorder %s133, %s134
      %p145 = scmp.eq.s32.totalorder %s35, 0
      %p146 = por %p144, %p145
      %p147 = scmp.ne.s32.totalorder %s133, %s134
      %p148 = scmp.eq.s32.totalorder %s36, 1
      %p149 = por %p147, %p148
      %p151 = scmp.ne.s32.totalorder %s134, %s150
      %p152 = scmp.eq.s32.totalorder %s36, 0
      %p153 = por %p151, %p152
      %s154 = ssub.s32 %s38, %s45
      %p155 = scmp.eq.s32.totalorder %s154, 0
      %s157 = sadd.s32 %s156, 1
      %s158 = scalar_select %p155, %s156, %s157
      %p161 = pneg %p155
      %p162 = scmp.eq.s32.totalorder %s30, 1
      %p163 = por %p161, %p162
      %p164 = scmp.ne.s32.totalorder %s156, %s159
      %p165 = scmp.eq.s32.totalorder %s30, 0
      %p166 = por %p164, %p165
      %p167 = scmp.ne.s32.totalorder %s156, %s159
      %p168 = scmp.eq.s32.totalorder %s35, 1
      %p169 = por %p167, %p168
      %p170 = scmp.ne.s32.totalorder %s159, %s160
      %p171 = scmp.eq.s32.totalorder %s35, 0
      %p172 = por %p170, %p171
      %p173 = scmp.ne.s32.totalorder %s159, %s160
      %p174 = scmp.eq.s32.totalorder %s36, 1
      %p175 = por %p173, %p174
      %p177 = scmp.ne.s32.totalorder %s160, %s176
      %p178 = scmp.eq.s32.totalorder %s36, 0
      %p179 = por %p177, %p178
      %s180 = ssub.s32 %s38, %s45
      %p181 = scmp.eq.s32.totalorder %s180, 0
      %s183 = sadd.s32 %s182, 1
      %s184 = scalar_select %p181, %s182, %s183
      %p187 = pneg %p181
      %p188 = scmp.eq.s32.totalorder %s30, 1
      %p189 = por %p187, %p188
      %p190 = scmp.ne.s32.totalorder %s182, %s185
      %p191 = scmp.eq.s32.totalorder %s30, 0
      %p192 = por %p190, %p191
      %p193 = scmp.ne.s32.totalorder %s182, %s185
      %p194 = scmp.eq.s32.totalorder %s35, 1
      %p195 = por %p193, %p194
      %p196 = scmp.ne.s32.totalorder %s185, %s186
      %p197 = scmp.eq.s32.totalorder %s35, 0
      %p198 = por %p196, %p197
      %p199 = scmp.ne.s32.totalorder %s185, %s186
      %p200 = scmp.eq.s32.totalorder %s36, 1
      %p201 = por %p199, %p200
      %p203 = scmp.ne.s32.totalorder %s186, %s202
      %p204 = scmp.eq.s32.totalorder %s36, 0
      %p205 = por %p203, %p204
      %s206 = ssub.s32 %s38, %s45
      %p207 = scmp.eq.s32.totalorder %s206, 0
      %s209 = sadd.s32 %s208, 1
      %s210 = scalar_select %p207, %s208, %s209
      %p213 = pneg %p207
      %p214 = scmp.eq.s32.totalorder %s30, 1
      %p215 = por %p213, %p214
      %p216 = scmp.ne.s32.totalorder %s208, %s211
      %p217 = scmp.eq.s32.totalorder %s30, 0
      %p218 = por %p216, %p217
      %p219 = scmp.ne.s32.totalorder %s208, %s211
      %p220 = scmp.eq.s32.totalorder %s35, 1
      %p221 = por %p219, %p220
      %p222 = scmp.ne.s32.totalorder %s211, %s212
      %p223 = scmp.eq.s32.totalorder %s35, 0
      %p224 = por %p222, %p223
      %p225 = scmp.ne.s32.totalorder %s211, %s212
      %p226 = scmp.eq.s32.totalorder %s36, 1
      %p227 = por %p225, %p226
      %p229 = scmp.ne.s32.totalorder %s212, %s228
      %p230 = scmp.eq.s32.totalorder %s36, 0
      %p231 = por %p229, %p230
      %s232 = ssub.s32 %s38, %s45
      %p233 = scmp.eq.s32.totalorder %s232, 0
      %s235 = sadd.s32 %s234, 1
      %s236 = scalar_select %p233, %s234, %s235
      %p239 = pneg %p233
      %p240 = scmp.eq.s32.totalorder %s30, 1
      %p241 = por %p239, %p240
      %p242 = scmp.ne.s32.totalorder %s234, %s237
      %p243 = scmp.eq.s32.totalorder %s30, 0
      %p244 = por %p242, %p243
      %p245 = scmp.ne.s32.totalorder %s234, %s237
      %p246 = scmp.eq.s32.totalorder %s35, 1
      %p247 = por %p245, %p246
      %p248 = scmp.ne.s32.totalorder %s237, %s238
      %p249 = scmp.eq.s32.totalorder %s35, 0
      %p250 = por %p248, %p249
      %p251 = scmp.ne.s32.totalorder %s237, %s238
      %p252 = scmp.eq.s32.totalorder %s36, 1
      %p253 = por %p251, %p252
      %p255 = scmp.ne.s32.totalorder %s238, %s254
      %p256 = scmp.eq.s32.totalorder %s36, 0
      %p257 = por %p255, %p256
      %s258 = ssub.s32 %s38, %s45
      %p259 = scmp.eq.s32.totalorder %s258, 0
      %s261 = sadd.s32 %s260, 1
      %s262 = scalar_select %p259, %s260, %s261
      %p265 = pneg %p259
      %p266 = scmp.eq.s32.totalorder %s30, 1
      %p267 = por %p265, %p266
      %p268 = scmp.ne.s32.totalorder %s260, %s263
      %p269 = scmp.eq.s32.totalorder %s30, 0
      %p270 = por %p268, %p269
      %p271 = scmp.ne.s32.totalorder %s260, %s263
      %p272 = scmp.eq.s32.totalorder %s35, 1
      %p273 = por %p271, %p272
      %p274 = scmp.ne.s32.totalorder %s263, %s264
      %p275 = scmp.eq.s32.totalorder %s35, 0
      %p276 = por %p274, %p275
      %p277 = scmp.ne.s32.totalorder %s263, %s264
      %p278 = scmp.eq.s32.totalorder %s36, 1
      %p279 = por %p277, %p278
      %p281 = scmp.ne.s32.totalorder %s264, %s280
      %p282 = scmp.eq.s32.totalorder %s36, 0
      %p283 = por %p281, %p282
      %s284 = ssub.s32 %s38, %s45
      %p285 = scmp.eq.s32.totalorder %s284, 0
      %s287 = sadd.s32 %s286, 1
      %s288 = scalar_select %p285, %s286, %s287
      %p291 = pneg %p285
      %p292 = scmp.eq.s32.totalorder %s30, 1
      %p293 = por %p291, %p292
      %p294 = scmp.ne.s32.totalorder %s286, %s289
      %p295 = scmp.eq.s32.totalorder %s30, 0
      %p296 = por %p294, %p295
      %p297 = scmp.ne.s32.totalorder %s286, %s289
      %p298 = scmp.eq.s32.totalorder %s35, 1
      %p299 = por %p297, %p298
      %p300 = scmp.ne.s32.totalorder %s289, %s290
      %p301 = scmp.eq.s32.totalorder %s35, 0
      %p302 = por %p300, %p301
      %p303 = scmp.ne.s32.totalorder %s289, %s290
      %p304 = scmp.eq.s32.totalorder %s36, 1
      %p305 = por %p303, %p304
      %p307 = scmp.ne.s32.totalorder %s290, %s306
      %p308 = scmp.eq.s32.totalorder %s36, 0
      %p309 = por %p307, %p308
      %s310 = ssub.s32 %s38, %s45
      %p311 = scmp.eq.s32.totalorder %s310, 0
      %s313 = sadd.s32 %s312, 1
      %s314 = scalar_select %p311, %s312, %s313
      %p317 = pneg %p311
      %p318 = scmp.eq.s32.totalorder %s30, 1
      %p319 = por %p317, %p318
      %p320 = scmp.ne.s32.totalorder %s312, %s315
      %p321 = scmp.eq.s32.totalorder %s30, 0
      %p322 = por %p320, %p321
      %p323 = scmp.ne.s32.totalorder %s312, %s315
      %p324 = scmp.eq.s32.totalorder %s35, 1
      %p325 = por %p323, %p324
      %p326 = scmp.ne.s32.totalorder %s315, %s316
      %p327 = scmp.eq.s32.totalorder %s35, 0
      %p328 = por %p326, %p327
      %p329 = scmp.ne.s32.totalorder %s315, %s316
      %p330 = scmp.eq.s32.totalorder %s36, 1
      %p331 = por %p329, %p330
      %p333 = scmp.ne.s32.totalorder %s316, %s332
      %p334 = scmp.eq.s32.totalorder %s36, 0
      %p335 = por %p333, %p334
      %s336 = ssub.s32 %s38, %s45
      %p337 = scmp.eq.s32.totalorder %s336, 0
      %s339 = sadd.s32 %s338, 1
      %s340 = scalar_select %p337, %s338, %s339
      %p343 = pneg %p337
      %p344 = scmp.eq.s32.totalorder %s30, 1
      %p345 = por %p343, %p344
      %p346 = scmp.ne.s32.totalorder %s338, %s341
      %p347 = scmp.eq.s32.totalorder %s30, 0
      %p348 = por %p346, %p347
      %p349 = scmp.ne.s32.totalorder %s338, %s341
      %p350 = scmp.eq.s32.totalorder %s35, 1
      %p351 = por %p349, %p350
      %p352 = scmp.ne.s32.totalorder %s341, %s342
      %p353 = scmp.eq.s32.totalorder %s35, 0
      %p354 = por %p352, %p353
      %p355 = scmp.ne.s32.totalorder %s341, %s342
      %p356 = scmp.eq.s32.totalorder %s36, 1
      %p357 = por %p355, %p356
      %p359 = scmp.ne.s32.totalorder %s342, %s358
      %p360 = scmp.eq.s32.totalorder %s36, 0
      %p361 = por %p359, %p360
      %s362 = ssub.s32 %s38, %s45
      %p363 = scmp.eq.s32.totalorder %s362, 0
      %s365 = sadd.s32 %s364, 1
      %s366 = scalar_select %p363, %s364, %s365
      %p369 = pneg %p363
      %p370 = scmp.eq.s32.totalorder %s30, 1
      %p371 = por %p369, %p370
      %p372 = scmp.ne.s32.totalorder %s364, %s367
      %p373 = scmp.eq.s32.totalorder %s30, 0
      %p374 = por %p372, %p373
      %p375 = scmp.ne.s32.totalorder %s364, %s367
      %p376 = scmp.eq.s32.totalorder %s35, 1
      %p377 = por %p375, %p376
      %p378 = scmp.ne.s32.totalorder %s367, %s368
      %p379 = scmp.eq.s32.totalorder %s35, 0
      %p380 = por %p378, %p379
      %p381 = scmp.ne.s32.totalorder %s367, %s368
      %p382 = scmp.eq.s32.totalorder %s36, 1
      %p383 = por %p381, %p382
      %p385 = scmp.ne.s32.totalorder %s368, %s384
      %p386 = scmp.eq.s32.totalorder %s36, 0
      %p387 = por %p385, %p386
      %s388 = ssub.s32 %s37, %s49
      %p389 = scmp.eq.s32.totalorder %s388, 0
      %s391 = sadd.s32 %s390, 1
      %s392 = scalar_select %p389, %s390, %s391
      %p395 = pneg %p389
      %p396 = scmp.eq.s32.totalorder %s30, 1
      %p397 = por %p395, %p396
      %p398 = scmp.ne.s32.totalorder %s390, %s393
      %p399 = scmp.eq.s32.totalorder %s30, 0
      %p400 = por %p398, %p399
      %p401 = scmp.ne.s32.totalorder %s390, %s393
      %p402 = scmp.eq.s32.totalorder %s35, 1
      %p403 = por %p401, %p402
      %p404 = scmp.ne.s32.totalorder %s393, %s394
      %p405 = scmp.eq.s32.totalorder %s35, 0
      %p406 = por %p404, %p405
      %p407 = scmp.ne.s32.totalorder %s393, %s394
      %p408 = scmp.eq.s32.totalorder %s36, 1
      %p409 = por %p407, %p408
      %p411 = scmp.ne.s32.totalorder %s394, %s410
      %p412 = scmp.eq.s32.totalorder %s36, 0
      %p413 = por %p411, %p412
      %p414 = scmp.le.s32.totalorder 1, %s30
      %p415 = scmp.lt.s32.totalorder %s30, 3
      %p416 = pnand %p414, %p415
      %p417 = pneg %p416
      // Predicated region
      $region9: #{tpu_custom_call.1} parent=5 // pred_check
        _
      $region10: #{tpu_custom_call.1} parent=5 // pred_check_branch
        %419 = sbr.rel (%p416) target = $region12
      $region11: #{tpu_custom_call.1} parent=5 // pred_region
        %s420 = ssub.s32 %s30, 1
        // Predicated region
        $region13: #{tpu_custom_call.1} parent=11 // pred_check
          %p421 = pneg %p68
        $region14: #{tpu_custom_call.1} parent=11 // pred_check_branch
          %423 = sbr.rel (%p421) target = $region16
        $region15: #{tpu_custom_call.1} parent=11 // pred_region
          %s424 = smul.u32 2, %s39
          %s426 = ssub.s32 512, 512
          %427 = vsyncadd [#allocation4], %s426
          %s428 = smul.addr %s424, 2
          %s429 = smul.addr %s428, 128
          %s430 = scalar_lea.hbm %s0, %s429
          %s431 = sshll.u32 [#allocation3], 4
          %s432 = int_to_ptr.vmem [resolvable:$true] %s431
          %437 = dma.hbm_to_vmem [thread:$0]  %s430, 512, %s432, [#allocation4], 128, 128, 8
        $region16: #{tpu_custom_call.1} parent=11 // pred_fallthru
          _
      $region12: #{tpu_custom_call.1} parent=5 // pred_fallthru
        _
      %p438 = scmp.lt.s32.totalorder %s30, 2
      // Predicated region
      $region17: #{tpu_custom_call.1} parent=5 // pred_check
        %p439 = pneg %p438
      $region18: #{tpu_custom_call.1} parent=5 // pred_check_branch
        %441 = sbr.rel (%p439) target = $region20
      $region19: #{tpu_custom_call.1} parent=5 // pred_region
        // Predicated region
        $region21: #{tpu_custom_call.1} parent=19 // pred_check
          %p442 = pneg %p88
        $region22: #{tpu_custom_call.1} parent=19 // pred_check_branch
          %444 = sbr.rel (%p442) target = $region24
        $region23: #{tpu_custom_call.1} parent=19 // pred_region
          %s445 = sand.u32 %s30, 1
          %s446 = scalar_lea.sflag [#allocation7], %s445
          %s447 = sand.u32 %s78, 1
          %s448 = smul.addr %s447, 192
          %s449 = scalar_lea.vmem [#allocation6], %s448
          %s451 = ssub.s32 3072, 3072
          %452 = vsyncadd %s446, %s451
          %s453 = smul.addr %s38, 48
          %s454 = smul.addr %s453, 64
          %s455 = scalar_lea.hbm %s1, %s454
          %s456 = sshll.u32 %s449, 4
          %s457 = int_to_ptr.vmem [resolvable:$true] %s456
          %462 = dma.hbm_to_vmem [thread:$0]  %s455, 3072, %s457, %s446, 192, 192, 12
        $region24: #{tpu_custom_call.1} parent=19 // pred_fallthru
          _
        // Predicated region
        $region25: #{tpu_custom_call.1} parent=19 // pred_check
          %p463 = pneg %p114
        $region26: #{tpu_custom_call.1} parent=19 // pred_check_branch
          %465 = sbr.rel (%p463) target = $region28
        $region27: #{tpu_custom_call.1} parent=19 // pred_region
          %s466 = sand.u32 %s30, 1
          %s467 = scalar_lea.sflag [#allocation7], %s466
          %s468 = sand.u32 %s104, 1
          %s469 = smul.addr %s468, 3
          %s470 = scalar_lea.vmem [#allocation8], %s469
          %s472 = ssub.s32 48, 48
          %473 = vsyncadd %s467, %s472
          %s474 = smul.addr %s38, 3
          %s475 = smul.addr %s474, 16
          %s476 = scalar_lea.hbm %s2, %s475
          %s478 = sshll.u32 %s470, 4
          %s479 = int_to_ptr.vmem [resolvable:$true] %s478
          %481 = dma.hbm_to_vmem [thread:$0]  %s476, 48, %s479, %s467
        $region28: #{tpu_custom_call.1} parent=19 // pred_fallthru
          _
        // Predicated region
        $region29: #{tpu_custom_call.1} parent=19 // pred_check
          %p482 = pneg %p140
        $region30: #{tpu_custom_call.1} parent=19 // pred_check_branch
          %484 = sbr.rel (%p482) target = $region32
        $region31: #{tpu_custom_call.1} parent=19 // pred_region
          %s485 = sand.u32 %s30, 1
          %s486 = scalar_lea.sflag [#allocation10], %s485
          %s487 = sand.u32 %s130, 1
          %s488 = smul.addr %s487, 64
          %s489 = scalar_lea.vmem [#allocation9], %s488
          %s491 = ssub.s32 1024, 1024
          %492 = vsyncadd %s486, %s491
          %s493 = smul.addr %s38, 16
          %s494 = smul.addr %s493, 64
          %s495 = scalar_lea.hbm %s3, %s494
          %s496 = sshll.u32 %s489, 4
          %s497 = int_to_ptr.vmem [resolvable:$true] %s496
          %502 = dma.hbm_to_vmem [thread:$0]  %s495, 1024, %s497, %s486, 64, 64, 4
        $region32: #{tpu_custom_call.1} parent=19 // pred_fallthru
          _
        // Predicated region
        $region33: #{tpu_custom_call.1} parent=19 // pred_check
          %p503 = pneg %p166
        $region34: #{tpu_custom_call.1} parent=19 // pred_check_branch
          %505 = sbr.rel (%p503) target = $region36
        $region35: #{tpu_custom_call.1} parent=19 // pred_region
          %p506 = scmp.lt.s32.totalorder %s38, 1
          %s507 = scalar_select %p506, %s38, 1
          %s508 = scalar_lea.vmem %s4, %s507
        $region36: #{tpu_custom_call.1} parent=19 // pred_fallthru
          _
        // Predicated region
        $region37: #{tpu_custom_call.1} parent=19 // pred_check
          %p509 = pneg %p192
        $region38: #{tpu_custom_call.1} parent=19 // pred_check_branch
          %511 = sbr.rel (%p509) target = $region40
        $region39: #{tpu_custom_call.1} parent=19 // pred_region
          %p512 = scmp.lt.s32.totalorder %s38, 1
          %s513 = scalar_select %p512, %s38, 1
          %s514 = scalar_lea.vmem %s5, %s513
        $region40: #{tpu_custom_call.1} parent=19 // pred_fallthru
          _
        // Predicated region
        $region41: #{tpu_custom_call.1} parent=19 // pred_check
          %p515 = pneg %p218
        $region42: #{tpu_custom_call.1} parent=19 // pred_check_branch
          %517 = sbr.rel (%p515) target = $region44
        $region43: #{tpu_custom_call.1} parent=19 // pred_region
          %p518 = scmp.lt.s32.totalorder %s38, 1
          %s519 = scalar_select %p518, %s38, 1
          %s520 = scalar_lea.vmem %s6, %s519
        $region44: #{tpu_custom_call.1} parent=19 // pred_fallthru
          _
        // Predicated region
        $region45: #{tpu_custom_call.1} parent=19 // pred_check
          %p521 = pneg %p244
        $region46: #{tpu_custom_call.1} parent=19 // pred_check_branch
          %523 = sbr.rel (%p521) target = $region48
        $region47: #{tpu_custom_call.1} parent=19 // pred_region
          %s524 = sand.u32 %s30, 1
          %s525 = scalar_lea.sflag [#allocation10], %s524
          %s526 = sand.u32 %s234, 1
          %s527 = smul.addr %s526, 256
          %s528 = scalar_lea.vmem [#allocation11], %s527
          %s530 = ssub.s32 4096, 4096
          %531 = vsyncadd %s525, %s530
          %s532 = smul.addr %s38, 64
          %s533 = smul.addr %s532, 64
          %s534 = scalar_lea.hbm %s7, %s533
          %s535 = sshll.u32 %s528, 4
          %s536 = int_to_ptr.vmem [resolvable:$true] %s535
          %541 = dma.hbm_to_vmem [thread:$0]  %s534, 4096, %s536, %s525, 256, 256, 16
        $region48: #{tpu_custom_call.1} parent=19 // pred_fallthru
          _
        // Predicated region
        $region49: #{tpu_custom_call.1} parent=19 // pred_check
          %p542 = pneg %p270
        $region50: #{tpu_custom_call.1} parent=19 // pred_check_branch
          %544 = sbr.rel (%p542) target = $region52
        $region51: #{tpu_custom_call.1} parent=19 // pred_region
          %p545 = scmp.lt.s32.totalorder %s38, 1
          %s546 = scalar_select %p545, %s38, 1
          %s547 = smul.addr %s546, 4
          %s548 = scalar_lea.vmem %s8, %s547
        $region52: #{tpu_custom_call.1} parent=19 // pred_fallthru
          _
        // Predicated region
        $region53: #{tpu_custom_call.1} parent=19 // pred_check
          %p549 = pneg %p296
        $region54: #{tpu_custom_call.1} parent=19 // pred_check_branch
          %551 = sbr.rel (%p549) target = $region56
        $region55: #{tpu_custom_call.1} parent=19 // pred_region
          %s552 = sand.u32 %s286, 1
          %s553 = scalar_lea.sflag [#allocation13], %s552
          %s554 = sand.u32 %s286, 1
          %s555 = smul.addr %s554, 256
          %s556 = scalar_lea.vmem [#allocation12], %s555
          %s558 = ssub.s32 4096, 4096
          %559 = vsyncadd %s553, %s558
          %s560 = smul.addr %s38, 64
          %s561 = smul.addr %s560, 64
          %s562 = scalar_lea.hbm %s9, %s561
          %s563 = sshll.u32 %s556, 4
          %s564 = int_to_ptr.vmem [resolvable:$true] %s563
          %569 = dma.hbm_to_vmem [thread:$0]  %s562, 4096, %s564, %s553, 64, 64, 4
        $region56: #{tpu_custom_call.1} parent=19 // pred_fallthru
          _
        // Predicated region
        $region57: #{tpu_custom_call.1} parent=19 // pred_check
          %p570 = pneg %p322
        $region58: #{tpu_custom_call.1} parent=19 // pred_check_branch
          %572 = sbr.rel (%p570) target = $region60
        $region59: #{tpu_custom_call.1} parent=19 // pred_region
          %p573 = scmp.lt.s32.totalorder %s38, 1
          %s574 = scalar_select %p573, %s38, 1
          %s575 = scalar_lea.vmem %s10, %s574
        $region60: #{tpu_custom_call.1} parent=19 // pred_fallthru
          _
        // Predicated region
        $region61: #{tpu_custom_call.1} parent=19 // pred_check
          %p576 = pneg %p348
        $region62: #{tpu_custom_call.1} parent=19 // pred_check_branch
          %578 = sbr.rel (%p576) target = $region64
        $region63: #{tpu_custom_call.1} parent=19 // pred_region
          %p579 = scmp.lt.s32.totalorder %s38, 1
          %s580 = scalar_select %p579, %s38, 1
          %s581 = scalar_lea.vmem %s11, %s580
        $region64: #{tpu_custom_call.1} parent=19 // pred_fallthru
          _
        // Predicated region
        $region65: #{tpu_custom_call.1} parent=19 // pred_check
          %p582 = pneg %p374
        $region66: #{tpu_custom_call.1} parent=19 // pred_check_branch
          %584 = sbr.rel (%p582) target = $region68
        $region67: #{tpu_custom_call.1} parent=19 // pred_region
          %p585 = scmp.lt.s32.totalorder %s38, 1
          %s586 = scalar_select %p585, %s38, 1
          %s587 = scalar_lea.vmem %s12, %s586
        $region68: #{tpu_custom_call.1} parent=19 // pred_fallthru
          _
      $region20: #{tpu_custom_call.1} parent=5 // pred_fallthru
        _
      %p588 = scmp.le.s32.totalorder 1, %s30
      %p589 = scmp.lt.s32.totalorder %s30, 3
      %p590 = pnand %p588, %p589
      %p591 = pneg %p590
      // Predicated region
      $region69: #{tpu_custom_call.1} parent=5 // pred_check
        _
      $region70: #{tpu_custom_call.1} parent=5 // pred_check_branch
        %593 = sbr.rel (%p590) target = $region72
      $region71: #{tpu_custom_call.1} parent=5 // pred_region
        %s594 = ssub.s32 %s30, 1
        // Predicated region
        $region73: #{tpu_custom_call.1} parent=71 // pred_check
          %p595 = pneg %p68
        $region74: #{tpu_custom_call.1} parent=71 // pred_check_branch
          %597 = sbr.rel (%p595) target = $region76
        $region75: #{tpu_custom_call.1} parent=71 // pred_region
          %598 = dma.done [#allocation4], 512
        $region76: #{tpu_custom_call.1} parent=71 // pred_fallthru
          _
        %s599 = sand.u32 %s35, 1
        %s600 = scalar_lea.sflag [#allocation7], %s599
        %s601 = sand.u32 %s81, 1
        %s602 = smul.addr %s601, 192
        %s603 = scalar_lea.vmem [#allocation6], %s602
        // Predicated region
        $region77: #{tpu_custom_call.1} parent=71 // pred_check
          %p604 = pneg %p94
        $region78: #{tpu_custom_call.1} parent=71 // pred_check_branch
          %606 = sbr.rel (%p604) target = $region80
        $region79: #{tpu_custom_call.1} parent=71 // pred_region
          %607 = dma.done %s600, 3072
        $region80: #{tpu_custom_call.1} parent=71 // pred_fallthru
          _
        %s608 = sand.u32 %s35, 1
        %s609 = scalar_lea.sflag [#allocation7], %s608
        %s610 = sand.u32 %s107, 1
        %s611 = smul.addr %s610, 3
        %s612 = scalar_lea.vmem [#allocation8], %s611
        // Predicated region
        $region81: #{tpu_custom_call.1} parent=71 // pred_check
          %p613 = pneg %p120
        $region82: #{tpu_custom_call.1} parent=71 // pred_check_branch
          %615 = sbr.rel (%p613) target = $region84
        $region83: #{tpu_custom_call.1} parent=71 // pred_region
          %616 = dma.done %s609, 48
        $region84: #{tpu_custom_call.1} parent=71 // pred_fallthru
          _
        %s617 = sand.u32 %s35, 1
        %s618 = scalar_lea.sflag [#allocation10], %s617
        %s619 = sand.u32 %s133, 1
        %s620 = smul.addr %s619, 64
        %s621 = scalar_lea.vmem [#allocation9], %s620
        // Predicated region
        $region85: #{tpu_custom_call.1} parent=71 // pred_check
          %p622 = pneg %p146
        $region86: #{tpu_custom_call.1} parent=71 // pred_check_branch
          %624 = sbr.rel (%p622) target = $region88
        $region87: #{tpu_custom_call.1} parent=71 // pred_region
          %625 = dma.done %s618, 1024
        $region88: #{tpu_custom_call.1} parent=71 // pred_fallthru
          _
        %s626 = sand.u32 %s35, 1
        %s627 = scalar_lea.sflag [#allocation10], %s626
        %s628 = sand.u32 %s237, 1
        %s629 = smul.addr %s628, 256
        %s630 = scalar_lea.vmem [#allocation11], %s629
        // Predicated region
        $region89: #{tpu_custom_call.1} parent=71 // pred_check
          %p631 = pneg %p250
        $region90: #{tpu_custom_call.1} parent=71 // pred_check_branch
          %633 = sbr.rel (%p631) target = $region92
        $region91: #{tpu_custom_call.1} parent=71 // pred_region
          %634 = dma.done %s627, 4096
        $region92: #{tpu_custom_call.1} parent=71 // pred_fallthru
          _
        %s635 = sand.u32 %s289, 1
        %s636 = scalar_lea.sflag [#allocation13], %s635
        %s637 = sand.u32 %s289, 1
        %s638 = smul.addr %s637, 256
        %s639 = scalar_lea.vmem [#allocation12], %s638
        // Predicated region
        $region93: #{tpu_custom_call.1} parent=71 // pred_check
          %p640 = pneg %p302
        $region94: #{tpu_custom_call.1} parent=71 // pred_check_branch
          %642 = sbr.rel (%p640) target = $region96
        $region95: #{tpu_custom_call.1} parent=71 // pred_region
          %643 = dma.done %s636, 4096
        $region96: #{tpu_custom_call.1} parent=71 // pred_fallthru
          _
        %p644 = pneg %p68
        %p645 = pneg %p65
        %s646 = sand.u32 %s35, 1
        %s647 = scalar_lea.sflag [#allocation7], %s646
        %s648 = sand.u32 %s81, 1
        %s649 = smul.addr %s648, 192
        %s650 = scalar_lea.vmem [#allocation6], %s649
        %p651 = pneg %p94
        %p652 = pneg %p91
        %s653 = sand.u32 %s35, 1
        %s654 = scalar_lea.sflag [#allocation7], %s653
        %s655 = sand.u32 %s107, 1
        %s656 = smul.addr %s655, 3
        %s657 = scalar_lea.vmem [#allocation8], %s656
        %p658 = pneg %p120
        %p659 = pneg %p117
        %s660 = sand.u32 %s35, 1
        %s661 = scalar_lea.sflag [#allocation10], %s660
        %s662 = sand.u32 %s133, 1
        %s663 = smul.addr %s662, 64
        %s664 = scalar_lea.vmem [#allocation9], %s663
        %p665 = pneg %p146
        %p666 = pneg %p143
        %p667 = scmp.lt.s32.totalorder %s40, 1
        %s668 = scalar_select %p667, %s40, 1
        %s669 = scalar_lea.vmem %s4, %s668
        %p670 = pneg %p172
        %p671 = pneg %p169
        %p672 = scmp.lt.s32.totalorder %s40, 1
        %s673 = scalar_select %p672, %s40, 1
        %s674 = scalar_lea.vmem %s5, %s673
        %p675 = pneg %p198
        %p676 = pneg %p195
        %p677 = scmp.lt.s32.totalorder %s40, 1
        %s678 = scalar_select %p677, %s40, 1
        %s679 = scalar_lea.vmem %s6, %s678
        %p680 = pneg %p224
        %p681 = pneg %p221
        %s682 = sand.u32 %s35, 1
        %s683 = scalar_lea.sflag [#allocation10], %s682
        %s684 = sand.u32 %s237, 1
        %s685 = smul.addr %s684, 256
        %s686 = scalar_lea.vmem [#allocation11], %s685
        %p687 = pneg %p250
        %p688 = pneg %p247
        %p689 = scmp.lt.s32.totalorder %s40, 1
        %s690 = scalar_select %p689, %s40, 1
        %s691 = smul.addr %s690, 4
        %s692 = scalar_lea.vmem %s8, %s691
        %p693 = pneg %p276
        %p694 = pneg %p273
        %s695 = sand.u32 %s289, 1
        %s696 = scalar_lea.sflag [#allocation13], %s695
        %s697 = sand.u32 %s289, 1
        %s698 = smul.addr %s697, 256
        %s699 = scalar_lea.vmem [#allocation12], %s698
        %p700 = pneg %p302
        %p701 = pneg %p299
        %p702 = scmp.lt.s32.totalorder %s40, 1
        %s703 = scalar_select %p702, %s40, 1
        %s704 = scalar_lea.vmem %s10, %s703
        %p705 = pneg %p328
        %p706 = pneg %p325
        %p707 = scmp.lt.s32.totalorder %s40, 1
        %s708 = scalar_select %p707, %s40, 1
        %s709 = scalar_lea.vmem %s11, %s708
        %p710 = pneg %p354
        %p711 = pneg %p351
        %p712 = scmp.lt.s32.totalorder %s40, 1
        %s713 = scalar_select %p712, %s40, 1
        %s714 = scalar_lea.vmem %s12, %s713
        %p715 = pneg %p380
        %p716 = pneg %p377
        %p717 = pneg %p406
        %p718 = pneg %p403
        %s719 = smul.u32 2, %s39
        %p720 = scmp.lt.s32.totalorder %s40, 1
        %s721 = scalar_select %p720, %s40, 1
        %s722 = scalar_lea.vmem %s4, %s721
        %p723 = scmp.lt.s32.totalorder %s40, 1
        %s724 = scalar_select %p723, %s40, 1
        %s725 = scalar_lea.vmem %s5, %s724
        %p726 = scmp.lt.s32.totalorder %s40, 1
        %s727 = scalar_select %p726, %s40, 1
        %s728 = scalar_lea.vmem %s6, %s727
        %p729 = scmp.lt.s32.totalorder %s40, 1
        %s730 = scalar_select %p729, %s40, 1
        %s731 = smul.addr %s730, 4
        %s732 = scalar_lea.vmem %s8, %s731
        %p733 = scmp.lt.s32.totalorder %s40, 1
        %s734 = scalar_select %p733, %s40, 1
        %s735 = scalar_lea.vmem %s10, %s734
        %p736 = scmp.lt.s32.totalorder %s40, 1
        %s737 = scalar_select %p736, %s40, 1
        %s738 = scalar_lea.vmem %s11, %s737
        %p739 = scmp.lt.s32.totalorder %s40, 1
        %s740 = scalar_select %p739, %s40, 1
        %s741 = scalar_lea.vmem %s12, %s740
        %s742 = smul.u32 2, %s39
        %p748 = scmp.eq.s32.totalorder %s40, 0
        // Predicated region
        $region97: #{tpu_custom_call.1} parent=71 // pred_check
          %p749 = pneg %p748
        $region98: #{tpu_custom_call.1} parent=71 // pred_check_branch
          %751 = sbr.rel (%p749) target = $region100
        $region99: #{tpu_custom_call.1} parent=71 // pred_region
          %v752 = vld [vmem:[#allocation3] sm:$0xff]
          %v753 = vld [vmem:[#allocation3 + $0x8] sm:$0xff]
          %v754 = vld [vmem:[#allocation3 + $0x10] sm:$0xff]
          %v755 = vld [vmem:[#allocation3 + $0x18] sm:$0xff]
          %756 = vst [vmem:[#allocation14] sm:$0xff] %v752
          %757 = vst [vmem:[#allocation14 + $0x8] sm:$0xff] %v753
          %758 = vst [vmem:[#allocation14 + $0x10] sm:$0xff] %v754
          %759 = vst [vmem:[#allocation14 + $0x18] sm:$0xff] %v755
        $region100: #{tpu_custom_call.1} parent=71 // pred_fallthru
          _
        %v760 = vld [vmem:[#allocation14] sm:$0xff]
        %v761 = vld [vmem:[#allocation14 + $0x8] sm:$0xff]
        %v762 = vld [vmem:[#allocation14 + $0x10] sm:$0xff]
        %v763 = vld [vmem:[#allocation14 + $0x18] sm:$0xff]
        %v764 = vpack.c.bf16 %v761, %v760
        %v765 = vpack.c.bf16 %v763, %v762
        %v766 = vld [vmem:[%s603] sm:$0xff]
        %v767 = vld [vmem:[%s603 + $0x8] sm:$0xf]
        %v768 = vld [vmem:[%s603 + $0xc] sm:$0xff]
        %v769 = vld [vmem:[%s603 + $0x14] sm:$0xf]
        %v770 = vld [vmem:[%s603 + $0x18] sm:$0xff]
        %v771 = vld [vmem:[%s603 + $0x20] sm:$0xf]
        %v772 = vld [vmem:[%s603 + $0x24] sm:$0xff]
        %v773 = vld [vmem:[%s603 + $0x2c] sm:$0xf]
        %v774 = vld [vmem:[%s603 + $0x30] sm:$0xff]
        %v775 = vld [vmem:[%s603 + $0x38] sm:$0xf]
        %v776 = vld [vmem:[%s603 + $0x3c] sm:$0xff]
        %v777 = vld [vmem:[%s603 + $0x44] sm:$0xf]
        %v778 = vld [vmem:[%s603 + $0x48] sm:$0xff]
        %v779 = vld [vmem:[%s603 + $0x50] sm:$0xf]
        %v780 = vld [vmem:[%s603 + $0x54] sm:$0xff]
        %v781 = vld [vmem:[%s603 + $0x5c] sm:$0xf]
        %v782 = vld [vmem:[%s603 + $0x60] sm:$0xff]
        %v783 = vld [vmem:[%s603 + $0x68] sm:$0xf]
        %v784 = vld [vmem:[%s603 + $0x6c] sm:$0xff]
        %v785 = vld [vmem:[%s603 + $0x74] sm:$0xf]
        %v786 = vld [vmem:[%s603 + $0x78] sm:$0xff]
        %v787 = vld [vmem:[%s603 + $0x80] sm:$0xf]
        %v788 = vld [vmem:[%s603 + $0x84] sm:$0xff]
        %v789 = vld [vmem:[%s603 + $0x8c] sm:$0xf]
        %v790 = vld [vmem:[%s603 + $0x90] sm:$0xff]
        %v791 = vld [vmem:[%s603 + $0x98] sm:$0xf]
        %v792 = vld [vmem:[%s603 + $0x9c] sm:$0xff]
        %v793 = vld [vmem:[%s603 + $0xa4] sm:$0xf]
        %v794 = vld [vmem:[%s603 + $0xa8] sm:$0xff]
        %v795 = vld [vmem:[%s603 + $0xb0] sm:$0xf]
        %v796 = vld [vmem:[%s603 + $0xb4] sm:$0xff]
        %v797 = vld [vmem:[%s603 + $0xbc] sm:$0xf]
        %v798 = vld [vmem:[%s612] sm:$0x7]
        %v800 = vlaneseq
        %v801 = vshrl.u32 %v800, 7
        %v802 = vsub.s32 0, %v801
        %v803 = vrot.slane %v798, %v802
        %v804 = vlaneseq
        %v805 = vshrl.u32 %v804, 7
        %v806 = vsub.s32 1, %v805
        %v807 = vrot.slane %v798, %v806
        %v808 = vlaneseq
        %v809 = vshrl.u32 %v808, 7
        %v810 = vsub.s32 2, %v809
        %v811 = vrot.slane %v798, %v810
        %v847 = vunpack.c.l.b16 %v766
        %v848 = vunpack.c.h.b16 %v766
        %v849 = vunpack.c.l.b16 %v767
        %v850 = vunpack.c.l.b16 %v768
        %v851 = vunpack.c.h.b16 %v768
        %v852 = vunpack.c.l.b16 %v769
        %v853 = vunpack.c.l.b16 %v770
        %v854 = vunpack.c.h.b16 %v770
        %v855 = vunpack.c.l.b16 %v771
        %v856 = vunpack.c.l.b16 %v772
        %v857 = vunpack.c.h.b16 %v772
        %v858 = vunpack.c.l.b16 %v773
        %v859 = vunpack.c.l.b16 %v774
        %v860 = vunpack.c.h.b16 %v774
        %v861 = vunpack.c.l.b16 %v775
        %v862 = vunpack.c.l.b16 %v776
        %v863 = vunpack.c.h.b16 %v776
        %v864 = vunpack.c.l.b16 %v777
        %v865 = vunpack.c.l.b16 %v778
        %v866 = vunpack.c.h.b16 %v778
        %v867 = vunpack.c.l.b16 %v779
        %v868 = vunpack.c.l.b16 %v780
        %v869 = vunpack.c.h.b16 %v780
        %v870 = vunpack.c.l.b16 %v781
        %v871 = vunpack.c.l.b16 %v782
        %v872 = vunpack.c.h.b16 %v782
        %v873 = vunpack.c.l.b16 %v783
        %v874 = vunpack.c.l.b16 %v784
        %v875 = vunpack.c.h.b16 %v784
        %v876 = vunpack.c.l.b16 %v785
        %v877 = vunpack.c.l.b16 %v786
        %v878 = vunpack.c.h.b16 %v786
        %v879 = vunpack.c.l.b16 %v787
        %v880 = vunpack.c.l.b16 %v788
        %v881 = vunpack.c.h.b16 %v788
        %v882 = vunpack.c.l.b16 %v789
        %v883 = vunpack.c.l.b16 %v790
        %v884 = vunpack.c.h.b16 %v790
        %v885 = vunpack.c.l.b16 %v791
        %v886 = vunpack.c.l.b16 %v792
        %v887 = vunpack.c.h.b16 %v792
        %v888 = vunpack.c.l.b16 %v793
        %v889 = vunpack.c.l.b16 %v794
        %v890 = vunpack.c.h.b16 %v794
        %v891 = vunpack.c.l.b16 %v795
        %v892 = vunpack.c.l.b16 %v796
        %v893 = vunpack.c.h.b16 %v796
        %v894 = vunpack.c.l.b16 %v797
        %v895 = vpack.c.b16 %v850, %v847
        %v896 = vpack.c.b16 %v851, %v848
        %v897 = vpack.c.b16 %v852, %v849
        %v898 = vpack.c.b16 %v856, %v853
        %v899 = vpack.c.b16 %v857, %v854
        %v900 = vpack.c.b16 %v858, %v855
        %v901 = vpack.c.b16 %v862, %v859
        %v902 = vpack.c.b16 %v863, %v860
        %v903 = vpack.c.b16 %v864, %v861
        %v904 = vpack.c.b16 %v868, %v865
        %v905 = vpack.c.b16 %v869, %v866
        %v906 = vpack.c.b16 %v870, %v867
        %v907 = vpack.c.b16 %v874, %v871
        %v908 = vpack.c.b16 %v875, %v872
        %v909 = vpack.c.b16 %v876, %v873
        %v910 = vpack.c.b16 %v880, %v877
        %v911 = vpack.c.b16 %v881, %v878
        %v912 = vpack.c.b16 %v882, %v879
        %v913 = vpack.c.b16 %v886, %v883
        %v914 = vpack.c.b16 %v887, %v884
        %v915 = vpack.c.b16 %v888, %v885
        %v916 = vpack.c.b16 %v892, %v889
        %v917 = vpack.c.b16 %v893, %v890
        %v918 = vpack.c.b16 %v894, %v891
        %943 = vmatprep.subr.bf16.mxu0 %v917
        %944 = vmatpush1.bf16.msra.mxu0 %v916
        %945 = vmatprep.subr.bf16.mxu0 %v914
        %946 = vmatpush1.bf16.msra.mxu0 %v913
        %947 = vmatprep.subr.bf16.mxu0 %v911
        %948 = vmatpush1.bf16.msra.mxu0 %v910
        %949 = vmatprep.subr.bf16.mxu0 %v908
        %950 = vmatpush1.bf16.msra.mxu0 %v907
        %951 = vmatprep.subr.bf16.mxu0 %v905
        %952 = vmatpush1.bf16.msra.mxu0 %v904
        %953 = vmatprep.subr.bf16.mxu0 %v902
        %954 = vmatpush1.bf16.msra.mxu0 %v901
        %955 = vmatprep.subr.bf16.mxu0 %v899
        %956 = vmatpush1.bf16.msra.mxu0 %v898
        %957 = vmatprep.subr.bf16.mxu0 %v896
        %958 = vmatpush1.bf16.msra.mxu0 %v895
        %959 = vmatprep.subr.bf16.mxu0 0
        %960 = vmatpush2.bf16.msra.mxu0 0
        %961 = vmatprep.subr.bf16.mxu0 0
        %962 = vmatpush2.bf16.msra.mxu0 0
        %963 = vmatprep.subr.bf16.mxu0 0
        %964 = vmatpush2.bf16.msra.mxu0 0
        %965 = vmatprep.subr.bf16.mxu0 0
        %966 = vmatpush2.bf16.msra.mxu0 0
        %967 = vmatprep.subr.bf16.mxu0 0
        %968 = vmatpush2.bf16.msra.mxu0 0
        %969 = vmatprep.subr.bf16.mxu0 0
        %970 = vmatpush2.bf16.msra.mxu0 0
        %971 = vmatprep.subr.bf16.mxu0 0
        %972 = vmatpush2.bf16.msra.mxu0 0
        %973 = vmatprep.subr.bf16.mxu0 0
        %974 = vmatpush2.bf16.msra.mxu0 0
        %975 = vmatprep.mubr.bf16.mxu0 0
        %976 = vmatmul.mubr.bf16.gmra.mxu0 %v764
        %v977 = vpop.f32.mrf.mxu0
        %v978 = vadd.f32 %v803, %v977
        %v979 = vpop.f32.mrf.mxu0
        %v980 = vadd.f32 %v807, %v979
        %v981 = vpop.f32.mrf.mxu0
        %v982 = vadd.f32 %v803, %v981
        %v983 = vpop.f32.mrf.mxu0
        %v984 = vadd.f32 %v807, %v983
        %985 = vmatprep.mubr.bf16.mxu0 0
        %986 = vmatmul.mubr.bf16.gmra.mxu0 %v765
        %v987 = vpop.f32.mrf.mxu0
        %v988 = vadd.f32 %v803, %v987
        %v989 = vpop.f32.mrf.mxu0
        %v990 = vadd.f32 %v807, %v989
        %v991 = vpop.f32.mrf.mxu0
        %v992 = vadd.f32 %v803, %v991
        %v993 = vpop.f32.mrf.mxu0
        %v994 = vadd.f32 %v807, %v993
        %995 = vdwg.mxu0
        %996 = vmatprep.subr.bf16.mxu0 0
        %997 = vmatpush1.bf16.msra.mxu0 %v918
        %998 = vmatprep.subr.bf16.mxu0 0
        %999 = vmatpush1.bf16.msra.mxu0 %v915
        %1000 = vmatprep.subr.bf16.mxu0 0
        %1001 = vmatpush1.bf16.msra.mxu0 %v912
        %1002 = vmatprep.subr.bf16.mxu0 0
        %1003 = vmatpush1.bf16.msra.mxu0 %v909
        %1004 = vmatprep.subr.bf16.mxu0 0
        %1005 = vmatpush1.bf16.msra.mxu0 %v906
        %1006 = vmatprep.subr.bf16.mxu0 0
        %1007 = vmatpush1.bf16.msra.mxu0 %v903
        %1008 = vmatprep.subr.bf16.mxu0 0
        %1009 = vmatpush1.bf16.msra.mxu0 %v900
        %1010 = vmatprep.subr.bf16.mxu0 0
        %1011 = vmatpush1.bf16.msra.mxu0 %v897
        %1012 = vmatprep.subr.bf16.mxu0 0
        %1013 = vmatpush2.bf16.msra.mxu0 0
        %1014 = vmatprep.subr.bf16.mxu0 0
        %1015 = vmatpush2.bf16.msra.mxu0 0
        %1016 = vmatprep.subr.bf16.mxu0 0
        %1017 = vmatpush2.bf16.msra.mxu0 0
        %1018 = vmatprep.subr.bf16.mxu0 0
        %1019 = vmatpush2.bf16.msra.mxu0 0
        %1020 = vmatprep.subr.bf16.mxu0 0
        %1021 = vmatpush2.bf16.msra.mxu0 0
        %1022 = vmatprep.subr.bf16.mxu0 0
        %1023 = vmatpush2.bf16.msra.mxu0 0
        %1024 = vmatprep.subr.bf16.mxu0 0
        %1025 = vmatpush2.bf16.msra.mxu0 0
        %1026 = vmatprep.subr.bf16.mxu0 0
        %1027 = vmatpush2.bf16.msra.mxu0 0
        %1028 = vmatprep.mubr.bf16.mxu0 0
        %1029 = vmatmul.mubr.bf16.gmra.mxu0 %v764
        %v1030 = vpop.f32.mrf.mxu0
        %v1031 = vadd.f32 %v811, %v1030
        %v1032 = vpop.f32.mrf.mxu0
        %v1033 = vpop.f32.mrf.mxu0
        %v1034 = vadd.f32 %v811, %v1033
        %v1035 = vpop.f32.mrf.mxu0
        %1036 = vmatprep.mubr.bf16.mxu0 0
        %1037 = vmatmul.mubr.bf16.gmra.mxu0 %v765
        %v1038 = vpop.f32.mrf.mxu0
        %v1039 = vadd.f32 %v811, %v1038
        %v1040 = vpop.f32.mrf.mxu0
        %v1041 = vpop.f32.mrf.mxu0
        %v1042 = vadd.f32 %v811, %v1041
        %v1043 = vpop.f32.mrf.mxu0
        %1044 = vdwg.mxu0
        %v1045 = vlaneseq
        %v1046 = vshrl.u32 %v1045, 7
        %v1047 = vadd.s32 %v1046, 8
        %v1048 = vlaneseq
        %v1049 = vand.u32 %v1048, 127
        %vm1050 = vcmp.le.s32.totalorder %v1049, %v1046
        %vm1051 = vcmp.le.s32.totalorder %v1049, %v1047
        %v1052 = vpack.c.bf16 %v982, %v978
        %v1053 = vpack.c.bf16 %v984, %v980
        %v1054 = vpack.c.bf16 %v1034, %v1031
        %vm1055 = vcmask 261120
        %v1057 = vsel %vm1055, %v1052, 0
        %v1060 = vsel %vm1055, %v1053, 0
        %1062 = vmatprep.subr.bf16.mxu0 0
        %1063 = vmatpush1.bf16.xpose.msra.mxu0 0
        %1064 = vmatprep.subr.bf16.mxu0 0
        %1065 = vmatpush1.bf16.xpose.msra.mxu0 0
        %1066 = vmatprep.subr.bf16.mxu0 0
        %1067 = vmatpush1.bf16.xpose.msra.mxu0 0
        %1068 = vmatprep.subr.bf16.mxu0 0
        %1069 = vmatpush1.bf16.xpose.msra.mxu0 0
        %1070 = vmatprep.subr.bf16.mxu0 0
        %1071 = vmatpush1.bf16.xpose.msra.mxu0 0
        %1072 = vmatprep.subr.bf16.mxu0 0
        %1073 = vmatpush1.bf16.xpose.msra.mxu0 0
        %1074 = vmatprep.subr.bf16.mxu0 0
        %1075 = vmatpush1.bf16.xpose.msra.mxu0 0
        %1076 = vmatprep.subr.bf16.mxu0 0
        %1077 = vmatpush1.bf16.xpose.msra.mxu0 %v1060
        %1078 = vmatprep.subr.bf16.mxu0 0
        %1079 = vmatpush2.bf16.xpose.msra.mxu0 0
        %1080 = vmatprep.subr.bf16.mxu0 0
        %1081 = vmatpush2.bf16.xpose.msra.mxu0 0
        %1082 = vmatprep.subr.bf16.mxu0 0
        %1083 = vmatpush2.bf16.xpose.msra.mxu0 0
        %1084 = vmatprep.subr.bf16.mxu0 0
        %1085 = vmatpush2.bf16.xpose.msra.mxu0 0
        %1086 = vmatprep.subr.bf16.mxu0 0
        %1087 = vmatpush2.bf16.xpose.msra.mxu0 0
        %1088 = vmatprep.subr.bf16.mxu0 0
        %1089 = vmatpush2.bf16.xpose.msra.mxu0 0
        %1090 = vmatprep.subr.bf16.mxu0 0
        %1091 = vmatpush2.bf16.xpose.msra.mxu0 0
        %1092 = vmatprep.subr.bf16.mxu0 0
        %1093 = vmatpush2.bf16.xpose.msra.mxu0 0
        %1094 = vmatprep.mubr.bf16.mxu0 0
        %1095 = vmatmul.mubr.bf16.gmra.mxu0 %v1057
        %v1096 = vpop.f32.mrf.mxu0
        %v1097 = vadd.f32 0.0, %v1096
        %v1098 = vpop.f32.mrf.mxu0
        %v1099 = vpop.f32.mrf.mxu0
        %v1100 = vadd.f32 0.0, %v1099
        %v1101 = vpop.f32.mrf.mxu0
        %1102 = vdwg.mxu0
        %v1103 = vmul.f32 %v1097, 0.17677669
        %v1104 = vmul.f32 %v1100, 0.17677669
        %v1105 = vsel %vm1050, %v1103, -1e+09
        %v1106 = vsel %vm1051, %v1104, -1e+09
        %vm1107 = vcmask 130048
        %v1108 = vsel %vm1107, %v1105, -inf
        %1109 = vmax.xlane.f32.xlu0 %v1108
        %v1110 = vpop.xlane.xlu0 %1109
        %v1111 = vsel %vm1107, %v1106, -inf
        %1112 = vmax.xlane.f32.xlu0 %v1111
        %v1113 = vpop.xlane.xlu0 %1112
        %v1114 = vsub.f32 %v1105, %v1110
        %v1115 = vsub.f32 %v1106, %v1113
        %v1116 = vmul.f32 %v1114, 1.442695
        %v1117 = vpow.pop %v1116
        %v1118 = vmul.f32 %v1115, 1.442695
        %v1119 = vpow.pop %v1118
        %v1120 = vsel %vm1107, %v1117, 0.0
        %1121 = vadd.xlane.f32.xlu0 %v1120
        %v1122 = vpop.xlane.xlu0 %1121
        %v1123 = vsel %vm1107, %v1119, 0.0
        %1124 = vadd.xlane.f32.xlu0 %v1123
        %v1125 = vpop.xlane.xlu0 %1124
        %v1126 = vrcp.pop %v1122
        %v1127 = vrcp.pop %v1125
        %v1128 = vmul.f32 %v1117, %v1126
        %v1129 = vmul.f32 %v1119, %v1127
        %v1130 = vpack.c.bf16 %v1129, %v1128
        %v1132 = vsel %vm1107, %v1130, 0
        %1134 = vmatprep.subr.bf16.mxu0 0
        %1135 = vmatpush1.bf16.msra.mxu0 0
        %1136 = vmatprep.subr.bf16.mxu0 0
        %1137 = vmatpush1.bf16.msra.mxu0 0
        %1138 = vmatprep.subr.bf16.mxu0 0
        %1139 = vmatpush1.bf16.msra.mxu0 0
        %1140 = vmatprep.subr.bf16.mxu0 0
        %1141 = vmatpush1.bf16.msra.mxu0 0
        %1142 = vmatprep.subr.bf16.mxu0 0
        %1143 = vmatpush1.bf16.msra.mxu0 0
        %1144 = vmatprep.subr.bf16.mxu0 0
        %1145 = vmatpush1.bf16.msra.mxu0 0
        %1146 = vmatprep.subr.bf16.mxu0 0
        %1147 = vmatpush1.bf16.msra.mxu0 0
        %1148 = vmatprep.subr.bf16.mxu0 0
        %1149 = vmatpush1.bf16.msra.mxu0 %v1054
        %1150 = vmatprep.subr.bf16.mxu0 0
        %1151 = vmatpush2.bf16.msra.mxu0 0
        %1152 = vmatprep.subr.bf16.mxu0 0
        %1153 = vmatpush2.bf16.msra.mxu0 0
        %1154 = vmatprep.subr.bf16.mxu0 0
        %1155 = vmatpush2.bf16.msra.mxu0 0
        %1156 = vmatprep.subr.bf16.mxu0 0
        %1157 = vmatpush2.bf16.msra.mxu0 0
        %1158 = vmatprep.subr.bf16.mxu0 0
        %1159 = vmatpush2.bf16.msra.mxu0 0
        %1160 = vmatprep.subr.bf16.mxu0 0
        %1161 = vmatpush2.bf16.msra.mxu0 0
        %1162 = vmatprep.subr.bf16.mxu0 0
        %1163 = vmatpush2.bf16.msra.mxu0 0
        %1164 = vmatprep.subr.bf16.mxu0 0
        %1165 = vmatpush2.bf16.msra.mxu0 0
        %1166 = vmatprep.mubr.bf16.mxu0 0
        %1167 = vmatmul.mubr.bf16.gmra.mxu0 %v1132
        %v1168 = vpop.f32.mrf.mxu0
        %v1169 = vadd.f32 0.0, %v1168
        %v1170 = vpop.f32.mrf.mxu0
        %v1171 = vpop.f32.mrf.mxu0
        %v1172 = vadd.f32 0.0, %v1171
        %v1173 = vpop.f32.mrf.mxu0
        %1174 = vdwg.mxu0
        %v1175 = vpack.c.bf16 %v1172, %v1169
        %v1177 = vunpack.c.l.b16 %v1175
        %v1178 = vunpack.c.h.b16 %v1175
        %v1179 = vpack.c.b16 %v1177, %v1177
        %v1180 = vpack.c.b16 %v1178, %v1178
        %vm1183 = vcmask 257024
        %1184 = vst.msk [vmem:[#allocation2] sm:$0xf] %vm1183, %v1179
        %1185 = vst.msk [vmem:[#allocation2 + $0x4] sm:$0xf] %vm1183, %v1180
        %1187 = vrot.lane.b32.xlu0 %v1052, 96
        %v1188 = vpop.permute.xlu0 %1187
        %1190 = vrot.lane.b32.xlu0 %v1053, 96
        %v1191 = vpop.permute.xlu0 %1190
        %v1193 = vsel %vm1055, %v1188, 0
        %v1196 = vsel %vm1055, %v1191, 0
        %1198 = vmatprep.subr.bf16.mxu0 0
        %1199 = vmatpush1.bf16.xpose.msra.mxu0 0
        %1200 = vmatprep.subr.bf16.mxu0 0
        %1201 = vmatpush1.bf16.xpose.msra.mxu0 0
        %1202 = vmatprep.subr.bf16.mxu0 0
        %1203 = vmatpush1.bf16.xpose.msra.mxu0 0
        %1204 = vmatprep.subr.bf16.mxu0 0
        %1205 = vmatpush1.bf16.xpose.msra.mxu0 0
        %1206 = vmatprep.subr.bf16.mxu0 0
        %1207 = vmatpush1.bf16.xpose.msra.mxu0 0
        %1208 = vmatprep.subr.bf16.mxu0 0
        %1209 = vmatpush1.bf16.xpose.msra.mxu0 0
        %1210 = vmatprep.subr.bf16.mxu0 0
        %1211 = vmatpush1.bf16.xpose.msra.mxu0 0
        %1212 = vmatprep.subr.bf16.mxu0 0
        %1213 = vmatpush1.bf16.xpose.msra.mxu0 %v1196
        %1214 = vmatprep.subr.bf16.mxu0 0
        %1215 = vmatpush2.bf16.xpose.msra.mxu0 0
        %1216 = vmatprep.subr.bf16.mxu0 0
        %1217 = vmatpush2.bf16.xpose.msra.mxu0 0
        %1218 = vmatprep.subr.bf16.mxu0 0
        %1219 = vmatpush2.bf16.xpose.msra.mxu0 0
        %1220 = vmatprep.subr.bf16.mxu0 0
        %1221 = vmatpush2.bf16.xpose.msra.mxu0 0
        %1222 = vmatprep.subr.bf16.mxu0 0
        %1223 = vmatpush2.bf16.xpose.msra.mxu0 0
        %1224 = vmatprep.subr.bf16.mxu0 0
        %1225 = vmatpush2.bf16.xpose.msra.mxu0 0
        %1226 = vmatprep.subr.bf16.mxu0 0
        %1227 = vmatpush2.bf16.xpose.msra.mxu0 0
        %1228 = vmatprep.subr.bf16.mxu0 0
        %1229 = vmatpush2.bf16.xpose.msra.mxu0 0
        %1230 = vmatprep.mubr.bf16.mxu0 0
        %1231 = vmatmul.mubr.bf16.gmra.mxu0 %v1193
        %v1232 = vpop.f32.mrf.mxu0
        %v1233 = vadd.f32 0.0, %v1232
        %v1234 = vpop.f32.mrf.mxu0
        %v1235 = vpop.f32.mrf.mxu0
        %v1236 = vadd.f32 0.0, %v1235
        %v1237 = vpop.f32.mrf.mxu0
        %1238 = vdwg.mxu0
        %v1239 = vmul.f32 %v1233, 0.17677669
        %v1240 = vmul.f32 %v1236, 0.17677669
        %v1241 = vsel %vm1050, %v1239, -1e+09
        %v1242 = vsel %vm1051, %v1240, -1e+09
        %v1243 = vsel %vm1107, %v1241, -inf
        %1244 = vmax.xlane.f32.xlu0 %v1243
        %v1245 = vpop.xlane.xlu0 %1244
        %v1246 = vsel %vm1107, %v1242, -inf
        %1247 = vmax.xlane.f32.xlu0 %v1246
        %v1248 = vpop.xlane.xlu0 %1247
        %v1249 = vsub.f32 %v1241, %v1245
        %v1250 = vsub.f32 %v1242, %v1248
        %v1251 = vmul.f32 %v1249, 1.442695
        %v1252 = vpow.pop %v1251
        %v1253 = vmul.f32 %v1250, 1.442695
        %v1254 = vpow.pop %v1253
        %v1255 = vsel %vm1107, %v1252, 0.0
        %1256 = vadd.xlane.f32.xlu0 %v1255
        %v1257 = vpop.xlane.xlu0 %1256
        %v1258 = vsel %vm1107, %v1254, 0.0
        %1259 = vadd.xlane.f32.xlu0 %v1258
        %v1260 = vpop.xlane.xlu0 %1259
        %v1261 = vrcp.pop %v1257
        %v1262 = vrcp.pop %v1260
        %v1263 = vmul.f32 %v1252, %v1261
        %v1264 = vmul.f32 %v1254, %v1262
        %v1265 = vpack.c.bf16 %v1264, %v1263
        %1267 = vrot.lane.b32.xlu0 %v1054, 96
        %v1268 = vpop.permute.xlu0 %1267
        %v1271 = vsel %vm1107, %v1265, 0
        %1273 = vmatprep.subr.bf16.mxu0 0
        %1274 = vmatpush1.bf16.msra.mxu0 0
        %1275 = vmatprep.subr.bf16.mxu0 0
        %1276 = vmatpush1.bf16.msra.mxu0 0
        %1277 = vmatprep.subr.bf16.mxu0 0
        %1278 = vmatpush1.bf16.msra.mxu0 0
        %1279 = vmatprep.subr.bf16.mxu0 0
        %1280 = vmatpush1.bf16.msra.mxu0 0
        %1281 = vmatprep.subr.bf16.mxu0 0
        %1282 = vmatpush1.bf16.msra.mxu0 0
        %1283 = vmatprep.subr.bf16.mxu0 0
        %1284 = vmatpush1.bf16.msra.mxu0 0
        %1285 = vmatprep.subr.bf16.mxu0 0
        %1286 = vmatpush1.bf16.msra.mxu0 0
        %1287 = vmatprep.subr.bf16.mxu0 0
        %1288 = vmatpush1.bf16.msra.mxu0 %v1268
        %1289 = vmatprep.subr.bf16.mxu0 0
        %1290 = vmatpush2.bf16.msra.mxu0 0
        %1291 = vmatprep.subr.bf16.mxu0 0
        %1292 = vmatpush2.bf16.msra.mxu0 0
        %1293 = vmatprep.subr.bf16.mxu0 0
        %1294 = vmatpush2.bf16.msra.mxu0 0
        %1295 = vmatprep.subr.bf16.mxu0 0
        %1296 = vmatpush2.bf16.msra.mxu0 0
        %1297 = vmatprep.subr.bf16.mxu0 0
        %1298 = vmatpush2.bf16.msra.mxu0 0
        %1299 = vmatprep.subr.bf16.mxu0 0
        %1300 = vmatpush2.bf16.msra.mxu0 0
        %1301 = vmatprep.subr.bf16.mxu0 0
        %1302 = vmatpush2.bf16.msra.mxu0 0
        %1303 = vmatprep.subr.bf16.mxu0 0
        %1304 = vmatpush2.bf16.msra.mxu0 0
        %1305 = vmatprep.mubr.bf16.mxu0 0
        %1306 = vmatmul.mubr.bf16.gmra.mxu0 %v1271
        %v1307 = vpop.f32.mrf.mxu0
        %v1308 = vadd.f32 0.0, %v1307
        %v1309 = vpop.f32.mrf.mxu0
        %v1310 = vpop.f32.mrf.mxu0
        %v1311 = vadd.f32 0.0, %v1310
        %v1312 = vpop.f32.mrf.mxu0
        %1313 = vdwg.mxu0
        %v1314 = vpack.c.bf16 %v1311, %v1308
        %v1316 = vunpack.c.l.b16 %v1314
        %v1317 = vunpack.c.h.b16 %v1314
        %v1318 = vpack.c.b16 %v1316, %v1316
        %v1319 = vpack.c.b16 %v1317, %v1317
        %1320 = vrot.lane.b32.xlu0 %v1318, 32
        %v1321 = vpop.permute.xlu0 %1320
        %1322 = vrot.lane.b32.xlu0 %v1319, 32
        %v1323 = vpop.permute.xlu0 %1322
        %vm1326 = vcmask 519424
        %1327 = vst.msk [vmem:[#allocation2] sm:$0xf] %vm1326, %v1321
        %1328 = vst.msk [vmem:[#allocation2 + $0x4] sm:$0xf] %vm1326, %v1323
        %1329 = vrot.lane.b32.xlu0 %v1052, 64
        %v1330 = vpop.permute.xlu0 %1329
        %1331 = vrot.lane.b32.xlu0 %v1053, 64
        %v1332 = vpop.permute.xlu0 %1331
        %v1334 = vsel %vm1055, %v1330, 0
        %v1337 = vsel %vm1055, %v1332, 0
        %1339 = vmatprep.subr.bf16.mxu0 0
        %1340 = vmatpush1.bf16.xpose.msra.mxu0 0
        %1341 = vmatprep.subr.bf16.mxu0 0
        %1342 = vmatpush1.bf16.xpose.msra.mxu0 0
        %1343 = vmatprep.subr.bf16.mxu0 0
        %1344 = vmatpush1.bf16.xpose.msra.mxu0 0
        %1345 = vmatprep.subr.bf16.mxu0 0
        %1346 = vmatpush1.bf16.xpose.msra.mxu0 0
        %1347 = vmatprep.subr.bf16.mxu0 0
        %1348 = vmatpush1.bf16.xpose.msra.mxu0 0
        %1349 = vmatprep.subr.bf16.mxu0 0
        %1350 = vmatpush1.bf16.xpose.msra.mxu0 0
        %1351 = vmatprep.subr.bf16.mxu0 0
        %1352 = vmatpush1.bf16.xpose.msra.mxu0 0
        %1353 = vmatprep.subr.bf16.mxu0 0
        %1354 = vmatpush1.bf16.xpose.msra.mxu0 %v1337
        %1355 = vmatprep.subr.bf16.mxu0 0
        %1356 = vmatpush2.bf16.xpose.msra.mxu0 0
        %1357 = vmatprep.subr.bf16.mxu0 0
        %1358 = vmatpush2.bf16.xpose.msra.mxu0 0
        %1359 = vmatprep.subr.bf16.mxu0 0
        %1360 = vmatpush2.bf16.xpose.msra.mxu0 0
        %1361 = vmatprep.subr.bf16.mxu0 0
        %1362 = vmatpush2.bf16.xpose.msra.mxu0 0
        %1363 = vmatprep.subr.bf16.mxu0 0
        %1364 = vmatpush2.bf16.xpose.msra.mxu0 0
        %1365 = vmatprep.subr.bf16.mxu0 0
        %1366 = vmatpush2.bf16.xpose.msra.mxu0 0
        %1367 = vmatprep.subr.bf16.mxu0 0
        %1368 = vmatpush2.bf16.xpose.msra.mxu0 0
        %1369 = vmatprep.subr.bf16.mxu0 0
        %1370 = vmatpush2.bf16.xpose.msra.mxu0 0
        %1371 = vmatprep.mubr.bf16.mxu0 0
        %1372 = vmatmul.mubr.bf16.gmra.mxu0 %v1334
        %v1373 = vpop.f32.mrf.mxu0
        %v1374 = vadd.f32 0.0, %v1373
        %v1375 = vpop.f32.mrf.mxu0
        %v1376 = vpop.f32.mrf.mxu0
        %v1377 = vadd.f32 0.0, %v1376
        %v1378 = vpop.f32.mrf.mxu0
        %1379 = vdwg.mxu0
        %v1380 = vmul.f32 %v1374, 0.17677669
        %v1381 = vmul.f32 %v1377, 0.17677669
        %v1382 = vsel %vm1050, %v1380, -1e+09
        %v1383 = vsel %vm1051, %v1381, -1e+09
        %v1384 = vsel %vm1107, %v1382, -inf
        %1385 = vmax.xlane.f32.xlu0 %v1384
        %v1386 = vpop.xlane.xlu0 %1385
        %v1387 = vsel %vm1107, %v1383, -inf
        %1388 = vmax.xlane.f32.xlu0 %v1387
        %v1389 = vpop.xlane.xlu0 %1388
        %v1390 = vsub.f32 %v1382, %v1386
        %v1391 = vsub.f32 %v1383, %v1389
        %v1392 = vmul.f32 %v1390, 1.442695
        %v1393 = vpow.pop %v1392
        %v1394 = vmul.f32 %v1391, 1.442695
        %v1395 = vpow.pop %v1394
        %v1396 = vsel %vm1107, %v1393, 0.0
        %1397 = vadd.xlane.f32.xlu0 %v1396
        %v1398 = vpop.xlane.xlu0 %1397
        %v1399 = vsel %vm1107, %v1395, 0.0
        %1400 = vadd.xlane.f32.xlu0 %v1399
        %v1401 = vpop.xlane.xlu0 %1400
        %v1402 = vrcp.pop %v1398
        %v1403 = vrcp.pop %v1401
        %v1404 = vmul.f32 %v1393, %v1402
        %v1405 = vmul.f32 %v1395, %v1403
        %v1406 = vpack.c.bf16 %v1405, %v1404
        %1407 = vrot.lane.b32.xlu0 %v1054, 64
        %v1408 = vpop.permute.xlu0 %1407
        %v1411 = vsel %vm1107, %v1406, 0
        %1413 = vmatprep.subr.bf16.mxu0 0
        %1414 = vmatpush1.bf16.msra.mxu0 0
        %1415 = vmatprep.subr.bf16.mxu0 0
        %1416 = vmatpush1.bf16.msra.mxu0 0
        %1417 = vmatprep.subr.bf16.mxu0 0
        %1418 = vmatpush1.bf16.msra.mxu0 0
        %1419 = vmatprep.subr.bf16.mxu0 0
        %1420 = vmatpush1.bf16.msra.mxu0 0
        %1421 = vmatprep.subr.bf16.mxu0 0
        %1422 = vmatpush1.bf16.msra.mxu0 0
        %1423 = vmatprep.subr.bf16.mxu0 0
        %1424 = vmatpush1.bf16.msra.mxu0 0
        %1425 = vmatprep.subr.bf16.mxu0 0
        %1426 = vmatpush1.bf16.msra.mxu0 0
        %1427 = vmatprep.subr.bf16.mxu0 0
        %1428 = vmatpush1.bf16.msra.mxu0 %v1408
        %1429 = vmatprep.subr.bf16.mxu0 0
        %1430 = vmatpush2.bf16.msra.mxu0 0
        %1431 = vmatprep.subr.bf16.mxu0 0
        %1432 = vmatpush2.bf16.msra.mxu0 0
        %1433 = vmatprep.subr.bf16.mxu0 0
        %1434 = vmatpush2.bf16.msra.mxu0 0
        %1435 = vmatprep.subr.bf16.mxu0 0
        %1436 = vmatpush2.bf16.msra.mxu0 0
        %1437 = vmatprep.subr.bf16.mxu0 0
        %1438 = vmatpush2.bf16.msra.mxu0 0
        %1439 = vmatprep.subr.bf16.mxu0 0
        %1440 = vmatpush2.bf16.msra.mxu0 0
        %1441 = vmatprep.subr.bf16.mxu0 0
        %1442 = vmatpush2.bf16.msra.mxu0 0
        %1443 = vmatprep.subr.bf16.mxu0 0
        %1444 = vmatpush2.bf16.msra.mxu0 0
        %1445 = vmatprep.mubr.bf16.mxu0 0
        %1446 = vmatmul.mubr.bf16.gmra.mxu0 %v1411
        %v1447 = vpop.f32.mrf.mxu0
        %v1448 = vadd.f32 0.0, %v1447
        %v1449 = vpop.f32.mrf.mxu0
        %v1450 = vpop.f32.mrf.mxu0
        %v1451 = vadd.f32 0.0, %v1450
        %v1452 = vpop.f32.mrf.mxu0
        %1453 = vdwg.mxu0
        %v1454 = vpack.c.bf16 %v1451, %v1448
        %v1456 = vunpack.c.l.b16 %v1454
        %v1457 = vunpack.c.h.b16 %v1454
        %v1458 = vpack.c.b16 %v1456, %v1456
        %v1459 = vpack.c.b16 %v1457, %v1457
        %1460 = vrot.lane.b32.xlu0 %v1458, 64
        %v1461 = vpop.permute.xlu0 %1460
        %1462 = vrot.lane.b32.xlu0 %v1459, 64
        %v1463 = vpop.permute.xlu0 %1462
        %vm1466 = vcmask 781824
        %1467 = vst.msk [vmem:[#allocation2] sm:$0xf] %vm1466, %v1461
        %1468 = vst.msk [vmem:[#allocation2 + $0x4] sm:$0xf] %vm1466, %v1463
        %1469 = vrot.lane.b32.xlu0 %v1052, 32
        %v1470 = vpop.permute.xlu0 %1469
        %1471 = vrot.lane.b32.xlu0 %v1053, 32
        %v1472 = vpop.permute.xlu0 %1471
        %v1474 = vsel %vm1055, %v1470, 0
        %v1477 = vsel %vm1055, %v1472, 0
        %1479 = vmatprep.subr.bf16.mxu0 0
        %1480 = vmatpush1.bf16.xpose.msra.mxu0 0
        %1481 = vmatprep.subr.bf16.mxu0 0
        %1482 = vmatpush1.bf16.xpose.msra.mxu0 0
        %1483 = vmatprep.subr.bf16.mxu0 0
        %1484 = vmatpush1.bf16.xpose.msra.mxu0 0
        %1485 = vmatprep.subr.bf16.mxu0 0
        %1486 = vmatpush1.bf16.xpose.msra.mxu0 0
        %1487 = vmatprep.subr.bf16.mxu0 0
        %1488 = vmatpush1.bf16.xpose.msra.mxu0 0
        %1489 = vmatprep.subr.bf16.mxu0 0
        %1490 = vmatpush1.bf16.xpose.msra.mxu0 0
        %1491 = vmatprep.subr.bf16.mxu0 0
        %1492 = vmatpush1.bf16.xpose.msra.mxu0 0
        %1493 = vmatprep.subr.bf16.mxu0 0
        %1494 = vmatpush1.bf16.xpose.msra.mxu0 %v1477
        %1495 = vmatprep.subr.bf16.mxu0 0
        %1496 = vmatpush2.bf16.xpose.msra.mxu0 0
        %1497 = vmatprep.subr.bf16.mxu0 0
        %1498 = vmatpush2.bf16.xpose.msra.mxu0 0
        %1499 = vmatprep.subr.bf16.mxu0 0
        %1500 = vmatpush2.bf16.xpose.msra.mxu0 0
        %1501 = vmatprep.subr.bf16.mxu0 0
        %1502 = vmatpush2.bf16.xpose.msra.mxu0 0
        %1503 = vmatprep.subr.bf16.mxu0 0
        %1504 = vmatpush2.bf16.xpose.msra.mxu0 0
        %1505 = vmatprep.subr.bf16.mxu0 0
        %1506 = vmatpush2.bf16.xpose.msra.mxu0 0
        %1507 = vmatprep.subr.bf16.mxu0 0
        %1508 = vmatpush2.bf16.xpose.msra.mxu0 0
        %1509 = vmatprep.subr.bf16.mxu0 0
        %1510 = vmatpush2.bf16.xpose.msra.mxu0 0
        %1511 = vmatprep.mubr.bf16.mxu0 0
        %1512 = vmatmul.mubr.bf16.gmra.mxu0 %v1474
        %v1513 = vpop.f32.mrf.mxu0
        %v1514 = vadd.f32 0.0, %v1513
        %v1515 = vpop.f32.mrf.mxu0
        %v1516 = vpop.f32.mrf.mxu0
        %v1517 = vadd.f32 0.0, %v1516
        %v1518 = vpop.f32.mrf.mxu0
        %1519 = vdwg.mxu0
        %v1520 = vmul.f32 %v1514, 0.17677669
        %v1521 = vmul.f32 %v1517, 0.17677669
        %v1522 = vsel %vm1050, %v1520, -1e+09
        %v1523 = vsel %vm1051, %v1521, -1e+09
        %v1524 = vsel %vm1107, %v1522, -inf
        %1525 = vmax.xlane.f32.xlu0 %v1524
        %v1526 = vpop.xlane.xlu0 %1525
        %v1527 = vsel %vm1107, %v1523, -inf
        %1528 = vmax.xlane.f32.xlu0 %v1527
        %v1529 = vpop.xlane.xlu0 %1528
        %v1530 = vsub.f32 %v1522, %v1526
        %v1531 = vsub.f32 %v1523, %v1529
        %v1532 = vmul.f32 %v1530, 1.442695
        %v1533 = vpow.pop %v1532
        %v1534 = vmul.f32 %v1531, 1.442695
        %v1535 = vpow.pop %v1534
        %v1536 = vsel %vm1107, %v1533, 0.0
        %1537 = vadd.xlane.f32.xlu0 %v1536
        %v1538 = vpop.xlane.xlu0 %1537
        %v1539 = vsel %vm1107, %v1535, 0.0
        %1540 = vadd.xlane.f32.xlu0 %v1539
        %v1541 = vpop.xlane.xlu0 %1540
        %v1542 = vrcp.pop %v1538
        %v1543 = vrcp.pop %v1541
        %v1544 = vmul.f32 %v1533, %v1542
        %v1545 = vmul.f32 %v1535, %v1543
        %v1546 = vpack.c.bf16 %v1545, %v1544
        %1547 = vrot.lane.b32.xlu0 %v1054, 32
        %v1548 = vpop.permute.xlu0 %1547
        %v1551 = vsel %vm1107, %v1546, 0
        %1553 = vmatprep.subr.bf16.mxu0 0
        %1554 = vmatpush1.bf16.msra.mxu0 0
        %1555 = vmatprep.subr.bf16.mxu0 0
        %1556 = vmatpush1.bf16.msra.mxu0 0
        %1557 = vmatprep.subr.bf16.mxu0 0
        %1558 = vmatpush1.bf16.msra.mxu0 0
        %1559 = vmatprep.subr.bf16.mxu0 0
        %1560 = vmatpush1.bf16.msra.mxu0 0
        %1561 = vmatprep.subr.bf16.mxu0 0
        %1562 = vmatpush1.bf16.msra.mxu0 0
        %1563 = vmatprep.subr.bf16.mxu0 0
        %1564 = vmatpush1.bf16.msra.mxu0 0
        %1565 = vmatprep.subr.bf16.mxu0 0
        %1566 = vmatpush1.bf16.msra.mxu0 0
        %1567 = vmatprep.subr.bf16.mxu0 0
        %1568 = vmatpush1.bf16.msra.mxu0 %v1548
        %1569 = vmatprep.subr.bf16.mxu0 0
        %1570 = vmatpush2.bf16.msra.mxu0 0
        %1571 = vmatprep.subr.bf16.mxu0 0
        %1572 = vmatpush2.bf16.msra.mxu0 0
        %1573 = vmatprep.subr.bf16.mxu0 0
        %1574 = vmatpush2.bf16.msra.mxu0 0
        %1575 = vmatprep.subr.bf16.mxu0 0
        %1576 = vmatpush2.bf16.msra.mxu0 0
        %1577 = vmatprep.subr.bf16.mxu0 0
        %1578 = vmatpush2.bf16.msra.mxu0 0
        %1579 = vmatprep.subr.bf16.mxu0 0
        %1580 = vmatpush2.bf16.msra.mxu0 0
        %1581 = vmatprep.subr.bf16.mxu0 0
        %1582 = vmatpush2.bf16.msra.mxu0 0
        %1583 = vmatprep.subr.bf16.mxu0 0
        %1584 = vmatpush2.bf16.msra.mxu0 0
        %1585 = vmatprep.mubr.bf16.mxu0 0
        %1586 = vmatmul.mubr.bf16.gmra.mxu0 %v1551
        %v1587 = vpop.f32.mrf.mxu0
        %v1588 = vadd.f32 0.0, %v1587
        %v1589 = vpop.f32.mrf.mxu0
        %v1590 = vpop.f32.mrf.mxu0
        %v1591 = vadd.f32 0.0, %v1590
        %v1592 = vpop.f32.mrf.mxu0
        %1593 = vdwg.mxu0
        %v1594 = vpack.c.bf16 %v1591, %v1588
        %v1596 = vunpack.c.l.b16 %v1594
        %v1597 = vunpack.c.h.b16 %v1594
        %v1598 = vpack.c.b16 %v1596, %v1596
        %v1599 = vpack.c.b16 %v1597, %v1597
        %1600 = vrot.lane.b32.xlu0 %v1598, 96
        %v1601 = vpop.permute.xlu0 %1600
        %1602 = vrot.lane.b32.xlu0 %v1599, 96
        %v1603 = vpop.permute.xlu0 %1602
        %vm1606 = vcmask 1044224
        %1607 = vst.msk [vmem:[#allocation2] sm:$0xf] %vm1606, %v1601
        %1608 = vst.msk [vmem:[#allocation2 + $0x4] sm:$0xf] %vm1606, %v1603
        %v1609 = vpack.c.bf16 %v992, %v988
        %v1610 = vpack.c.bf16 %v994, %v990
        %v1611 = vpack.c.bf16 %v1042, %v1039
        %v1613 = vsel %vm1055, %v1609, 0
        %v1616 = vsel %vm1055, %v1610, 0
        %1618 = vmatprep.subr.bf16.mxu0 0
        %1619 = vmatpush1.bf16.xpose.msra.mxu0 0
        %1620 = vmatprep.subr.bf16.mxu0 0
        %1621 = vmatpush1.bf16.xpose.msra.mxu0 0
        %1622 = vmatprep.subr.bf16.mxu0 0
        %1623 = vmatpush1.bf16.xpose.msra.mxu0 0
        %1624 = vmatprep.subr.bf16.mxu0 0
        %1625 = vmatpush1.bf16.xpose.msra.mxu0 0
        %1626 = vmatprep.subr.bf16.mxu0 0
        %1627 = vmatpush1.bf16.xpose.msra.mxu0 0
        %1628 = vmatprep.subr.bf16.mxu0 0
        %1629 = vmatpush1.bf16.xpose.msra.mxu0 0
        %1630 = vmatprep.subr.bf16.mxu0 0
        %1631 = vmatpush1.bf16.xpose.msra.mxu0 0
        %1632 = vmatprep.subr.bf16.mxu0 0
        %1633 = vmatpush1.bf16.xpose.msra.mxu0 %v1616
        %1634 = vmatprep.subr.bf16.mxu0 0
        %1635 = vmatpush2.bf16.xpose.msra.mxu0 0
        %1636 = vmatprep.subr.bf16.mxu0 0
        %1637 = vmatpush2.bf16.xpose.msra.mxu0 0
        %1638 = vmatprep.subr.bf16.mxu0 0
        %1639 = vmatpush2.bf16.xpose.msra.mxu0 0
        %1640 = vmatprep.subr.bf16.mxu0 0
        %1641 = vmatpush2.bf16.xpose.msra.mxu0 0
        %1642 = vmatprep.subr.bf16.mxu0 0
        %1643 = vmatpush2.bf16.xpose.msra.mxu0 0
        %1644 = vmatprep.subr.bf16.mxu0 0
        %1645 = vmatpush2.bf16.xpose.msra.mxu0 0
        %1646 = vmatprep.subr.bf16.mxu0 0
        %1647 = vmatpush2.bf16.xpose.msra.mxu0 0
        %1648 = vmatprep.subr.bf16.mxu0 0
        %1649 = vmatpush2.bf16.xpose.msra.mxu0 0
        %1650 = vmatprep.mubr.bf16.mxu0 0
        %1651 = vmatmul.mubr.bf16.gmra.mxu0 %v1613
        %v1652 = vpop.f32.mrf.mxu0
        %v1653 = vadd.f32 0.0, %v1652
        %v1654 = vpop.f32.mrf.mxu0
        %v1655 = vpop.f32.mrf.mxu0
        %v1656 = vadd.f32 0.0, %v1655
        %v1657 = vpop.f32.mrf.mxu0
        %1658 = vdwg.mxu0
        %v1659 = vmul.f32 %v1653, 0.17677669
        %v1660 = vmul.f32 %v1656, 0.17677669
        %v1661 = vsel %vm1050, %v1659, -1e+09
        %v1662 = vsel %vm1051, %v1660, -1e+09
        %v1663 = vsel %vm1107, %v1661, -inf
        %1664 = vmax.xlane.f32.xlu0 %v1663
        %v1665 = vpop.xlane.xlu0 %1664
        %v1666 = vsel %vm1107, %v1662, -inf
        %1667 = vmax.xlane.f32.xlu0 %v1666
        %v1668 = vpop.xlane.xlu0 %1667
        %v1669 = vsub.f32 %v1661, %v1665
        %v1670 = vsub.f32 %v1662, %v1668
        %v1671 = vmul.f32 %v1669, 1.442695
        %v1672 = vpow.pop %v1671
        %v1673 = vmul.f32 %v1670, 1.442695
        %v1674 = vpow.pop %v1673
        %v1675 = vsel %vm1107, %v1672, 0.0
        %1676 = vadd.xlane.f32.xlu0 %v1675
        %v1677 = vpop.xlane.xlu0 %1676
        %v1678 = vsel %vm1107, %v1674, 0.0
        %1679 = vadd.xlane.f32.xlu0 %v1678
        %v1680 = vpop.xlane.xlu0 %1679
        %v1681 = vrcp.pop %v1677
        %v1682 = vrcp.pop %v1680
        %v1683 = vmul.f32 %v1672, %v1681
        %v1684 = vmul.f32 %v1674, %v1682
        %v1685 = vpack.c.bf16 %v1684, %v1683
        %v1687 = vsel %vm1107, %v1685, 0
        %1689 = vmatprep.subr.bf16.mxu0 0
        %1690 = vmatpush1.bf16.msra.mxu0 0
        %1691 = vmatprep.subr.bf16.mxu0 0
        %1692 = vmatpush1.bf16.msra.mxu0 0
        %1693 = vmatprep.subr.bf16.mxu0 0
        %1694 = vmatpush1.bf16.msra.mxu0 0
        %1695 = vmatprep.subr.bf16.mxu0 0
        %1696 = vmatpush1.bf16.msra.mxu0 0
        %1697 = vmatprep.subr.bf16.mxu0 0
        %1698 = vmatpush1.bf16.msra.mxu0 0
        %1699 = vmatprep.subr.bf16.mxu0 0
        %1700 = vmatpush1.bf16.msra.mxu0 0
        %1701 = vmatprep.subr.bf16.mxu0 0
        %1702 = vmatpush1.bf16.msra.mxu0 0
        %1703 = vmatprep.subr.bf16.mxu0 0
        %1704 = vmatpush1.bf16.msra.mxu0 %v1611
        %1705 = vmatprep.subr.bf16.mxu0 0
        %1706 = vmatpush2.bf16.msra.mxu0 0
        %1707 = vmatprep.subr.bf16.mxu0 0
        %1708 = vmatpush2.bf16.msra.mxu0 0
        %1709 = vmatprep.subr.bf16.mxu0 0
        %1710 = vmatpush2.bf16.msra.mxu0 0
        %1711 = vmatprep.subr.bf16.mxu0 0
        %1712 = vmatpush2.bf16.msra.mxu0 0
        %1713 = vmatprep.subr.bf16.mxu0 0
        %1714 = vmatpush2.bf16.msra.mxu0 0
        %1715 = vmatprep.subr.bf16.mxu0 0
        %1716 = vmatpush2.bf16.msra.mxu0 0
        %1717 = vmatprep.subr.bf16.mxu0 0
        %1718 = vmatpush2.bf16.msra.mxu0 0
        %1719 = vmatprep.subr.bf16.mxu0 0
        %1720 = vmatpush2.bf16.msra.mxu0 0
        %1721 = vmatprep.mubr.bf16.mxu0 0
        %1722 = vmatmul.mubr.bf16.gmra.mxu0 %v1687
        %v1723 = vpop.f32.mrf.mxu0
        %v1724 = vadd.f32 0.0, %v1723
        %v1725 = vpop.f32.mrf.mxu0
        %v1726 = vpop.f32.mrf.mxu0
        %v1727 = vadd.f32 0.0, %v1726
        %v1728 = vpop.f32.mrf.mxu0
        %1729 = vdwg.mxu0
        %v1730 = vpack.c.bf16 %v1727, %v1724
        %v1732 = vunpack.c.l.b16 %v1730
        %v1733 = vunpack.c.h.b16 %v1730
        %v1734 = vpack.c.b16 %v1732, %v1732
        %v1735 = vpack.c.b16 %v1733, %v1733
        %s1738 = scalar_lea.vmem [#allocation2], 8
        %1739 = vst.msk [vmem:[%s1738] sm:$0xf] %vm1183, %v1734
        %1740 = vst.msk [vmem:[%s1738 + $0x4] sm:$0xf] %vm1183, %v1735
        %1742 = vrot.lane.b32.xlu0 %v1609, 96
        %v1743 = vpop.permute.xlu0 %1742
        %1745 = vrot.lane.b32.xlu0 %v1610, 96
        %v1746 = vpop.permute.xlu0 %1745
        %v1748 = vsel %vm1055, %v1743, 0
        %v1751 = vsel %vm1055, %v1746, 0
        %1753 = vmatprep.subr.bf16.mxu0 0
        %1754 = vmatpush1.bf16.xpose.msra.mxu0 0
        %1755 = vmatprep.subr.bf16.mxu0 0
        %1756 = vmatpush1.bf16.xpose.msra.mxu0 0
        %1757 = vmatprep.subr.bf16.mxu0 0
        %1758 = vmatpush1.bf16.xpose.msra.mxu0 0
        %1759 = vmatprep.subr.bf16.mxu0 0
        %1760 = vmatpush1.bf16.xpose.msra.mxu0 0
        %1761 = vmatprep.subr.bf16.mxu0 0
        %1762 = vmatpush1.bf16.xpose.msra.mxu0 0
        %1763 = vmatprep.subr.bf16.mxu0 0
        %1764 = vmatpush1.bf16.xpose.msra.mxu0 0
        %1765 = vmatprep.subr.bf16.mxu0 0
        %1766 = vmatpush1.bf16.xpose.msra.mxu0 0
        %1767 = vmatprep.subr.bf16.mxu0 0
        %1768 = vmatpush1.bf16.xpose.msra.mxu0 %v1751
        %1769 = vmatprep.subr.bf16.mxu0 0
        %1770 = vmatpush2.bf16.xpose.msra.mxu0 0
        %1771 = vmatprep.subr.bf16.mxu0 0
        %1772 = vmatpush2.bf16.xpose.msra.mxu0 0
        %1773 = vmatprep.subr.bf16.mxu0 0
        %1774 = vmatpush2.bf16.xpose.msra.mxu0 0
        %1775 = vmatprep.subr.bf16.mxu0 0
        %1776 = vmatpush2.bf16.xpose.msra.mxu0 0
        %1777 = vmatprep.subr.bf16.mxu0 0
        %1778 = vmatpush2.bf16.xpose.msra.mxu0 0
        %1779 = vmatprep.subr.bf16.mxu0 0
        %1780 = vmatpush2.bf16.xpose.msra.mxu0 0
        %1781 = vmatprep.subr.bf16.mxu0 0
        %1782 = vmatpush2.bf16.xpose.msra.mxu0 0
        %1783 = vmatprep.subr.bf16.mxu0 0
        %1784 = vmatpush2.bf16.xpose.msra.mxu0 0
        %1785 = vmatprep.mubr.bf16.mxu0 0
        %1786 = vmatmul.mubr.bf16.gmra.mxu0 %v1748
        %v1787 = vpop.f32.mrf.mxu0
        %v1788 = vadd.f32 0.0, %v1787
        %v1789 = vpop.f32.mrf.mxu0
        %v1790 = vpop.f32.mrf.mxu0
        %v1791 = vadd.f32 0.0, %v1790
        %v1792 = vpop.f32.mrf.mxu0
        %1793 = vdwg.mxu0
        %v1794 = vmul.f32 %v1788, 0.17677669
        %v1795 = vmul.f32 %v1791, 0.17677669
        %v1796 = vsel %vm1050, %v1794, -1e+09
        %v1797 = vsel %vm1051, %v1795, -1e+09
        %v1798 = vsel %vm1107, %v1796, -inf
        %1799 = vmax.xlane.f32.xlu0 %v1798
        %v1800 = vpop.xlane.xlu0 %1799
        %v1801 = vsel %vm1107, %v1797, -inf
        %1802 = vmax.xlane.f32.xlu0 %v1801
        %v1803 = vpop.xlane.xlu0 %1802
        %v1804 = vsub.f32 %v1796, %v1800
        %v1805 = vsub.f32 %v1797, %v1803
        %v1806 = vmul.f32 %v1804, 1.442695
        %v1807 = vpow.pop %v1806
        %v1808 = vmul.f32 %v1805, 1.442695
        %v1809 = vpow.pop %v1808
        %v1810 = vsel %vm1107, %v1807, 0.0
        %1811 = vadd.xlane.f32.xlu0 %v1810
        %v1812 = vpop.xlane.xlu0 %1811
        %v1813 = vsel %vm1107, %v1809, 0.0
        %1814 = vadd.xlane.f32.xlu0 %v1813
        %v1815 = vpop.xlane.xlu0 %1814
        %v1816 = vrcp.pop %v1812
        %v1817 = vrcp.pop %v1815
        %v1818 = vmul.f32 %v1807, %v1816
        %v1819 = vmul.f32 %v1809, %v1817
        %v1820 = vpack.c.bf16 %v1819, %v1818
        %1822 = vrot.lane.b32.xlu0 %v1611, 96
        %v1823 = vpop.permute.xlu0 %1822
        %v1826 = vsel %vm1107, %v1820, 0
        %1828 = vmatprep.subr.bf16.mxu0 0
        %1829 = vmatpush1.bf16.msra.mxu0 0
        %1830 = vmatprep.subr.bf16.mxu0 0
        %1831 = vmatpush1.bf16.msra.mxu0 0
        %1832 = vmatprep.subr.bf16.mxu0 0
        %1833 = vmatpush1.bf16.msra.mxu0 0
        %1834 = vmatprep.subr.bf16.mxu0 0
        %1835 = vmatpush1.bf16.msra.mxu0 0
        %1836 = vmatprep.subr.bf16.mxu0 0
        %1837 = vmatpush1.bf16.msra.mxu0 0
        %1838 = vmatprep.subr.bf16.mxu0 0
        %1839 = vmatpush1.bf16.msra.mxu0 0
        %1840 = vmatprep.subr.bf16.mxu0 0
        %1841 = vmatpush1.bf16.msra.mxu0 0
        %1842 = vmatprep.subr.bf16.mxu0 0
        %1843 = vmatpush1.bf16.msra.mxu0 %v1823
        %1844 = vmatprep.subr.bf16.mxu0 0
        %1845 = vmatpush2.bf16.msra.mxu0 0
        %1846 = vmatprep.subr.bf16.mxu0 0
        %1847 = vmatpush2.bf16.msra.mxu0 0
        %1848 = vmatprep.subr.bf16.mxu0 0
        %1849 = vmatpush2.bf16.msra.mxu0 0
        %1850 = vmatprep.subr.bf16.mxu0 0
        %1851 = vmatpush2.bf16.msra.mxu0 0
        %1852 = vmatprep.subr.bf16.mxu0 0
        %1853 = vmatpush2.bf16.msra.mxu0 0
        %1854 = vmatprep.subr.bf16.mxu0 0
        %1855 = vmatpush2.bf16.msra.mxu0 0
        %1856 = vmatprep.subr.bf16.mxu0 0
        %1857 = vmatpush2.bf16.msra.mxu0 0
        %1858 = vmatprep.subr.bf16.mxu0 0
        %1859 = vmatpush2.bf16.msra.mxu0 0
        %1860 = vmatprep.mubr.bf16.mxu0 0
        %1861 = vmatmul.mubr.bf16.gmra.mxu0 %v1826
        %v1862 = vpop.f32.mrf.mxu0
        %v1863 = vadd.f32 0.0, %v1862
        %v1864 = vpop.f32.mrf.mxu0
        %v1865 = vpop.f32.mrf.mxu0
        %v1866 = vadd.f32 0.0, %v1865
        %v1867 = vpop.f32.mrf.mxu0
        %1868 = vdwg.mxu0
        %v1869 = vpack.c.bf16 %v1866, %v1863
        %v1871 = vunpack.c.l.b16 %v1869
        %v1872 = vunpack.c.h.b16 %v1869
        %v1873 = vpack.c.b16 %v1871, %v1871
        %v1874 = vpack.c.b16 %v1872, %v1872
        %1875 = vrot.lane.b32.xlu0 %v1873, 32
        %v1876 = vpop.permute.xlu0 %1875
        %1877 = vrot.lane.b32.xlu0 %v1874, 32
        %v1878 = vpop.permute.xlu0 %1877
        %1881 = vst.msk [vmem:[%s1738] sm:$0xf] %vm1326, %v1876
        %1882 = vst.msk [vmem:[%s1738 + $0x4] sm:$0xf] %vm1326, %v1878
        %1883 = vrot.lane.b32.xlu0 %v1609, 64
        %v1884 = vpop.permute.xlu0 %1883
        %1885 = vrot.lane.b32.xlu0 %v1610, 64
        %v1886 = vpop.permute.xlu0 %1885
        %v1888 = vsel %vm1055, %v1884, 0
        %v1891 = vsel %vm1055, %v1886, 0
        %1893 = vmatprep.subr.bf16.mxu0 0
        %1894 = vmatpush1.bf16.xpose.msra.mxu0 0
        %1895 = vmatprep.subr.bf16.mxu0 0
        %1896 = vmatpush1.bf16.xpose.msra.mxu0 0
        %1897 = vmatprep.subr.bf16.mxu0 0
        %1898 = vmatpush1.bf16.xpose.msra.mxu0 0
        %1899 = vmatprep.subr.bf16.mxu0 0
        %1900 = vmatpush1.bf16.xpose.msra.mxu0 0
        %1901 = vmatprep.subr.bf16.mxu0 0
        %1902 = vmatpush1.bf16.xpose.msra.mxu0 0
        %1903 = vmatprep.subr.bf16.mxu0 0
        %1904 = vmatpush1.bf16.xpose.msra.mxu0 0
        %1905 = vmatprep.subr.bf16.mxu0 0
        %1906 = vmatpush1.bf16.xpose.msra.mxu0 0
        %1907 = vmatprep.subr.bf16.mxu0 0
        %1908 = vmatpush1.bf16.xpose.msra.mxu0 %v1891
        %1909 = vmatprep.subr.bf16.mxu0 0
        %1910 = vmatpush2.bf16.xpose.msra.mxu0 0
        %1911 = vmatprep.subr.bf16.mxu0 0
        %1912 = vmatpush2.bf16.xpose.msra.mxu0 0
        %1913 = vmatprep.subr.bf16.mxu0 0
        %1914 = vmatpush2.bf16.xpose.msra.mxu0 0
        %1915 = vmatprep.subr.bf16.mxu0 0
        %1916 = vmatpush2.bf16.xpose.msra.mxu0 0
        %1917 = vmatprep.subr.bf16.mxu0 0
        %1918 = vmatpush2.bf16.xpose.msra.mxu0 0
        %1919 = vmatprep.subr.bf16.mxu0 0
        %1920 = vmatpush2.bf16.xpose.msra.mxu0 0
        %1921 = vmatprep.subr.bf16.mxu0 0
        %1922 = vmatpush2.bf16.xpose.msra.mxu0 0
        %1923 = vmatprep.subr.bf16.mxu0 0
        %1924 = vmatpush2.bf16.xpose.msra.mxu0 0
        %1925 = vmatprep.mubr.bf16.mxu0 0
        %1926 = vmatmul.mubr.bf16.gmra.mxu0 %v1888
        %v1927 = vpop.f32.mrf.mxu0
        %v1928 = vadd.f32 0.0, %v1927
        %v1929 = vpop.f32.mrf.mxu0
        %v1930 = vpop.f32.mrf.mxu0
        %v1931 = vadd.f32 0.0, %v1930
        %v1932 = vpop.f32.mrf.mxu0
        %1933 = vdwg.mxu0
        %v1934 = vmul.f32 %v1928, 0.17677669
        %v1935 = vmul.f32 %v1931, 0.17677669
        %v1936 = vsel %vm1050, %v1934, -1e+09
        %v1937 = vsel %vm1051, %v1935, -1e+09
        %v1938 = vsel %vm1107, %v1936, -inf
        %1939 = vmax.xlane.f32.xlu0 %v1938
        %v1940 = vpop.xlane.xlu0 %1939
        %v1941 = vsel %vm1107, %v1937, -inf
        %1942 = vmax.xlane.f32.xlu0 %v1941
        %v1943 = vpop.xlane.xlu0 %1942
        %v1944 = vsub.f32 %v1936, %v1940
        %v1945 = vsub.f32 %v1937, %v1943
        %v1946 = vmul.f32 %v1944, 1.442695
        %v1947 = vpow.pop %v1946
        %v1948 = vmul.f32 %v1945, 1.442695
        %v1949 = vpow.pop %v1948
        %v1950 = vsel %vm1107, %v1947, 0.0
        %1951 = vadd.xlane.f32.xlu0 %v1950
        %v1952 = vpop.xlane.xlu0 %1951
        %v1953 = vsel %vm1107, %v1949, 0.0
        %1954 = vadd.xlane.f32.xlu0 %v1953
        %v1955 = vpop.xlane.xlu0 %1954
        %v1956 = vrcp.pop %v1952
        %v1957 = vrcp.pop %v1955
        %v1958 = vmul.f32 %v1947, %v1956
        %v1959 = vmul.f32 %v1949, %v1957
        %v1960 = vpack.c.bf16 %v1959, %v1958
        %1961 = vrot.lane.b32.xlu0 %v1611, 64
        %v1962 = vpop.permute.xlu0 %1961
        %v1965 = vsel %vm1107, %v1960, 0
        %1967 = vmatprep.subr.bf16.mxu0 0
        %1968 = vmatpush1.bf16.msra.mxu0 0
        %1969 = vmatprep.subr.bf16.mxu0 0
        %1970 = vmatpush1.bf16.msra.mxu0 0
        %1971 = vmatprep.subr.bf16.mxu0 0
        %1972 = vmatpush1.bf16.msra.mxu0 0
        %1973 = vmatprep.subr.bf16.mxu0 0
        %1974 = vmatpush1.bf16.msra.mxu0 0
        %1975 = vmatprep.subr.bf16.mxu0 0
        %1976 = vmatpush1.bf16.msra.mxu0 0
        %1977 = vmatprep.subr.bf16.mxu0 0
        %1978 = vmatpush1.bf16.msra.mxu0 0
        %1979 = vmatprep.subr.bf16.mxu0 0
        %1980 = vmatpush1.bf16.msra.mxu0 0
        %1981 = vmatprep.subr.bf16.mxu0 0
        %1982 = vmatpush1.bf16.msra.mxu0 %v1962
        %1983 = vmatprep.subr.bf16.mxu0 0
        %1984 = vmatpush2.bf16.msra.mxu0 0
        %1985 = vmatprep.subr.bf16.mxu0 0
        %1986 = vmatpush2.bf16.msra.mxu0 0
        %1987 = vmatprep.subr.bf16.mxu0 0
        %1988 = vmatpush2.bf16.msra.mxu0 0
        %1989 = vmatprep.subr.bf16.mxu0 0
        %1990 = vmatpush2.bf16.msra.mxu0 0
        %1991 = vmatprep.subr.bf16.mxu0 0
        %1992 = vmatpush2.bf16.msra.mxu0 0
        %1993 = vmatprep.subr.bf16.mxu0 0
        %1994 = vmatpush2.bf16.msra.mxu0 0
        %1995 = vmatprep.subr.bf16.mxu0 0
        %1996 = vmatpush2.bf16.msra.mxu0 0
        %1997 = vmatprep.subr.bf16.mxu0 0
        %1998 = vmatpush2.bf16.msra.mxu0 0
        %1999 = vmatprep.mubr.bf16.mxu0 0
        %2000 = vmatmul.mubr.bf16.gmra.mxu0 %v1965
        %v2001 = vpop.f32.mrf.mxu0
        %v2002 = vadd.f32 0.0, %v2001
        %v2003 = vpop.f32.mrf.mxu0
        %v2004 = vpop.f32.mrf.mxu0
        %v2005 = vadd.f32 0.0, %v2004
        %v2006 = vpop.f32.mrf.mxu0
        %2007 = vdwg.mxu0
        %v2008 = vpack.c.bf16 %v2005, %v2002
        %v2010 = vunpack.c.l.b16 %v2008
        %v2011 = vunpack.c.h.b16 %v2008
        %v2012 = vpack.c.b16 %v2010, %v2010
        %v2013 = vpack.c.b16 %v2011, %v2011
        %2014 = vrot.lane.b32.xlu0 %v2012, 64
        %v2015 = vpop.permute.xlu0 %2014
        %2016 = vrot.lane.b32.xlu0 %v2013, 64
        %v2017 = vpop.permute.xlu0 %2016
        %2020 = vst.msk [vmem:[%s1738] sm:$0xf] %vm1466, %v2015
        %2021 = vst.msk [vmem:[%s1738 + $0x4] sm:$0xf] %vm1466, %v2017
        %2022 = vrot.lane.b32.xlu0 %v1609, 32
        %v2023 = vpop.permute.xlu0 %2022
        %2024 = vrot.lane.b32.xlu0 %v1610, 32
        %v2025 = vpop.permute.xlu0 %2024
        %v2027 = vsel %vm1055, %v2023, 0
        %v2030 = vsel %vm1055, %v2025, 0
        %2032 = vmatprep.subr.bf16.mxu0 0
        %2033 = vmatpush1.bf16.xpose.msra.mxu0 0
        %2034 = vmatprep.subr.bf16.mxu0 0
        %2035 = vmatpush1.bf16.xpose.msra.mxu0 0
        %2036 = vmatprep.subr.bf16.mxu0 0
        %2037 = vmatpush1.bf16.xpose.msra.mxu0 0
        %2038 = vmatprep.subr.bf16.mxu0 0
        %2039 = vmatpush1.bf16.xpose.msra.mxu0 0
        %2040 = vmatprep.subr.bf16.mxu0 0
        %2041 = vmatpush1.bf16.xpose.msra.mxu0 0
        %2042 = vmatprep.subr.bf16.mxu0 0
        %2043 = vmatpush1.bf16.xpose.msra.mxu0 0
        %2044 = vmatprep.subr.bf16.mxu0 0
        %2045 = vmatpush1.bf16.xpose.msra.mxu0 0
        %2046 = vmatprep.subr.bf16.mxu0 0
        %2047 = vmatpush1.bf16.xpose.msra.mxu0 %v2030
        %2048 = vmatprep.subr.bf16.mxu0 0
        %2049 = vmatpush2.bf16.xpose.msra.mxu0 0
        %2050 = vmatprep.subr.bf16.mxu0 0
        %2051 = vmatpush2.bf16.xpose.msra.mxu0 0
        %2052 = vmatprep.subr.bf16.mxu0 0
        %2053 = vmatpush2.bf16.xpose.msra.mxu0 0
        %2054 = vmatprep.subr.bf16.mxu0 0
        %2055 = vmatpush2.bf16.xpose.msra.mxu0 0
        %2056 = vmatprep.subr.bf16.mxu0 0
        %2057 = vmatpush2.bf16.xpose.msra.mxu0 0
        %2058 = vmatprep.subr.bf16.mxu0 0
        %2059 = vmatpush2.bf16.xpose.msra.mxu0 0
        %2060 = vmatprep.subr.bf16.mxu0 0
        %2061 = vmatpush2.bf16.xpose.msra.mxu0 0
        %2062 = vmatprep.subr.bf16.mxu0 0
        %2063 = vmatpush2.bf16.xpose.msra.mxu0 0
        %2064 = vmatprep.mubr.bf16.mxu0 0
        %2065 = vmatmul.mubr.bf16.gmra.mxu0 %v2027
        %v2066 = vpop.f32.mrf.mxu0
        %v2067 = vadd.f32 0.0, %v2066
        %v2068 = vpop.f32.mrf.mxu0
        %v2069 = vpop.f32.mrf.mxu0
        %v2070 = vadd.f32 0.0, %v2069
        %v2071 = vpop.f32.mrf.mxu0
        %2072 = vdwg.mxu0
        %v2073 = vmul.f32 %v2067, 0.17677669
        %v2074 = vmul.f32 %v2070, 0.17677669
        %v2075 = vsel %vm1050, %v2073, -1e+09
        %v2076 = vsel %vm1051, %v2074, -1e+09
        %v2077 = vsel %vm1107, %v2075, -inf
        %2078 = vmax.xlane.f32.xlu0 %v2077
        %v2079 = vpop.xlane.xlu0 %2078
        %v2080 = vsel %vm1107, %v2076, -inf
        %2081 = vmax.xlane.f32.xlu0 %v2080
        %v2082 = vpop.xlane.xlu0 %2081
        %v2083 = vsub.f32 %v2075, %v2079
        %v2084 = vsub.f32 %v2076, %v2082
        %v2085 = vmul.f32 %v2083, 1.442695
        %v2086 = vpow.pop %v2085
        %v2087 = vmul.f32 %v2084, 1.442695
        %v2088 = vpow.pop %v2087
        %v2089 = vsel %vm1107, %v2086, 0.0
        %2090 = vadd.xlane.f32.xlu0 %v2089
        %v2091 = vpop.xlane.xlu0 %2090
        %v2092 = vsel %vm1107, %v2088, 0.0
        %2093 = vadd.xlane.f32.xlu0 %v2092
        %v2094 = vpop.xlane.xlu0 %2093
        %v2095 = vrcp.pop %v2091
        %v2096 = vrcp.pop %v2094
        %v2097 = vmul.f32 %v2086, %v2095
        %v2098 = vmul.f32 %v2088, %v2096
        %v2099 = vpack.c.bf16 %v2098, %v2097
        %2100 = vrot.lane.b32.xlu0 %v1611, 32
        %v2101 = vpop.permute.xlu0 %2100
        %v2104 = vsel %vm1107, %v2099, 0
        %2106 = vmatprep.subr.bf16.mxu0 0
        %2107 = vmatpush1.bf16.msra.mxu0 0
        %2108 = vmatprep.subr.bf16.mxu0 0
        %2109 = vmatpush1.bf16.msra.mxu0 0
        %2110 = vmatprep.subr.bf16.mxu0 0
        %2111 = vmatpush1.bf16.msra.mxu0 0
        %2112 = vmatprep.subr.bf16.mxu0 0
        %2113 = vmatpush1.bf16.msra.mxu0 0
        %2114 = vmatprep.subr.bf16.mxu0 0
        %2115 = vmatpush1.bf16.msra.mxu0 0
        %2116 = vmatprep.subr.bf16.mxu0 0
        %2117 = vmatpush1.bf16.msra.mxu0 0
        %2118 = vmatprep.subr.bf16.mxu0 0
        %2119 = vmatpush1.bf16.msra.mxu0 0
        %2120 = vmatprep.subr.bf16.mxu0 0
        %2121 = vmatpush1.bf16.msra.mxu0 %v2101
        %2122 = vmatprep.subr.bf16.mxu0 0
        %2123 = vmatpush2.bf16.msra.mxu0 0
        %2124 = vmatprep.subr.bf16.mxu0 0
        %2125 = vmatpush2.bf16.msra.mxu0 0
        %2126 = vmatprep.subr.bf16.mxu0 0
        %2127 = vmatpush2.bf16.msra.mxu0 0
        %2128 = vmatprep.subr.bf16.mxu0 0
        %2129 = vmatpush2.bf16.msra.mxu0 0
        %2130 = vmatprep.subr.bf16.mxu0 0
        %2131 = vmatpush2.bf16.msra.mxu0 0
        %2132 = vmatprep.subr.bf16.mxu0 0
        %2133 = vmatpush2.bf16.msra.mxu0 0
        %2134 = vmatprep.subr.bf16.mxu0 0
        %2135 = vmatpush2.bf16.msra.mxu0 0
        %2136 = vmatprep.subr.bf16.mxu0 0
        %2137 = vmatpush2.bf16.msra.mxu0 0
        %2138 = vmatprep.mubr.bf16.mxu0 0
        %2139 = vmatmul.mubr.bf16.gmra.mxu0 %v2104
        %v2140 = vpop.f32.mrf.mxu0
        %v2141 = vadd.f32 0.0, %v2140
        %v2142 = vpop.f32.mrf.mxu0
        %v2143 = vpop.f32.mrf.mxu0
        %v2144 = vadd.f32 0.0, %v2143
        %v2145 = vpop.f32.mrf.mxu0
        %2146 = vdwg.mxu0
        %v2147 = vpack.c.bf16 %v2144, %v2141
        %v2149 = vunpack.c.l.b16 %v2147
        %v2150 = vunpack.c.h.b16 %v2147
        %v2151 = vpack.c.b16 %v2149, %v2149
        %v2152 = vpack.c.b16 %v2150, %v2150
        %2153 = vrot.lane.b32.xlu0 %v2151, 96
        %v2154 = vpop.permute.xlu0 %2153
        %2155 = vrot.lane.b32.xlu0 %v2152, 96
        %v2156 = vpop.permute.xlu0 %2155
        %2159 = vst.msk [vmem:[%s1738] sm:$0xf] %vm1606, %v2154
        %2160 = vst.msk [vmem:[%s1738 + $0x4] sm:$0xf] %vm1606, %v2156
        %v2161 = vld [vmem:[#allocation2] sm:$0xf]
        %v2162 = vld [vmem:[#allocation2 + $0x4] sm:$0xf]
        %v2163 = vld [vmem:[#allocation2 + $0x8] sm:$0xf]
        %v2164 = vld [vmem:[#allocation2 + $0xc] sm:$0xf]
        %v2165 = vld [vmem:[%s621] sm:$0xf]
        %v2166 = vld [vmem:[%s621 + $0x4] sm:$0xf]
        %v2167 = vld [vmem:[%s621 + $0x8] sm:$0xf]
        %v2168 = vld [vmem:[%s621 + $0xc] sm:$0xf]
        %v2169 = vld [vmem:[%s621 + $0x10] sm:$0xf]
        %v2170 = vld [vmem:[%s621 + $0x14] sm:$0xf]
        %v2171 = vld [vmem:[%s621 + $0x18] sm:$0xf]
        %v2172 = vld [vmem:[%s621 + $0x1c] sm:$0xf]
        %v2173 = vld [vmem:[%s621 + $0x20] sm:$0xf]
        %v2174 = vld [vmem:[%s621 + $0x24] sm:$0xf]
        %v2175 = vld [vmem:[%s621 + $0x28] sm:$0xf]
        %v2176 = vld [vmem:[%s621 + $0x2c] sm:$0xf]
        %v2177 = vld [vmem:[%s621 + $0x30] sm:$0xf]
        %v2178 = vld [vmem:[%s621 + $0x34] sm:$0xf]
        %v2179 = vld [vmem:[%s621 + $0x38] sm:$0xf]
        %v2180 = vld [vmem:[%s621 + $0x3c] sm:$0xf]
        %v2181 = vld [vmem:[%s722] sm:$0x1]
        %v2183 = vlaneseq
        %v2184 = vshrl.u32 %v2183, 7
        %v2185 = vsub.s32 0, %v2184
        %v2186 = vrot.slane %v2181, %v2185
        %v2192 = vunpack.c.l.b16 %v2161
        %v2193 = vunpack.c.l.b16 %v2162
        %v2194 = vunpack.c.l.b16 %v2163
        %v2195 = vunpack.c.l.b16 %v2164
        %v2196 = vpack.c.b16 %v2193, %v2192
        %v2197 = vpack.c.b16 %v2195, %v2194
        %v2216 = vunpack.c.l.b16 %v2165
        %v2217 = vunpack.c.l.b16 %v2166
        %v2218 = vunpack.c.l.b16 %v2167
        %v2219 = vunpack.c.l.b16 %v2168
        %v2220 = vunpack.c.l.b16 %v2169
        %v2221 = vunpack.c.l.b16 %v2170
        %v2222 = vunpack.c.l.b16 %v2171
        %v2223 = vunpack.c.l.b16 %v2172
        %v2224 = vunpack.c.l.b16 %v2173
        %v2225 = vunpack.c.l.b16 %v2174
        %v2226 = vunpack.c.l.b16 %v2175
        %v2227 = vunpack.c.l.b16 %v2176
        %v2228 = vunpack.c.l.b16 %v2177
        %v2229 = vunpack.c.l.b16 %v2178
        %v2230 = vunpack.c.l.b16 %v2179
        %v2231 = vunpack.c.l.b16 %v2180
        %v2232 = vpack.c.b16 %v2217, %v2216
        %v2233 = vpack.c.b16 %v2219, %v2218
        %v2234 = vpack.c.b16 %v2221, %v2220
        %v2235 = vpack.c.b16 %v2223, %v2222
        %v2236 = vpack.c.b16 %v2225, %v2224
        %v2237 = vpack.c.b16 %v2227, %v2226
        %v2238 = vpack.c.b16 %v2229, %v2228
        %v2239 = vpack.c.b16 %v2231, %v2230
        %2248 = vmatprep.subr.bf16.mxu0 0
        %2249 = vmatpush1.bf16.msra.mxu0 %v2239
        %2250 = vmatprep.subr.bf16.mxu0 0
        %2251 = vmatpush1.bf16.msra.mxu0 %v2238
        %2252 = vmatprep.subr.bf16.mxu0 0
        %2253 = vmatpush1.bf16.msra.mxu0 %v2237
        %2254 = vmatprep.subr.bf16.mxu0 0
        %2255 = vmatpush1.bf16.msra.mxu0 %v2236
        %2256 = vmatprep.subr.bf16.mxu0 0
        %2257 = vmatpush1.bf16.msra.mxu0 %v2235
        %2258 = vmatprep.subr.bf16.mxu0 0
        %2259 = vmatpush1.bf16.msra.mxu0 %v2234
        %2260 = vmatprep.subr.bf16.mxu0 0
        %2261 = vmatpush1.bf16.msra.mxu0 %v2233
        %2262 = vmatprep.subr.bf16.mxu0 0
        %2263 = vmatpush1.bf16.msra.mxu0 %v2232
        %2264 = vmatprep.subr.bf16.mxu0 0
        %2265 = vmatpush2.bf16.msra.mxu0 0
        %2266 = vmatprep.subr.bf16.mxu0 0
        %2267 = vmatpush2.bf16.msra.mxu0 0
        %2268 = vmatprep.subr.bf16.mxu0 0
        %2269 = vmatpush2.bf16.msra.mxu0 0
        %2270 = vmatprep.subr.bf16.mxu0 0
        %2271 = vmatpush2.bf16.msra.mxu0 0
        %2272 = vmatprep.subr.bf16.mxu0 0
        %2273 = vmatpush2.bf16.msra.mxu0 0
        %2274 = vmatprep.subr.bf16.mxu0 0
        %2275 = vmatpush2.bf16.msra.mxu0 0
        %2276 = vmatprep.subr.bf16.mxu0 0
        %2277 = vmatpush2.bf16.msra.mxu0 0
        %2278 = vmatprep.subr.bf16.mxu0 0
        %2279 = vmatpush2.bf16.msra.mxu0 0
        %2280 = vmatprep.mubr.bf16.mxu0 0
        %2281 = vmatmul.mubr.bf16.gmra.mxu0 %v2196
        %v2282 = vpop.f32.mrf.mxu0
        %v2283 = vadd.f32 %v2186, %v2282
        %v2284 = vpop.f32.mrf.mxu0
        %v2285 = vpop.f32.mrf.mxu0
        %v2286 = vadd.f32 %v2186, %v2285
        %v2287 = vpop.f32.mrf.mxu0
        %2288 = vmatprep.mubr.bf16.mxu0 0
        %2289 = vmatmul.mubr.bf16.gmra.mxu0 %v2197
        %v2290 = vpop.f32.mrf.mxu0
        %v2291 = vadd.f32 %v2186, %v2290
        %v2292 = vpop.f32.mrf.mxu0
        %v2293 = vpop.f32.mrf.mxu0
        %v2294 = vadd.f32 %v2186, %v2293
        %v2295 = vpop.f32.mrf.mxu0
        %2296 = vdwg.mxu0
        %v2297 = vadd.f32 %v760, %v2283
        %v2298 = vadd.f32 %v761, %v2286
        %v2299 = vadd.f32 %v762, %v2291
        %v2300 = vadd.f32 %v763, %v2294
        %v2301 = vld [vmem:[%s725] sm:$0x1]
        %v2302 = vld [vmem:[%s728] sm:$0x1]
        %2303 = vadd.xlane.f32.xlu0 %v2297
        %v2304 = vpop.xlane.xlu0 %2303
        %2305 = vadd.xlane.f32.xlu0 %v2298
        %v2306 = vpop.xlane.xlu0 %2305
        %2307 = vadd.xlane.f32.xlu0 %v2299
        %v2308 = vpop.xlane.xlu0 %2307
        %2309 = vadd.xlane.f32.xlu0 %v2300
        %v2310 = vpop.xlane.xlu0 %2309
        %v2311 = vrcp.pop 128.0
        %v2312 = vmul.f32 %v2304, %v2311
        %v2313 = vmul.f32 %v2306, %v2311
        %v2314 = vmul.f32 %v2308, %v2311
        %v2315 = vmul.f32 %v2310, %v2311
        %v2316 = vsub.f32 %v2297, %v2312
        %v2317 = vsub.f32 %v2298, %v2313
        %v2318 = vsub.f32 %v2299, %v2314
        %v2319 = vsub.f32 %v2300, %v2315
        %v2320 = vmul.f32 %v2316, %v2316
        %v2321 = vmul.f32 %v2317, %v2317
        %v2322 = vmul.f32 %v2318, %v2318
        %v2323 = vmul.f32 %v2319, %v2319
        %2324 = vadd.xlane.f32.xlu0 %v2320
        %v2325 = vpop.xlane.xlu0 %2324
        %2326 = vadd.xlane.f32.xlu0 %v2321
        %v2327 = vpop.xlane.xlu0 %2326
        %2328 = vadd.xlane.f32.xlu0 %v2322
        %v2329 = vpop.xlane.xlu0 %2328
        %2330 = vadd.xlane.f32.xlu0 %v2323
        %v2331 = vpop.xlane.xlu0 %2330
        %v2332 = vmul.f32 %v2325, %v2311
        %v2333 = vmul.f32 %v2327, %v2311
        %v2334 = vmul.f32 %v2329, %v2311
        %v2335 = vmul.f32 %v2331, %v2311
        %v2336 = vadd.f32 %v2332, 1e-05
        %v2337 = vadd.f32 %v2333, 1e-05
        %v2338 = vadd.f32 %v2334, 1e-05
        %v2339 = vadd.f32 %v2335, 1e-05
        %v2340 = vrsqrt.pop %v2336
        %v2341 = vmul.f32 %v2336, %v2340
        %vm2342 = vcmp.eq.f32.partialorder %v2336, inf
        %v2343 = vsel %vm2342, %v2336, %v2341
        %vm2344 = vcmp.eq.f32.partialorder %v2336, 0.0
        %v2345 = vand.u32 %v2336, 2147483648
        %v2346 = vsel %vm2344, %v2345, %v2343
        %v2347 = vrsqrt.pop %v2337
        %v2348 = vmul.f32 %v2337, %v2347
        %vm2349 = vcmp.eq.f32.partialorder %v2337, inf
        %v2350 = vsel %vm2349, %v2337, %v2348
        %vm2351 = vcmp.eq.f32.partialorder %v2337, 0.0
        %v2352 = vand.u32 %v2337, 2147483648
        %v2353 = vsel %vm2351, %v2352, %v2350
        %v2354 = vrsqrt.pop %v2338
        %v2355 = vmul.f32 %v2338, %v2354
        %vm2356 = vcmp.eq.f32.partialorder %v2338, inf
        %v2357 = vsel %vm2356, %v2338, %v2355
        %vm2358 = vcmp.eq.f32.partialorder %v2338, 0.0
        %v2359 = vand.u32 %v2338, 2147483648
        %v2360 = vsel %vm2358, %v2359, %v2357
        %v2361 = vrsqrt.pop %v2339
        %v2362 = vmul.f32 %v2339, %v2361
        %vm2363 = vcmp.eq.f32.partialorder %v2339, inf
        %v2364 = vsel %vm2363, %v2339, %v2362
        %vm2365 = vcmp.eq.f32.partialorder %v2339, 0.0
        %v2366 = vand.u32 %v2339, 2147483648
        %v2367 = vsel %vm2365, %v2366, %v2364
        %v2368 = vrcp.pop %v2346
        %v2369 = vmul.f32 %v2316, %v2368
        %v2370 = vrcp.pop %v2353
        %v2371 = vmul.f32 %v2317, %v2370
        %v2372 = vrcp.pop %v2360
        %v2373 = vmul.f32 %v2318, %v2372
        %v2374 = vrcp.pop %v2367
        %v2375 = vmul.f32 %v2319, %v2374
        %v2377 = vlaneseq
        %v2378 = vshrl.u32 %v2377, 7
        %v2379 = vsub.s32 0, %v2378
        %v2380 = vrot.slane %v2301, %v2379
        %v2382 = vmul.f32 %v2380, %v2369
        %v2383 = vmul.f32 %v2380, %v2371
        %v2384 = vmul.f32 %v2380, %v2373
        %v2385 = vmul.f32 %v2380, %v2375
        %v2387 = vlaneseq
        %v2388 = vshrl.u32 %v2387, 7
        %v2389 = vsub.s32 0, %v2388
        %v2390 = vrot.slane %v2302, %v2389
        %v2392 = vadd.f32 %v2382, %v2390
        %v2393 = vadd.f32 %v2383, %v2390
        %v2394 = vadd.f32 %v2384, %v2390
        %v2395 = vadd.f32 %v2385, %v2390
        %v2396 = vpack.c.bf16 %v2393, %v2392
        %v2397 = vpack.c.bf16 %v2395, %v2394
        %v2398 = vld [vmem:[%s630] sm:$0xff]
        %v2399 = vld [vmem:[%s630 + $0x8] sm:$0xff]
        %v2400 = vld [vmem:[%s630 + $0x10] sm:$0xff]
        %v2401 = vld [vmem:[%s630 + $0x18] sm:$0xff]
        %v2402 = vld [vmem:[%s630 + $0x20] sm:$0xff]
        %v2403 = vld [vmem:[%s630 + $0x28] sm:$0xff]
        %v2404 = vld [vmem:[%s630 + $0x30] sm:$0xff]
        %v2405 = vld [vmem:[%s630 + $0x38] sm:$0xff]
        %v2406 = vld [vmem:[%s630 + $0x40] sm:$0xff]
        %v2407 = vld [vmem:[%s630 + $0x48] sm:$0xff]
        %v2408 = vld [vmem:[%s630 + $0x50] sm:$0xff]
        %v2409 = vld [vmem:[%s630 + $0x58] sm:$0xff]
        %v2410 = vld [vmem:[%s630 + $0x60] sm:$0xff]
        %v2411 = vld [vmem:[%s630 + $0x68] sm:$0xff]
        %v2412 = vld [vmem:[%s630 + $0x70] sm:$0xff]
        %v2413 = vld [vmem:[%s630 + $0x78] sm:$0xff]
        %v2414 = vld [vmem:[%s630 + $0x80] sm:$0xff]
        %v2415 = vld [vmem:[%s630 + $0x88] sm:$0xff]
        %v2416 = vld [vmem:[%s630 + $0x90] sm:$0xff]
        %v2417 = vld [vmem:[%s630 + $0x98] sm:$0xff]
        %v2418 = vld [vmem:[%s630 + $0xa0] sm:$0xff]
        %v2419 = vld [vmem:[%s630 + $0xa8] sm:$0xff]
        %v2420 = vld [vmem:[%s630 + $0xb0] sm:$0xff]
        %v2421 = vld [vmem:[%s630 + $0xb8] sm:$0xff]
        %v2422 = vld [vmem:[%s630 + $0xc0] sm:$0xff]
        %v2423 = vld [vmem:[%s630 + $0xc8] sm:$0xff]
        %v2424 = vld [vmem:[%s630 + $0xd0] sm:$0xff]
        %v2425 = vld [vmem:[%s630 + $0xd8] sm:$0xff]
        %v2426 = vld [vmem:[%s630 + $0xe0] sm:$0xff]
        %v2427 = vld [vmem:[%s630 + $0xe8] sm:$0xff]
        %v2428 = vld [vmem:[%s630 + $0xf0] sm:$0xff]
        %v2429 = vld [vmem:[%s630 + $0xf8] sm:$0xff]
        %v2430 = vld [vmem:[%s732] sm:$0xf]
        %v2432 = vlaneseq
        %v2433 = vshrl.u32 %v2432, 7
        %v2434 = vsub.s32 0, %v2433
        %v2435 = vrot.slane %v2430, %v2434
        %v2436 = vlaneseq
        %v2437 = vshrl.u32 %v2436, 7
        %v2438 = vsub.s32 1, %v2437
        %v2439 = vrot.slane %v2430, %v2438
        %v2440 = vlaneseq
        %v2441 = vshrl.u32 %v2440, 7
        %v2442 = vsub.s32 2, %v2441
        %v2443 = vrot.slane %v2430, %v2442
        %v2444 = vlaneseq
        %v2445 = vshrl.u32 %v2444, 7
        %v2446 = vsub.s32 3, %v2445
        %v2447 = vrot.slane %v2430, %v2446
        %v2484 = vunpack.c.l.b16 %v2398
        %v2485 = vunpack.c.h.b16 %v2398
        %v2486 = vunpack.c.l.b16 %v2399
        %v2487 = vunpack.c.h.b16 %v2399
        %v2488 = vunpack.c.l.b16 %v2400
        %v2489 = vunpack.c.h.b16 %v2400
        %v2490 = vunpack.c.l.b16 %v2401
        %v2491 = vunpack.c.h.b16 %v2401
        %v2492 = vunpack.c.l.b16 %v2402
        %v2493 = vunpack.c.h.b16 %v2402
        %v2494 = vunpack.c.l.b16 %v2403
        %v2495 = vunpack.c.h.b16 %v2403
        %v2496 = vunpack.c.l.b16 %v2404
        %v2497 = vunpack.c.h.b16 %v2404
        %v2498 = vunpack.c.l.b16 %v2405
        %v2499 = vunpack.c.h.b16 %v2405
        %v2500 = vunpack.c.l.b16 %v2406
        %v2501 = vunpack.c.h.b16 %v2406
        %v2502 = vunpack.c.l.b16 %v2407
        %v2503 = vunpack.c.h.b16 %v2407
        %v2504 = vunpack.c.l.b16 %v2408
        %v2505 = vunpack.c.h.b16 %v2408
        %v2506 = vunpack.c.l.b16 %v2409
        %v2507 = vunpack.c.h.b16 %v2409
        %v2508 = vunpack.c.l.b16 %v2410
        %v2509 = vunpack.c.h.b16 %v2410
        %v2510 = vunpack.c.l.b16 %v2411
        %v2511 = vunpack.c.h.b16 %v2411
        %v2512 = vunpack.c.l.b16 %v2412
        %v2513 = vunpack.c.h.b16 %v2412
        %v2514 = vunpack.c.l.b16 %v2413
        %v2515 = vunpack.c.h.b16 %v2413
        %v2516 = vunpack.c.l.b16 %v2414
        %v2517 = vunpack.c.h.b16 %v2414
        %v2518 = vunpack.c.l.b16 %v2415
        %v2519 = vunpack.c.h.b16 %v2415
        %v2520 = vunpack.c.l.b16 %v2416
        %v2521 = vunpack.c.h.b16 %v2416
        %v2522 = vunpack.c.l.b16 %v2417
        %v2523 = vunpack.c.h.b16 %v2417
        %v2524 = vunpack.c.l.b16 %v2418
        %v2525 = vunpack.c.h.b16 %v2418
        %v2526 = vunpack.c.l.b16 %v2419
        %v2527 = vunpack.c.h.b16 %v2419
        %v2528 = vunpack.c.l.b16 %v2420
        %v2529 = vunpack.c.h.b16 %v2420
        %v2530 = vunpack.c.l.b16 %v2421
        %v2531 = vunpack.c.h.b16 %v2421
        %v2532 = vunpack.c.l.b16 %v2422
        %v2533 = vunpack.c.h.b16 %v2422
        %v2534 = vunpack.c.l.b16 %v2423
        %v2535 = vunpack.c.h.b16 %v2423
        %v2536 = vunpack.c.l.b16 %v2424
        %v2537 = vunpack.c.h.b16 %v2424
        %v2538 = vunpack.c.l.b16 %v2425
        %v2539 = vunpack.c.h.b16 %v2425
        %v2540 = vunpack.c.l.b16 %v2426
        %v2541 = vunpack.c.h.b16 %v2426
        %v2542 = vunpack.c.l.b16 %v2427
        %v2543 = vunpack.c.h.b16 %v2427
        %v2544 = vunpack.c.l.b16 %v2428
        %v2545 = vunpack.c.h.b16 %v2428
        %v2546 = vunpack.c.l.b16 %v2429
        %v2547 = vunpack.c.h.b16 %v2429
        %v2548 = vpack.c.b16 %v2488, %v2484
        %v2549 = vpack.c.b16 %v2489, %v2485
        %v2550 = vpack.c.b16 %v2490, %v2486
        %v2551 = vpack.c.b16 %v2491, %v2487
        %v2552 = vpack.c.b16 %v2496, %v2492
        %v2553 = vpack.c.b16 %v2497, %v2493
        %v2554 = vpack.c.b16 %v2498, %v2494
        %v2555 = vpack.c.b16 %v2499, %v2495
        %v2556 = vpack.c.b16 %v2504, %v2500
        %v2557 = vpack.c.b16 %v2505, %v2501
        %v2558 = vpack.c.b16 %v2506, %v2502
        %v2559 = vpack.c.b16 %v2507, %v2503
        %v2560 = vpack.c.b16 %v2512, %v2508
        %v2561 = vpack.c.b16 %v2513, %v2509
        %v2562 = vpack.c.b16 %v2514, %v2510
        %v2563 = vpack.c.b16 %v2515, %v2511
        %v2564 = vpack.c.b16 %v2520, %v2516
        %v2565 = vpack.c.b16 %v2521, %v2517
        %v2566 = vpack.c.b16 %v2522, %v2518
        %v2567 = vpack.c.b16 %v2523, %v2519
        %v2568 = vpack.c.b16 %v2528, %v2524
        %v2569 = vpack.c.b16 %v2529, %v2525
        %v2570 = vpack.c.b16 %v2530, %v2526
        %v2571 = vpack.c.b16 %v2531, %v2527
        %v2572 = vpack.c.b16 %v2536, %v2532
        %v2573 = vpack.c.b16 %v2537, %v2533
        %v2574 = vpack.c.b16 %v2538, %v2534
        %v2575 = vpack.c.b16 %v2539, %v2535
        %v2576 = vpack.c.b16 %v2544, %v2540
        %v2577 = vpack.c.b16 %v2545, %v2541
        %v2578 = vpack.c.b16 %v2546, %v2542
        %v2579 = vpack.c.b16 %v2547, %v2543
        %2612 = vmatprep.subr.bf16.mxu0 %v2577
        %2613 = vmatpush1.bf16.msra.mxu0 %v2576
        %2614 = vmatprep.subr.bf16.mxu0 %v2573
        %2615 = vmatpush1.bf16.msra.mxu0 %v2572
        %2616 = vmatprep.subr.bf16.mxu0 %v2569
        %2617 = vmatpush1.bf16.msra.mxu0 %v2568
        %2618 = vmatprep.subr.bf16.mxu0 %v2565
        %2619 = vmatpush1.bf16.msra.mxu0 %v2564
        %2620 = vmatprep.subr.bf16.mxu0 %v2561
        %2621 = vmatpush1.bf16.msra.mxu0 %v2560
        %2622 = vmatprep.subr.bf16.mxu0 %v2557
        %2623 = vmatpush1.bf16.msra.mxu0 %v2556
        %2624 = vmatprep.subr.bf16.mxu0 %v2553
        %2625 = vmatpush1.bf16.msra.mxu0 %v2552
        %2626 = vmatprep.subr.bf16.mxu0 %v2549
        %2627 = vmatpush1.bf16.msra.mxu0 %v2548
        %2628 = vmatprep.subr.bf16.mxu0 0
        %2629 = vmatpush2.bf16.msra.mxu0 0
        %2630 = vmatprep.subr.bf16.mxu0 0
        %2631 = vmatpush2.bf16.msra.mxu0 0
        %2632 = vmatprep.subr.bf16.mxu0 0
        %2633 = vmatpush2.bf16.msra.mxu0 0
        %2634 = vmatprep.subr.bf16.mxu0 0
        %2635 = vmatpush2.bf16.msra.mxu0 0
        %2636 = vmatprep.subr.bf16.mxu0 0
        %2637 = vmatpush2.bf16.msra.mxu0 0
        %2638 = vmatprep.subr.bf16.mxu0 0
        %2639 = vmatpush2.bf16.msra.mxu0 0
        %2640 = vmatprep.subr.bf16.mxu0 0
        %2641 = vmatpush2.bf16.msra.mxu0 0
        %2642 = vmatprep.subr.bf16.mxu0 0
        %2643 = vmatpush2.bf16.msra.mxu0 0
        %2644 = vmatprep.mubr.bf16.mxu0 0
        %2645 = vmatmul.mubr.bf16.gmra.mxu0 %v2396
        %v2646 = vpop.f32.mrf.mxu0
        %v2647 = vadd.f32 %v2435, %v2646
        %v2648 = vpop.f32.mrf.mxu0
        %v2649 = vadd.f32 %v2439, %v2648
        %v2650 = vpop.f32.mrf.mxu0
        %v2651 = vadd.f32 %v2435, %v2650
        %v2652 = vpop.f32.mrf.mxu0
        %v2653 = vadd.f32 %v2439, %v2652
        %2654 = vmatprep.mubr.bf16.mxu0 0
        %2655 = vmatmul.mubr.bf16.gmra.mxu0 %v2397
        %v2656 = vpop.f32.mrf.mxu0
        %v2657 = vadd.f32 %v2435, %v2656
        %v2658 = vpop.f32.mrf.mxu0
        %v2659 = vadd.f32 %v2439, %v2658
        %v2660 = vpop.f32.mrf.mxu0
        %v2661 = vadd.f32 %v2435, %v2660
        %v2662 = vpop.f32.mrf.mxu0
        %v2663 = vadd.f32 %v2439, %v2662
        %2664 = vdwg.mxu0
        %2665 = vmatprep.subr.bf16.mxu0 %v2579
        %2666 = vmatpush1.bf16.msra.mxu0 %v2578
        %2667 = vmatprep.subr.bf16.mxu0 %v2575
        %2668 = vmatpush1.bf16.msra.mxu0 %v2574
        %2669 = vmatprep.subr.bf16.mxu0 %v2571
        %2670 = vmatpush1.bf16.msra.mxu0 %v2570
        %2671 = vmatprep.subr.bf16.mxu0 %v2567
        %2672 = vmatpush1.bf16.msra.mxu0 %v2566
        %2673 = vmatprep.subr.bf16.mxu0 %v2563
        %2674 = vmatpush1.bf16.msra.mxu0 %v2562
        %2675 = vmatprep.subr.bf16.mxu0 %v2559
        %2676 = vmatpush1.bf16.msra.mxu0 %v2558
        %2677 = vmatprep.subr.bf16.mxu0 %v2555
        %2678 = vmatpush1.bf16.msra.mxu0 %v2554
        %2679 = vmatprep.subr.bf16.mxu0 %v2551
        %2680 = vmatpush1.bf16.msra.mxu0 %v2550
        %2681 = vmatprep.subr.bf16.mxu0 0
        %2682 = vmatpush2.bf16.msra.mxu0 0
        %2683 = vmatprep.subr.bf16.mxu0 0
        %2684 = vmatpush2.bf16.msra.mxu0 0
        %2685 = vmatprep.subr.bf16.mxu0 0
        %2686 = vmatpush2.bf16.msra.mxu0 0
        %2687 = vmatprep.subr.bf16.mxu0 0
        %2688 = vmatpush2.bf16.msra.mxu0 0
        %2689 = vmatprep.subr.bf16.mxu0 0
        %2690 = vmatpush2.bf16.msra.mxu0 0
        %2691 = vmatprep.subr.bf16.mxu0 0
        %2692 = vmatpush2.bf16.msra.mxu0 0
        %2693 = vmatprep.subr.bf16.mxu0 0
        %2694 = vmatpush2.bf16.msra.mxu0 0
        %2695 = vmatprep.subr.bf16.mxu0 0
        %2696 = vmatpush2.bf16.msra.mxu0 0
        %2697 = vmatprep.mubr.bf16.mxu0 0
        %2698 = vmatmul.mubr.bf16.gmra.mxu0 %v2396
        %v2699 = vpop.f32.mrf.mxu0
        %v2700 = vadd.f32 %v2443, %v2699
        %v2701 = vpop.f32.mrf.mxu0
        %v2702 = vadd.f32 %v2447, %v2701
        %v2703 = vpop.f32.mrf.mxu0
        %v2704 = vadd.f32 %v2443, %v2703
        %v2705 = vpop.f32.mrf.mxu0
        %v2706 = vadd.f32 %v2447, %v2705
        %2707 = vmatprep.mubr.bf16.mxu0 0
        %2708 = vmatmul.mubr.bf16.gmra.mxu0 %v2397
        %v2709 = vpop.f32.mrf.mxu0
        %v2710 = vadd.f32 %v2443, %v2709
        %v2711 = vpop.f32.mrf.mxu0
        %v2712 = vadd.f32 %v2447, %v2711
        %v2713 = vpop.f32.mrf.mxu0
        %v2714 = vadd.f32 %v2443, %v2713
        %v2715 = vpop.f32.mrf.mxu0
        %v2716 = vadd.f32 %v2447, %v2715
        %2717 = vdwg.mxu0
        %v2718 = vpack.c.bf16 %v2651, %v2647
        %v2719 = vpack.c.bf16 %v2653, %v2649
        %v2720 = vpack.c.bf16 %v2704, %v2700
        %v2721 = vpack.c.bf16 %v2706, %v2702
        %v2722 = vpack.c.bf16 %v2661, %v2657
        %v2723 = vpack.c.bf16 %v2663, %v2659
        %v2724 = vpack.c.bf16 %v2714, %v2710
        %v2725 = vpack.c.bf16 %v2716, %v2712
        %v2726 = vmul.bf16 %v2718, %v2718
        %v2727 = vmul.bf16 %v2719, %v2719
        %v2728 = vmul.bf16 %v2720, %v2720
        %v2729 = vmul.bf16 %v2721, %v2721
        %v2730 = vmul.bf16 %v2722, %v2722
        %v2731 = vmul.bf16 %v2723, %v2723
        %v2732 = vmul.bf16 %v2724, %v2724
        %v2733 = vmul.bf16 %v2725, %v2725
        %v2734 = vmul.bf16 %v2726, %v2718
        %v2735 = vmul.bf16 %v2727, %v2719
        %v2736 = vmul.bf16 %v2728, %v2720
        %v2737 = vmul.bf16 %v2729, %v2721
        %v2738 = vmul.bf16 %v2730, %v2722
        %v2739 = vmul.bf16 %v2731, %v2723
        %v2740 = vmul.bf16 %v2732, %v2724
        %v2741 = vmul.bf16 %v2733, %v2725
        %v2742 = vmul.bf16 %v2718, 1056980736
        %v2743 = vmul.bf16 %v2719, 1056980736
        %v2744 = vmul.bf16 %v2720, 1056980736
        %v2745 = vmul.bf16 %v2721, 1056980736
        %v2746 = vmul.bf16 %v2722, 1056980736
        %v2747 = vmul.bf16 %v2723, 1056980736
        %v2748 = vmul.bf16 %v2724, 1056980736
        %v2749 = vmul.bf16 %v2725, 1056980736
        %v2750 = vmul.bf16 %v2734, 1027030327
        %v2751 = vmul.bf16 %v2735, 1027030327
        %v2752 = vmul.bf16 %v2736, 1027030327
        %v2753 = vmul.bf16 %v2737, 1027030327
        %v2754 = vmul.bf16 %v2738, 1027030327
        %v2755 = vmul.bf16 %v2739, 1027030327
        %v2756 = vmul.bf16 %v2740, 1027030327
        %v2757 = vmul.bf16 %v2741, 1027030327
        %v2758 = vadd.bf16 %v2718, %v2750
        %v2759 = vadd.bf16 %v2719, %v2751
        %v2760 = vadd.bf16 %v2720, %v2752
        %v2761 = vadd.bf16 %v2721, %v2753
        %v2762 = vadd.bf16 %v2722, %v2754
        %v2763 = vadd.bf16 %v2723, %v2755
        %v2764 = vadd.bf16 %v2724, %v2756
        %v2765 = vadd.bf16 %v2725, %v2757
        %v2766 = vmul.bf16 %v2758, 1061961548
        %v2767 = vmul.bf16 %v2759, 1061961548
        %v2768 = vmul.bf16 %v2760, 1061961548
        %v2769 = vmul.bf16 %v2761, 1061961548
        %v2770 = vmul.bf16 %v2762, 1061961548
        %v2771 = vmul.bf16 %v2763, 1061961548
        %v2772 = vmul.bf16 %v2764, 1061961548
        %v2773 = vmul.bf16 %v2765, 1061961548
        %v2774 = vtanh.bf16.pop %v2766
        %v2775 = vtanh.bf16.pop %v2767
        %v2776 = vtanh.bf16.pop %v2768
        %v2777 = vtanh.bf16.pop %v2769
        %v2778 = vtanh.bf16.pop %v2770
        %v2779 = vtanh.bf16.pop %v2771
        %v2780 = vtanh.bf16.pop %v2772
        %v2781 = vtanh.bf16.pop %v2773
        %v2782 = vadd.bf16 %v2774, 1065369472
        %v2783 = vadd.bf16 %v2775, 1065369472
        %v2784 = vadd.bf16 %v2776, 1065369472
        %v2785 = vadd.bf16 %v2777, 1065369472
        %v2786 = vadd.bf16 %v2778, 1065369472
        %v2787 = vadd.bf16 %v2779, 1065369472
        %v2788 = vadd.bf16 %v2780, 1065369472
        %v2789 = vadd.bf16 %v2781, 1065369472
        %v2790 = vmul.bf16 %v2742, %v2782
        %v2791 = vmul.bf16 %v2743, %v2783
        %v2792 = vmul.bf16 %v2744, %v2784
        %v2793 = vmul.bf16 %v2745, %v2785
        %v2794 = vmul.bf16 %v2746, %v2786
        %v2795 = vmul.bf16 %v2747, %v2787
        %v2796 = vmul.bf16 %v2748, %v2788
        %v2797 = vmul.bf16 %v2749, %v2789
        %v2798 = vld [vmem:[%s639] sm:$0xf]
        %v2799 = vld [vmem:[%s639 + $0x4] sm:$0xf]
        %v2800 = vld [vmem:[%s639 + $0x8] sm:$0xf]
        %v2801 = vld [vmem:[%s639 + $0xc] sm:$0xf]
        %v2802 = vld [vmem:[%s639 + $0x10] sm:$0xf]
        %v2803 = vld [vmem:[%s639 + $0x14] sm:$0xf]
        %v2804 = vld [vmem:[%s639 + $0x18] sm:$0xf]
        %v2805 = vld [vmem:[%s639 + $0x1c] sm:$0xf]
        %v2806 = vld [vmem:[%s639 + $0x20] sm:$0xf]
        %v2807 = vld [vmem:[%s639 + $0x24] sm:$0xf]
        %v2808 = vld [vmem:[%s639 + $0x28] sm:$0xf]
        %v2809 = vld [vmem:[%s639 + $0x2c] sm:$0xf]
        %v2810 = vld [vmem:[%s639 + $0x30] sm:$0xf]
        %v2811 = vld [vmem:[%s639 + $0x34] sm:$0xf]
        %v2812 = vld [vmem:[%s639 + $0x38] sm:$0xf]
        %v2813 = vld [vmem:[%s639 + $0x3c] sm:$0xf]
        %v2814 = vld [vmem:[%s639 + $0x40] sm:$0xf]
        %v2815 = vld [vmem:[%s639 + $0x44] sm:$0xf]
        %v2816 = vld [vmem:[%s639 + $0x48] sm:$0xf]
        %v2817 = vld [vmem:[%s639 + $0x4c] sm:$0xf]
        %v2818 = vld [vmem:[%s639 + $0x50] sm:$0xf]
        %v2819 = vld [vmem:[%s639 + $0x54] sm:$0xf]
        %v2820 = vld [vmem:[%s639 + $0x58] sm:$0xf]
        %v2821 = vld [vmem:[%s639 + $0x5c] sm:$0xf]
        %v2822 = vld [vmem:[%s639 + $0x60] sm:$0xf]
        %v2823 = vld [vmem:[%s639 + $0x64] sm:$0xf]
        %v2824 = vld [vmem:[%s639 + $0x68] sm:$0xf]
        %v2825 = vld [vmem:[%s639 + $0x6c] sm:$0xf]
        %v2826 = vld [vmem:[%s639 + $0x70] sm:$0xf]
        %v2827 = vld [vmem:[%s639 + $0x74] sm:$0xf]
        %v2828 = vld [vmem:[%s639 + $0x78] sm:$0xf]
        %v2829 = vld [vmem:[%s639 + $0x7c] sm:$0xf]
        %v2830 = vld [vmem:[%s639 + $0x80] sm:$0xf]
        %v2831 = vld [vmem:[%s639 + $0x84] sm:$0xf]
        %v2832 = vld [vmem:[%s639 + $0x88] sm:$0xf]
        %v2833 = vld [vmem:[%s639 + $0x8c] sm:$0xf]
        %v2834 = vld [vmem:[%s639 + $0x90] sm:$0xf]
        %v2835 = vld [vmem:[%s639 + $0x94] sm:$0xf]
        %v2836 = vld [vmem:[%s639 + $0x98] sm:$0xf]
        %v2837 = vld [vmem:[%s639 + $0x9c] sm:$0xf]
        %v2838 = vld [vmem:[%s639 + $0xa0] sm:$0xf]
        %v2839 = vld [vmem:[%s639 + $0xa4] sm:$0xf]
        %v2840 = vld [vmem:[%s639 + $0xa8] sm:$0xf]
        %v2841 = vld [vmem:[%s639 + $0xac] sm:$0xf]
        %v2842 = vld [vmem:[%s639 + $0xb0] sm:$0xf]
        %v2843 = vld [vmem:[%s639 + $0xb4] sm:$0xf]
        %v2844 = vld [vmem:[%s639 + $0xb8] sm:$0xf]
        %v2845 = vld [vmem:[%s639 + $0xbc] sm:$0xf]
        %v2846 = vld [vmem:[%s639 + $0xc0] sm:$0xf]
        %v2847 = vld [vmem:[%s639 + $0xc4] sm:$0xf]
        %v2848 = vld [vmem:[%s639 + $0xc8] sm:$0xf]
        %v2849 = vld [vmem:[%s639 + $0xcc] sm:$0xf]
        %v2850 = vld [vmem:[%s639 + $0xd0] sm:$0xf]
        %v2851 = vld [vmem:[%s639 + $0xd4] sm:$0xf]
        %v2852 = vld [vmem:[%s639 + $0xd8] sm:$0xf]
        %v2853 = vld [vmem:[%s639 + $0xdc] sm:$0xf]
        %v2854 = vld [vmem:[%s639 + $0xe0] sm:$0xf]
        %v2855 = vld [vmem:[%s639 + $0xe4] sm:$0xf]
        %v2856 = vld [vmem:[%s639 + $0xe8] sm:$0xf]
        %v2857 = vld [vmem:[%s639 + $0xec] sm:$0xf]
        %v2858 = vld [vmem:[%s639 + $0xf0] sm:$0xf]
        %v2859 = vld [vmem:[%s639 + $0xf4] sm:$0xf]
        %v2860 = vld [vmem:[%s639 + $0xf8] sm:$0xf]
        %v2861 = vld [vmem:[%s639 + $0xfc] sm:$0xf]
        %v2862 = vld [vmem:[%s735] sm:$0x1]
        %v2864 = vlaneseq
        %v2865 = vshrl.u32 %v2864, 7
        %v2866 = vsub.s32 0, %v2865
        %v2867 = vrot.slane %v2862, %v2866
        %v2933 = vunpack.c.l.b16 %v2798
        %v2934 = vunpack.c.l.b16 %v2799
        %v2935 = vunpack.c.l.b16 %v2800
        %v2936 = vunpack.c.l.b16 %v2801
        %v2937 = vunpack.c.l.b16 %v2802
        %v2938 = vunpack.c.l.b16 %v2803
        %v2939 = vunpack.c.l.b16 %v2804
        %v2940 = vunpack.c.l.b16 %v2805
        %v2941 = vunpack.c.l.b16 %v2806
        %v2942 = vunpack.c.l.b16 %v2807
        %v2943 = vunpack.c.l.b16 %v2808
        %v2944 = vunpack.c.l.b16 %v2809
        %v2945 = vunpack.c.l.b16 %v2810
        %v2946 = vunpack.c.l.b16 %v2811
        %v2947 = vunpack.c.l.b16 %v2812
        %v2948 = vunpack.c.l.b16 %v2813
        %v2949 = vunpack.c.l.b16 %v2814
        %v2950 = vunpack.c.l.b16 %v2815
        %v2951 = vunpack.c.l.b16 %v2816
        %v2952 = vunpack.c.l.b16 %v2817
        %v2953 = vunpack.c.l.b16 %v2818
        %v2954 = vunpack.c.l.b16 %v2819
        %v2955 = vunpack.c.l.b16 %v2820
        %v2956 = vunpack.c.l.b16 %v2821
        %v2957 = vunpack.c.l.b16 %v2822
        %v2958 = vunpack.c.l.b16 %v2823
        %v2959 = vunpack.c.l.b16 %v2824
        %v2960 = vunpack.c.l.b16 %v2825
        %v2961 = vunpack.c.l.b16 %v2826
        %v2962 = vunpack.c.l.b16 %v2827
        %v2963 = vunpack.c.l.b16 %v2828
        %v2964 = vunpack.c.l.b16 %v2829
        %v2965 = vunpack.c.l.b16 %v2830
        %v2966 = vunpack.c.l.b16 %v2831
        %v2967 = vunpack.c.l.b16 %v2832
        %v2968 = vunpack.c.l.b16 %v2833
        %v2969 = vunpack.c.l.b16 %v2834
        %v2970 = vunpack.c.l.b16 %v2835
        %v2971 = vunpack.c.l.b16 %v2836
        %v2972 = vunpack.c.l.b16 %v2837
        %v2973 = vunpack.c.l.b16 %v2838
        %v2974 = vunpack.c.l.b16 %v2839
        %v2975 = vunpack.c.l.b16 %v2840
        %v2976 = vunpack.c.l.b16 %v2841
        %v2977 = vunpack.c.l.b16 %v2842
        %v2978 = vunpack.c.l.b16 %v2843
        %v2979 = vunpack.c.l.b16 %v2844
        %v2980 = vunpack.c.l.b16 %v2845
        %v2981 = vunpack.c.l.b16 %v2846
        %v2982 = vunpack.c.l.b16 %v2847
        %v2983 = vunpack.c.l.b16 %v2848
        %v2984 = vunpack.c.l.b16 %v2849
        %v2985 = vunpack.c.l.b16 %v2850
        %v2986 = vunpack.c.l.b16 %v2851
        %v2987 = vunpack.c.l.b16 %v2852
        %v2988 = vunpack.c.l.b16 %v2853
        %v2989 = vunpack.c.l.b16 %v2854
        %v2990 = vunpack.c.l.b16 %v2855
        %v2991 = vunpack.c.l.b16 %v2856
        %v2992 = vunpack.c.l.b16 %v2857
        %v2993 = vunpack.c.l.b16 %v2858
        %v2994 = vunpack.c.l.b16 %v2859
        %v2995 = vunpack.c.l.b16 %v2860
        %v2996 = vunpack.c.l.b16 %v2861
        %v2997 = vpack.c.b16 %v2934, %v2933
        %v2998 = vpack.c.b16 %v2936, %v2935
        %v2999 = vpack.c.b16 %v2938, %v2937
        %v3000 = vpack.c.b16 %v2940, %v2939
        %v3001 = vpack.c.b16 %v2942, %v2941
        %v3002 = vpack.c.b16 %v2944, %v2943
        %v3003 = vpack.c.b16 %v2946, %v2945
        %v3004 = vpack.c.b16 %v2948, %v2947
        %v3005 = vpack.c.b16 %v2950, %v2949
        %v3006 = vpack.c.b16 %v2952, %v2951
        %v3007 = vpack.c.b16 %v2954, %v2953
        %v3008 = vpack.c.b16 %v2956, %v2955
        %v3009 = vpack.c.b16 %v2958, %v2957
        %v3010 = vpack.c.b16 %v2960, %v2959
        %v3011 = vpack.c.b16 %v2962, %v2961
        %v3012 = vpack.c.b16 %v2964, %v2963
        %v3013 = vpack.c.b16 %v2966, %v2965
        %v3014 = vpack.c.b16 %v2968, %v2967
        %v3015 = vpack.c.b16 %v2970, %v2969
        %v3016 = vpack.c.b16 %v2972, %v2971
        %v3017 = vpack.c.b16 %v2974, %v2973
        %v3018 = vpack.c.b16 %v2976, %v2975
        %v3019 = vpack.c.b16 %v2978, %v2977
        %v3020 = vpack.c.b16 %v2980, %v2979
        %v3021 = vpack.c.b16 %v2982, %v2981
        %v3022 = vpack.c.b16 %v2984, %v2983
        %v3023 = vpack.c.b16 %v2986, %v2985
        %v3024 = vpack.c.b16 %v2988, %v2987
        %v3025 = vpack.c.b16 %v2990, %v2989
        %v3026 = vpack.c.b16 %v2992, %v2991
        %v3027 = vpack.c.b16 %v2994, %v2993
        %v3028 = vpack.c.b16 %v2996, %v2995
        %3061 = vmatprep.subr.bf16.mxu0 0
        %3062 = vmatpush1.bf16.msra.mxu0 %v3004
        %3063 = vmatprep.subr.bf16.mxu0 0
        %3064 = vmatpush1.bf16.msra.mxu0 %v3003
        %3065 = vmatprep.subr.bf16.mxu0 0
        %3066 = vmatpush1.bf16.msra.mxu0 %v3002
        %3067 = vmatprep.subr.bf16.mxu0 0
        %3068 = vmatpush1.bf16.msra.mxu0 %v3001
        %3069 = vmatprep.subr.bf16.mxu0 0
        %3070 = vmatpush1.bf16.msra.mxu0 %v3000
        %3071 = vmatprep.subr.bf16.mxu0 0
        %3072 = vmatpush1.bf16.msra.mxu0 %v2999
        %3073 = vmatprep.subr.bf16.mxu0 0
        %3074 = vmatpush1.bf16.msra.mxu0 %v2998
        %3075 = vmatprep.subr.bf16.mxu0 0
        %3076 = vmatpush1.bf16.msra.mxu0 %v2997
        %3077 = vmatprep.subr.bf16.mxu0 0
        %3078 = vmatpush2.bf16.msra.mxu0 %v3012
        %3079 = vmatprep.subr.bf16.mxu0 0
        %3080 = vmatpush2.bf16.msra.mxu0 %v3011
        %3081 = vmatprep.subr.bf16.mxu0 0
        %3082 = vmatpush2.bf16.msra.mxu0 %v3010
        %3083 = vmatprep.subr.bf16.mxu0 0
        %3084 = vmatpush2.bf16.msra.mxu0 %v3009
        %3085 = vmatprep.subr.bf16.mxu0 0
        %3086 = vmatpush2.bf16.msra.mxu0 %v3008
        %3087 = vmatprep.subr.bf16.mxu0 0
        %3088 = vmatpush2.bf16.msra.mxu0 %v3007
        %3089 = vmatprep.subr.bf16.mxu0 0
        %3090 = vmatpush2.bf16.msra.mxu0 %v3006
        %3091 = vmatprep.subr.bf16.mxu0 0
        %3092 = vmatpush2.bf16.msra.mxu0 %v3005
        %3093 = vmatprep.mubr.bf16.mxu0 %v2791
        %3094 = vmatmul.mubr.bf16.gmra.mxu0 %v2790
        %v3095 = vpop.f32.mrf.mxu0
        %v3096 = vadd.f32 %v2867, %v3095
        %v3097 = vpop.f32.mrf.mxu0
        %v3098 = vpop.f32.mrf.mxu0
        %v3099 = vadd.f32 %v2867, %v3098
        %v3100 = vpop.f32.mrf.mxu0
        %3101 = vmatprep.mubr.bf16.mxu0 %v2795
        %3102 = vmatmul.mubr.bf16.gmra.mxu0 %v2794
        %v3103 = vpop.f32.mrf.mxu0
        %v3104 = vadd.f32 %v2867, %v3103
        %v3105 = vpop.f32.mrf.mxu0
        %v3106 = vpop.f32.mrf.mxu0
        %v3107 = vadd.f32 %v2867, %v3106
        %v3108 = vpop.f32.mrf.mxu0
        %3109 = vdwg.mxu0
        %3110 = vmatprep.subr.bf16.mxu0 0
        %3111 = vmatpush1.bf16.msra.mxu0 %v3020
        %3112 = vmatprep.subr.bf16.mxu0 0
        %3113 = vmatpush1.bf16.msra.mxu0 %v3019
        %3114 = vmatprep.subr.bf16.mxu0 0
        %3115 = vmatpush1.bf16.msra.mxu0 %v3018
        %3116 = vmatprep.subr.bf16.mxu0 0
        %3117 = vmatpush1.bf16.msra.mxu0 %v3017
        %3118 = vmatprep.subr.bf16.mxu0 0
        %3119 = vmatpush1.bf16.msra.mxu0 %v3016
        %3120 = vmatprep.subr.bf16.mxu0 0
        %3121 = vmatpush1.bf16.msra.mxu0 %v3015
        %3122 = vmatprep.subr.bf16.mxu0 0
        %3123 = vmatpush1.bf16.msra.mxu0 %v3014
        %3124 = vmatprep.subr.bf16.mxu0 0
        %3125 = vmatpush1.bf16.msra.mxu0 %v3013
        %3126 = vmatprep.subr.bf16.mxu0 0
        %3127 = vmatpush2.bf16.msra.mxu0 %v3028
        %3128 = vmatprep.subr.bf16.mxu0 0
        %3129 = vmatpush2.bf16.msra.mxu0 %v3027
        %3130 = vmatprep.subr.bf16.mxu0 0
        %3131 = vmatpush2.bf16.msra.mxu0 %v3026
        %3132 = vmatprep.subr.bf16.mxu0 0
        %3133 = vmatpush2.bf16.msra.mxu0 %v3025
        %3134 = vmatprep.subr.bf16.mxu0 0
        %3135 = vmatpush2.bf16.msra.mxu0 %v3024
        %3136 = vmatprep.subr.bf16.mxu0 0
        %3137 = vmatpush2.bf16.msra.mxu0 %v3023
        %3138 = vmatprep.subr.bf16.mxu0 0
        %3139 = vmatpush2.bf16.msra.mxu0 %v3022
        %3140 = vmatprep.subr.bf16.mxu0 0
        %3141 = vmatpush2.bf16.msra.mxu0 %v3021
        %3142 = vmatprep.mubr.bf16.mxu0 %v2793
        %3143 = vmatmul.mubr.bf16.gmra.mxu0 %v2792
        %v3144 = vpop.f32.mrf.mxu0
        %v3145 = vadd.f32 %v3096, %v3144
        %v3146 = vpop.f32.mrf.mxu0
        %v3147 = vpop.f32.mrf.mxu0
        %v3148 = vadd.f32 %v3099, %v3147
        %v3149 = vpop.f32.mrf.mxu0
        %3150 = vmatprep.mubr.bf16.mxu0 %v2797
        %3151 = vmatmul.mubr.bf16.gmra.mxu0 %v2796
        %v3152 = vpop.f32.mrf.mxu0
        %v3153 = vadd.f32 %v3104, %v3152
        %v3154 = vpop.f32.mrf.mxu0
        %v3155 = vpop.f32.mrf.mxu0
        %v3156 = vadd.f32 %v3107, %v3155
        %v3157 = vpop.f32.mrf.mxu0
        %3158 = vdwg.mxu0
        %v3159 = vadd.f32 %v2392, %v3145
        %v3160 = vadd.f32 %v2393, %v3148
        %v3161 = vadd.f32 %v2394, %v3153
        %v3162 = vadd.f32 %v2395, %v3156
        %v3163 = vld [vmem:[%s738] sm:$0x1]
        %v3164 = vld [vmem:[%s741] sm:$0x1]
        %3165 = vadd.xlane.f32.xlu0 %v3159
        %v3166 = vpop.xlane.xlu0 %3165
        %3167 = vadd.xlane.f32.xlu0 %v3160
        %v3168 = vpop.xlane.xlu0 %3167
        %3169 = vadd.xlane.f32.xlu0 %v3161
        %v3170 = vpop.xlane.xlu0 %3169
        %3171 = vadd.xlane.f32.xlu0 %v3162
        %v3172 = vpop.xlane.xlu0 %3171
        %v3173 = vmul.f32 %v3166, %v2311
        %v3174 = vmul.f32 %v3168, %v2311
        %v3175 = vmul.f32 %v3170, %v2311
        %v3176 = vmul.f32 %v3172, %v2311
        %v3177 = vsub.f32 %v3159, %v3173
        %v3178 = vsub.f32 %v3160, %v3174
        %v3179 = vsub.f32 %v3161, %v3175
        %v3180 = vsub.f32 %v3162, %v3176
        %v3181 = vmul.f32 %v3177, %v3177
        %v3182 = vmul.f32 %v3178, %v3178
        %v3183 = vmul.f32 %v3179, %v3179
        %v3184 = vmul.f32 %v3180, %v3180
        %3185 = vadd.xlane.f32.xlu0 %v3181
        %v3186 = vpop.xlane.xlu0 %3185
        %3187 = vadd.xlane.f32.xlu0 %v3182
        %v3188 = vpop.xlane.xlu0 %3187
        %3189 = vadd.xlane.f32.xlu0 %v3183
        %v3190 = vpop.xlane.xlu0 %3189
        %3191 = vadd.xlane.f32.xlu0 %v3184
        %v3192 = vpop.xlane.xlu0 %3191
        %v3193 = vmul.f32 %v3186, %v2311
        %v3194 = vmul.f32 %v3188, %v2311
        %v3195 = vmul.f32 %v3190, %v2311
        %v3196 = vmul.f32 %v3192, %v2311
        %v3197 = vadd.f32 %v3193, 1e-05
        %v3198 = vadd.f32 %v3194, 1e-05
        %v3199 = vadd.f32 %v3195, 1e-05
        %v3200 = vadd.f32 %v3196, 1e-05
        %v3201 = vrsqrt.pop %v3197
        %v3202 = vmul.f32 %v3197, %v3201
        %vm3203 = vcmp.eq.f32.partialorder %v3197, inf
        %v3204 = vsel %vm3203, %v3197, %v3202
        %vm3205 = vcmp.eq.f32.partialorder %v3197, 0.0
        %v3206 = vand.u32 %v3197, 2147483648
        %v3207 = vsel %vm3205, %v3206, %v3204
        %v3208 = vrsqrt.pop %v3198
        %v3209 = vmul.f32 %v3198, %v3208
        %vm3210 = vcmp.eq.f32.partialorder %v3198, inf
        %v3211 = vsel %vm3210, %v3198, %v3209
        %vm3212 = vcmp.eq.f32.partialorder %v3198, 0.0
        %v3213 = vand.u32 %v3198, 2147483648
        %v3214 = vsel %vm3212, %v3213, %v3211
        %v3215 = vrsqrt.pop %v3199
        %v3216 = vmul.f32 %v3199, %v3215
        %vm3217 = vcmp.eq.f32.partialorder %v3199, inf
        %v3218 = vsel %vm3217, %v3199, %v3216
        %vm3219 = vcmp.eq.f32.partialorder %v3199, 0.0
        %v3220 = vand.u32 %v3199, 2147483648
        %v3221 = vsel %vm3219, %v3220, %v3218
        %v3222 = vrsqrt.pop %v3200
        %v3223 = vmul.f32 %v3200, %v3222
        %vm3224 = vcmp.eq.f32.partialorder %v3200, inf
        %v3225 = vsel %vm3224, %v3200, %v3223
        %vm3226 = vcmp.eq.f32.partialorder %v3200, 0.0
        %v3227 = vand.u32 %v3200, 2147483648
        %v3228 = vsel %vm3226, %v3227, %v3225
        %v3229 = vrcp.pop %v3207
        %v3230 = vmul.f32 %v3177, %v3229
        %v3231 = vrcp.pop %v3214
        %v3232 = vmul.f32 %v3178, %v3231
        %v3233 = vrcp.pop %v3221
        %v3234 = vmul.f32 %v3179, %v3233
        %v3235 = vrcp.pop %v3228
        %v3236 = vmul.f32 %v3180, %v3235
        %v3238 = vlaneseq
        %v3239 = vshrl.u32 %v3238, 7
        %v3240 = vsub.s32 0, %v3239
        %v3241 = vrot.slane %v3163, %v3240
        %v3243 = vmul.f32 %v3241, %v3230
        %v3244 = vmul.f32 %v3241, %v3232
        %v3245 = vmul.f32 %v3241, %v3234
        %v3246 = vmul.f32 %v3241, %v3236
        %v3248 = vlaneseq
        %v3249 = vshrl.u32 %v3248, 7
        %v3250 = vsub.s32 0, %v3249
        %v3251 = vrot.slane %v3164, %v3250
        %v3253 = vadd.f32 %v3243, %v3251
        %v3254 = vadd.f32 %v3244, %v3251
        %v3255 = vadd.f32 %v3245, %v3251
        %v3256 = vadd.f32 %v3246, %v3251
        %3257 = vst [vmem:[#allocation14] sm:$0xff] %v3253
        %3258 = vst [vmem:[#allocation14 + $0x8] sm:$0xff] %v3254
        %3259 = vst [vmem:[#allocation14 + $0x10] sm:$0xff] %v3255
        %3260 = vst [vmem:[#allocation14 + $0x18] sm:$0xff] %v3256
        // Predicated region
        $region101: #{tpu_custom_call.1} parent=71 // pred_check
          %p3261 = pneg %p403
        $region102: #{tpu_custom_call.1} parent=71 // pred_check_branch
          %3263 = sbr.rel (%p3261) target = $region104
        $region103: #{tpu_custom_call.1} parent=71 // pred_region
          %s3264 = smul.u32 2, %s39
          %s3266 = ssub.s32 512, 512
          %3267 = vsyncadd [#allocation5], %s3266
          %s3268 = smul.addr %s3264, 2
          %s3269 = smul.addr %s3268, 128
          %s3270 = scalar_lea.hbm %s13, %s3269
          %s3271 = sshll.u32 [#allocation14], 4
          %s3272 = int_to_ptr.vmem [resolvable:$true] %s3271
          %3277 = dma.vmem_to_hbm [thread:$0]  %s3272, 512, %s3270, [#allocation5], 128, 128, 8
        $region104: #{tpu_custom_call.1} parent=71 // pred_fallthru
          _
        // Predicated region
        $region105: #{tpu_custom_call.1} parent=71 // pred_check
          %p3278 = pneg %p403
        $region106: #{tpu_custom_call.1} parent=71 // pred_check_branch
          %3280 = sbr.rel (%p3278) target = $region108
        $region107: #{tpu_custom_call.1} parent=71 // pred_region
          %3281 = dma.done [#allocation5], 512
        $region108: #{tpu_custom_call.1} parent=71 // pred_fallthru
          _
      $region72: #{tpu_custom_call.1} parent=5 // pred_fallthru
        _
      %p3282 = scmp.le.s32.totalorder 2, %s30
      // Predicated region
      $region109: #{tpu_custom_call.1} parent=5 // pred_check
        %p3283 = pneg %p3282
      $region110: #{tpu_custom_call.1} parent=5 // pred_check_branch
        %3285 = sbr.rel (%p3283) target = $region112
      $region111: #{tpu_custom_call.1} parent=5 // pred_region
        %s3286 = ssub.s32 %s30, 2
      $region112: #{tpu_custom_call.1} parent=5 // pred_fallthru
        _
    $region6: #{tpu_custom_call.1} parent=1 // loop_footer
      %s34 = sadd.s32 1, %s30
    $region7: #{tpu_custom_call.1} parent=1 // loop_footer_branch
      %29 = sbr.rel target = $region3
    $region8: #{tpu_custom_call.1} parent=1 // loop_exit
      _
    %3287 = vsyncpa [#allocation4], 1
    %s3288 = scalar_lea.sflag [#allocation4], 1
    %3289 = vsyncpa %s3288, 1
    %3290 = vsyncpa [#allocation7], 1
    %s3291 = scalar_lea.sflag [#allocation7], 1
    %3292 = vsyncpa %s3291, 1
    %3293 = vsyncpa [#allocation10], 1
    %s3294 = scalar_lea.sflag [#allocation10], 1
    %3295 = vsyncpa %s3294, 1
    %3296 = vsyncpa [#allocation13], 1
    %s3297 = scalar_lea.sflag [#allocation13], 1
    %3298 = vsyncpa %s3297, 1
    %3299 = vsyncpa [#allocation5], 1
    %s3300 = scalar_lea.sflag [#allocation5], 1
    %3301 = vsyncpa %s3300, 1

</llo_original>
